<compile_context>
chip_gen: v7x
topology: tpu7x:2x2x1
jax: 0.10.0
libtpu: 0.0.40
codegen_flags: <defaults>
</compile_context>

<pallas_src>
import jax
import jax.numpy as jnp
from jax.experimental import pallas as pl
from jax.experimental.pallas import tpu as pltpu

_EPS = 1e-5


# ----------------------------- Pallas kernel -------------------------------

def _make_basicblock_kernel(tH, H, W, Cin, Cmid, Cout):
    """Fused BasicBlock kernel for one (batch, H-tile) grid point.

    Refs:
      x_ref  : (1, H+4, W+4, Cin)   bf16, full padded image (same block for all h)
      res_ref: (1, tH*W, Cout)      f32, residual tile (flattened rows)
      w1_ref : (9*Cin, Cmid)        bf16, conv1 weights with BN1 scale folded in
      b1_ref : (1, Cmid)            f32,  BN1 bias
      w2_ref : (9*Cmid, Cout)       bf16, conv2 weights with BN2 scale folded in
      b2_ref : (1, Cout)            f32,  BN2 bias
      o_ref  : (1, tH*W, Cout)      f32 output tile
    """
    Hh = tH + 2          # conv1 output rows per tile (incl. 1-row halo each side)
    Wh = W + 2           # conv1 output cols (incl. 1-col halo each side)

    def kernel(x_ref, res_ref, w1_ref, b1_ref, w2_ref, b2_ref, o_ref):
        h = pl.program_id(1)
        row0 = pl.multiple_of(h * tH, tH)

        # Padded-input slab needed by this tile: rows [h*tH, h*tH + tH + 4).
        xs = x_ref[0, pl.ds(row0, tH + 4), :, :]          # (tH+4, W+4, Cin) bf16

        # ---------- conv1 (3x3, pad=1) as ONE K=9*Cin matmul over im2col ----------
        taps = []
        for dy in range(3):
            for dx in range(3):
                taps.append(xs[dy:dy + Hh, dx:dx + Wh, :])
        p1 = jnp.concatenate(taps, axis=-1).reshape(Hh * Wh, 9 * Cin)
        a1 = jnp.dot(p1, w1_ref[...], preferred_element_type=jnp.float32)
        a1 = jnp.maximum(a1 + b1_ref[...], 0.0)           # folded BN1 + ReLU
        a1 = a1.reshape(Hh, Wh, Cmid)

        # Zero the halo ring wherever it falls outside the image: this is exactly the
        # zero padding conv2 would see for the post-ReLU activation.
        gr = h * tH - 1 + jax.lax.broadcasted_iota(jnp.int32, (Hh, Wh, 1), 0)
        gc = -1 + jax.lax.broadcasted_iota(jnp.int32, (Hh, Wh, 1), 1)
        valid = (gr >= 0) & (gr < H) & (gc >= 0) & (gc < W)
        y1 = jnp.where(valid, a1, 0.0).astype(jnp.bfloat16)   # (Hh, Wh, Cmid)

        # ---------- conv2 (3x3, pad=1) as ONE K=9*Cmid matmul ----------
        taps = []
        for dy in range(3):
            for dx in range(3):
                taps.append(y1[dy:dy + tH, dx:dx + W, :])
        p2 = jnp.concatenate(taps, axis=-1).reshape(tH * W, 9 * Cmid)
        a2 = jnp.dot(p2, w2_ref[...], preferred_element_type=jnp.float32)
        a2 = a2 + b2_ref[...]                              # folded BN2

        # ---------- residual add + ReLU ----------
        o_ref[0] = jnp.maximum(a2 + res_ref[0], 0.0).astype(o_ref.dtype)

    return kernel


# ----------------------------- wrapper --------------------------------------

def _pick_block_h(H, W, cin, cmid):
    """Largest power-of-2 H tile (multiple of 8, dividing H) within a VMEM budget."""
    if H % 8 != 0:
        return H
    def tile_bytes(t):
        return (2 * (t + 2) * (W + 4) * 9 * cin      # conv1 im2col (bf16)
                + 2 * t * W * 9 * cmid               # conv2 im2col (bf16)
                + 4 * (t + 2) * (W + 2) * cmid       # conv1 activation (f32)
                + 4 * 2 * t * W * cmid)              # conv2 acc + output tile (f32)
    tH = 8
    while tH * 2 <= H and H % (tH * 2) == 0 and tile_bytes(tH * 2) <= (8 << 20):
        tH *= 2
    return tH


def basic_block_forward(params, x_nchw, residual_nchw=None, *, block_h=None):
    """BasicBlock.forward (stride=1, dilation=1).  NCHW in / NCHW out."""
    N, Cin, H, W = x_nchw.shape
    Cmid = params["b1"].shape[-1]
    Cout = params["b2"].shape[-1]
    if residual_nchw is None:
        residual_nchw = x_nchw
    assert residual_nchw.shape == (N, Cout, H, W), "residual must match output shape"

    # NCHW -> NHWC so channels sit on the 128-lane (contraction) axis.
    x = jnp.transpose(x_nchw, (0, 2, 3, 1))
    res = jnp.transpose(residual_nchw, (0, 2, 3, 1)).reshape(N, H * W, Cout)

    # One cheap bf16 padded copy of x (2-pixel halo) so every H tile can compute the
    # conv1 rows/cols its conv2 window needs.  (Out-of-image ring is masked in-kernel.)
    xp = jnp.pad(x.astype(jnp.bfloat16), ((0, 0), (2, 2), (2, 2), (0, 0)))

    tH = _pick_block_h(H, W, Cin, Cmid) if block_h is None else block_h
    assert H % tH == 0, "block_h must divide H"
    assert (tH * W) % 8 == 0 or tH == H, "tile rows must satisfy TPU (8,128) tiling"
    grid = (N, H // tH)

    # Advisory cost estimate so XLA schedules neighbours sensibly around this call.
    flops = 2 * N * H * W * 9 * (Cin * Cmid + Cmid * Cout)
    bytes_accessed = (xp.size * 2 + res.size * 4 + N * H * W * Cout * 4
                      + 9 * Cin * Cmid * 2 + 9 * Cmid * Cout * 2
                      + (Cmid + Cout) * 4)
    cost = pl.CostEstimate(flops=flops, transcendentals=0,
                           bytes_accessed=bytes_accessed)

    kernel = _make_basicblock_kernel(tH, H, W, Cin, Cmid, Cout)
    out = pl.pallas_call(
        kernel,
        out_shape=jax.ShapeDtypeStruct((N, H * W, Cout), jnp.float32),
        grid=grid,
        in_specs=[
            # full padded image per batch element (block index constant across h,
            # so it is DMA'd once per batch element and reused for every H tile)
            pl.BlockSpec((1, H + 4, W + 4, Cin), lambda n, h: (n, 0, 0, 0)),
            pl.BlockSpec((1, tH * W, Cout),      lambda n, h: (n, h, 0)),
            pl.BlockSpec((9 * Cin, Cmid),        lambda n, h: (0, 0)),
            pl.BlockSpec((1, Cmid),              lambda n, h: (0, 0)),
            pl.BlockSpec((9 * Cmid, Cout),       lambda n, h: (0, 0)),
            pl.BlockSpec((1, Cout),              lambda n, h: (0, 0)),
        ],
        out_specs=pl.BlockSpec((1, tH * W, Cout), lambda n, h: (n, h, 0)),
        compiler_params=pltpu.CompilerParams(
            # both grid axes are fully independent -> let megacore split either
            dimension_semantics=("parallel", "parallel"),
            vmem_limit_bytes=48 * 1024 * 1024,
        ),
        cost_estimate=cost,
    )(xp, res, params["w1"], params["b1"], params["w2"], params["b2"])

    out = out.reshape(N, H, W, Cout)
    return jnp.transpose(out, (0, 3, 1, 2))                # back to NCHW


# ----------------------------- parameters -----------------------------------

def make_basicblock_params(inplanes, planes, key):
    """Random BasicBlock params; returns (folded kernel params, raw reference params)."""
    k1, k2, kb1, kb2 = jax.random.split(key, 4)

    def bn(k, c):
        kg, kb, km, kv = jax.random.split(k, 4)
        gamma = jax.random.uniform(kg, (c,), jnp.float32, 0.5, 1.5)
        beta = jax.random.normal(kb, (c,), jnp.float32) * 0.1
        mean = jax.random.normal(km, (c,), jnp.float32) * 0.1
        var = jax.random.uniform(kv, (c,), jnp.float32, 0.5, 1.5)
        return gamma, beta, mean, var

    w1 = jax.random.normal(k1, (3, 3, inplanes, planes), jnp.float32) * 0.1   # HWIO
    w2 = jax.random.normal(k2, (3, 3, planes, planes), jnp.float32) * 0.1
    bn1 = bn(kb1, planes)
    bn2 = bn(kb2, planes)
    raw = {"w1": w1, "w2": w2, "bn1": bn1, "bn2": bn2}

    # Fold eval-mode BN into the conv weights: y = conv(x, w*scale) + bias.
    s1 = bn1[0] / jnp.sqrt(bn1[3] + _EPS)
    o1 = bn1[1] - bn1[2] * s1
    s2 = bn2[0] / jnp.sqrt(bn2[3] + _EPS)
    o2 = bn2[1] - bn2[2] * s2
    folded = {
        "w1": (w1 * s1).reshape(9 * inplanes, planes).astype(jnp.bfloat16),
        "b1": o1.reshape(1, planes).astype(jnp.float32),
        "w2": (w2 * s2).reshape(9 * planes, planes).astype(jnp.bfloat16),
        "b2": o2.reshape(1, planes).astype(jnp.float32),
    }
    return folded, raw


# ----------------------------- pure-JAX reference ----------------------------

def basic_block_reference(raw, x_nchw, residual_nchw=None):
    if residual_nchw is None:
        residual_nchw = x_nchw
    x = jnp.transpose(x_nchw, (0, 2, 3, 1))
    res = jnp.transpose(residual_nchw, (0, 2, 3, 1))

    def conv3(v, w):
        return jax.lax.conv_general_dilated(
            v, w, window_strides=(1, 1), padding=((1, 1), (1, 1)),
            dimension_numbers=("NHWC", "HWIO", "NHWC"),
            precision=jax.lax.Precision.HIGHEST)

    def bn(v, p):
        gamma, beta, mean, var = p
        return (v - mean) / jnp.sqrt(var + _EPS) * gamma + beta

    y = jax.nn.relu(bn(conv3(x, raw["w1"]), raw["bn1"]))
    y = bn(conv3(y, raw["w2"]), raw["bn2"])
    y = jax.nn.relu(y + res)
    return jnp.transpose(y, (0, 3, 1, 2))


# ----------------------------- demo ------------------------------------------

if __name__ == "__main__":
    key = jax.random.PRNGKey(0)
    kp, kx = jax.random.split(key)

    N, C, H, W = 2, 8, 16, 16            # inplanes == planes (default residual path)
    params, raw = make_basicblock_params(C, C, kp)
    x = jax.random.normal(kx, (N, C, H, W), jnp.float32)

    # block_h=8 -> grid (N, 2): exercises both the H tiling and the halo masking.
    out = basic_block_forward(params, x, block_h=8)
    jax.block_until_ready(out)
    assert out.shape == (N, C, H, W)

    ref = basic_block_reference(raw, x)
    err = float(jnp.max(jnp.abs(out - ref)))
    assert err < 1e-1, f"max abs err vs reference: {err}"

    print("KERNEL_OK")
</pallas_src>

<mosaic_0001>
module attributes {stable_mosaic.version = 11 : i64} {
  func.func @kernel(%arg0: i32, %arg1: i32, %arg2: memref<1x20x20x8xbf16, #tpu.memory_space<vmem>>, %arg3: memref<1x128x8xf32, #tpu.memory_space<vmem>>, %arg4: memref<72x8xbf16, #tpu.memory_space<vmem>>, %arg5: memref<1x8xf32, #tpu.memory_space<vmem>>, %arg6: memref<72x8xbf16, #tpu.memory_space<vmem>>, %arg7: memref<1x8xf32, #tpu.memory_space<vmem>>, %arg8: memref<1x128x8xf32, #tpu.memory_space<vmem>>) attributes {dimension_semantics = [#tpu.dimension_semantics<parallel>, #tpu.dimension_semantics<parallel>], iteration_bounds = array<i64: 2, 2>, scalar_prefetch = 0 : i64, scratch_operands = 0 : i64, tpu.core_type = #tpu.core_type<tc>, window_params = [{transform_indices = @transform_0, window_bounds = array<i64: 1, 20, 20, 8>}, {transform_indices = @transform_1, window_bounds = array<i64: 1, 128, 8>}, {pipeline_mode = #tpu.pipeline_mode<synchronous>, transform_indices = @transform_2, window_bounds = array<i64: 72, 8>}, {pipeline_mode = #tpu.pipeline_mode<synchronous>, transform_indices = @transform_3, window_bounds = array<i64: 1, 8>}, {pipeline_mode = #tpu.pipeline_mode<synchronous>, transform_indices = @transform_4, window_bounds = array<i64: 72, 8>}, {pipeline_mode = #tpu.pipeline_mode<synchronous>, transform_indices = @transform_5, window_bounds = array<i64: 1, 8>}, {transform_indices = @transform_6, window_bounds = array<i64: 1, 128, 8>}]} {
    %c8_i32 = arith.constant 8 : i32
    %0 = arith.muli %arg1, %c8_i32 : i32
    %1 = tpu.assume_multiple %0, 8 : i32
    %c0 = arith.constant 0 : index
    %2 = arith.index_cast %1 : i32 to index
    %c0_0 = arith.constant 0 : index
    %c0_1 = arith.constant 0 : index
    %3 = vector.load %arg2[%c0, %2, %c0_0, %c0_1] : memref<1x20x20x8xbf16, #tpu.memory_space<vmem>>, vector<1x12x20x8xbf16>
    %4 = vector.shape_cast %3 : vector<1x12x20x8xbf16> to vector<12x20x8xbf16>
    %5 = vector.extract_strided_slice %4 {offsets = [0, 0, 0], sizes = [10, 18, 8], strides = [1, 1, 1]} : vector<12x20x8xbf16> to vector<10x18x8xbf16>
    %6 = vector.extract_strided_slice %4 {offsets = [0, 1, 0], sizes = [10, 18, 8], strides = [1, 1, 1]} : vector<12x20x8xbf16> to vector<10x18x8xbf16>
    %7 = vector.extract_strided_slice %4 {offsets = [0, 2, 0], sizes = [10, 18, 8], strides = [1, 1, 1]} : vector<12x20x8xbf16> to vector<10x18x8xbf16>
    %8 = vector.extract_strided_slice %4 {offsets = [1, 0, 0], sizes = [10, 18, 8], strides = [1, 1, 1]} : vector<12x20x8xbf16> to vector<10x18x8xbf16>
    %9 = vector.extract_strided_slice %4 {offsets = [1, 1, 0], sizes = [10, 18, 8], strides = [1, 1, 1]} : vector<12x20x8xbf16> to vector<10x18x8xbf16>
    %10 = vector.extract_strided_slice %4 {offsets = [1, 2, 0], sizes = [10, 18, 8], strides = [1, 1, 1]} : vector<12x20x8xbf16> to vector<10x18x8xbf16>
    %11 = vector.extract_strided_slice %4 {offsets = [2, 0, 0], sizes = [10, 18, 8], strides = [1, 1, 1]} : vector<12x20x8xbf16> to vector<10x18x8xbf16>
    %12 = vector.extract_strided_slice %4 {offsets = [2, 1, 0], sizes = [10, 18, 8], strides = [1, 1, 1]} : vector<12x20x8xbf16> to vector<10x18x8xbf16>
    %13 = vector.extract_strided_slice %4 {offsets = [2, 2, 0], sizes = [10, 18, 8], strides = [1, 1, 1]} : vector<12x20x8xbf16> to vector<10x18x8xbf16>
    %14 = tpu.concatenate %5, %6, %7, %8, %9, %10, %11, %12, %13 in 2 : vector<10x18x8xbf16>, vector<10x18x8xbf16>, vector<10x18x8xbf16>, vector<10x18x8xbf16>, vector<10x18x8xbf16>, vector<10x18x8xbf16>, vector<10x18x8xbf16>, vector<10x18x8xbf16>, vector<10x18x8xbf16> -> vector<10x18x72xbf16>
    %15 = vector.shape_cast %14 : vector<10x18x72xbf16> to vector<180x72xbf16>
    %c0_2 = arith.constant 0 : index
    %c0_3 = arith.constant 0 : index
    %16 = vector.load %arg4[%c0_2, %c0_3] : memref<72x8xbf16, #tpu.memory_space<vmem>>, vector<72x8xbf16>
    %cst = arith.constant dense<0.000000e+00> : vector<180x8xf32>
    %17 = tpu.matmul %15, %16, %cst {dimension_numbers = #tpu.dot_dimension_numbers<[1], [0], [0], [1], [0, 0, 1, 1], [], []>} : vector<180x72xbf16>, vector<72x8xbf16>, vector<180x8xf32> -> vector<180x8xf32>
    %c0_4 = arith.constant 0 : index
    %c0_5 = arith.constant 0 : index
    %18 = vector.load %arg5[%c0_4, %c0_5] : memref<1x8xf32, #tpu.memory_space<vmem>>, vector<1x8xf32>
    %19 = vector.broadcast %18 : vector<1x8xf32> to vector<180x8xf32>
    %20 = arith.addf %17, %19 : vector<180x8xf32>
    %cst_6 = arith.constant 0.000000e+00 : f32
    %21 = vector.broadcast %cst_6 : f32 to vector<180x8xf32>
    %22 = arith.maximumf %20, %21 : vector<180x8xf32>
    %23 = vector.shape_cast %22 : vector<180x8xf32> to vector<10x18x8xf32>
    %c8_i32_7 = arith.constant 8 : i32
    %24 = arith.muli %arg1, %c8_i32_7 : i32
    %c1_i32 = arith.constant 1 : i32
    %25 = arith.subi %24, %c1_i32 : i32
    %26 = tpu.iota {dimensions = array<i32: 0>} : vector<10x18x1xi32>
    %27 = vector.broadcast %25 : i32 to vector<10x18x1xi32>
    %28 = arith.addi %27, %26 : vector<10x18x1xi32>
    %29 = tpu.iota {dimensions = array<i32: 1>} : vector<10x18x1xi32>
    %c-1_i32 = arith.constant -1 : i32
    %30 = vector.broadcast %c-1_i32 : i32 to vector<10x18x1xi32>
    %31 = arith.addi %30, %29 : vector<10x18x1xi32>
    %c0_i32 = arith.constant 0 : i32
    %32 = vector.broadcast %c0_i32 : i32 to vector<10x18x1xi32>
    %33 = arith.cmpi sge, %28, %32 : vector<10x18x1xi32>
    %c16_i32 = arith.constant 16 : i32
    %34 = vector.broadcast %c16_i32 : i32 to vector<10x18x1xi32>
    %35 = arith.cmpi slt, %28, %34 : vector<10x18x1xi32>
    %36 = arith.andi %33, %35 : vector<10x18x1xi1>
    %c0_i32_8 = arith.constant 0 : i32
    %37 = vector.broadcast %c0_i32_8 : i32 to vector<10x18x1xi32>
    %38 = arith.cmpi sge, %31, %37 : vector<10x18x1xi32>
    %39 = arith.andi %36, %38 : vector<10x18x1xi1>
    %c16_i32_9 = arith.constant 16 : i32
    %40 = vector.broadcast %c16_i32_9 : i32 to vector<10x18x1xi32>
    %41 = arith.cmpi slt, %31, %40 : vector<10x18x1xi32>
    %42 = arith.andi %39, %41 : vector<10x18x1xi1>
    %cst_10 = arith.constant 0.000000e+00 : f32
    %43 = vector.shape_cast %42 : vector<10x18x1xi1> to vector<10x18x1xi1>
    %44 = vector.broadcast %43 : vector<10x18x1xi1> to vector<10x18x8xi1>
    %45 = vector.broadcast %cst_10 : f32 to vector<10x18x8xf32>
    %46 = arith.select %44, %23, %45 : vector<10x18x8xi1>, vector<10x18x8xf32>
    %47 = arith.truncf %46 : vector<10x18x8xf32> to vector<10x18x8xbf16>
    %48 = vector.extract_strided_slice %47 {offsets = [0, 0, 0], sizes = [8, 16, 8], strides = [1, 1, 1]} : vector<10x18x8xbf16> to vector<8x16x8xbf16>
    %49 = vector.extract_strided_slice %47 {offsets = [0, 1, 0], sizes = [8, 16, 8], strides = [1, 1, 1]} : vector<10x18x8xbf16> to vector<8x16x8xbf16>
    %50 = vector.extract_strided_slice %47 {offsets = [0, 2, 0], sizes = [8, 16, 8], strides = [1, 1, 1]} : vector<10x18x8xbf16> to vector<8x16x8xbf16>
    %51 = vector.extract_strided_slice %47 {offsets = [1, 0, 0], sizes = [8, 16, 8], strides = [1, 1, 1]} : vector<10x18x8xbf16> to vector<8x16x8xbf16>
    %52 = vector.extract_strided_slice %47 {offsets = [1, 1, 0], sizes = [8, 16, 8], strides = [1, 1, 1]} : vector<10x18x8xbf16> to vector<8x16x8xbf16>
    %53 = vector.extract_strided_slice %47 {offsets = [1, 2, 0], sizes = [8, 16, 8], strides = [1, 1, 1]} : vector<10x18x8xbf16> to vector<8x16x8xbf16>
    %54 = vector.extract_strided_slice %47 {offsets = [2, 0, 0], sizes = [8, 16, 8], strides = [1, 1, 1]} : vector<10x18x8xbf16> to vector<8x16x8xbf16>
    %55 = vector.extract_strided_slice %47 {offsets = [2, 1, 0], sizes = [8, 16, 8], strides = [1, 1, 1]} : vector<10x18x8xbf16> to vector<8x16x8xbf16>
    %56 = vector.extract_strided_slice %47 {offsets = [2, 2, 0], sizes = [8, 16, 8], strides = [1, 1, 1]} : vector<10x18x8xbf16> to vector<8x16x8xbf16>
    %57 = tpu.concatenate %48, %49, %50, %51, %52, %53, %54, %55, %56 in 2 : vector<8x16x8xbf16>, vector<8x16x8xbf16>, vector<8x16x8xbf16>, vector<8x16x8xbf16>, vector<8x16x8xbf16>, vector<8x16x8xbf16>, vector<8x16x8xbf16>, vector<8x16x8xbf16>, vector<8x16x8xbf16> -> vector<8x16x72xbf16>
    %58 = vector.shape_cast %57 : vector<8x16x72xbf16> to vector<128x72xbf16>
    %c0_11 = arith.constant 0 : index
    %c0_12 = arith.constant 0 : index
    %59 = vector.load %arg6[%c0_11, %c0_12] : memref<72x8xbf16, #tpu.memory_space<vmem>>, vector<72x8xbf16>
    %cst_13 = arith.constant dense<0.000000e+00> : vector<128x8xf32>
    %60 = tpu.matmul %58, %59, %cst_13 {dimension_numbers = #tpu.dot_dimension_numbers<[1], [0], [0], [1], [0, 0, 1, 1], [], []>} : vector<128x72xbf16>, vector<72x8xbf16>, vector<128x8xf32> -> vector<128x8xf32>
    %c0_14 = arith.constant 0 : index
    %c0_15 = arith.constant 0 : index
    %61 = vector.load %arg7[%c0_14, %c0_15] : memref<1x8xf32, #tpu.memory_space<vmem>>, vector<1x8xf32>
    %62 = vector.broadcast %61 : vector<1x8xf32> to vector<128x8xf32>
    %63 = arith.addf %60, %62 : vector<128x8xf32>
    %c0_16 = arith.constant 0 : index
    %c0_17 = arith.constant 0 : index
    %c0_18 = arith.constant 0 : index
    %64 = vector.load %arg3[%c0_16, %c0_17, %c0_18] : memref<1x128x8xf32, #tpu.memory_space<vmem>>, vector<1x128x8xf32>
    %65 = vector.shape_cast %64 : vector<1x128x8xf32> to vector<128x8xf32>
    %66 = arith.addf %63, %65 : vector<128x8xf32>
    %cst_19 = arith.constant 0.000000e+00 : f32
    %67 = vector.broadcast %cst_19 : f32 to vector<128x8xf32>
    %68 = arith.maximumf %66, %67 : vector<128x8xf32>
    %c0_20 = arith.constant 0 : index
    %c0_21 = arith.constant 0 : index
    %c0_22 = arith.constant 0 : index
    %69 = vector.load %arg8[%c0_20, %c0_21, %c0_22] : memref<1x128x8xf32, #tpu.memory_space<vmem>>, vector<1x128x8xf32>
    %70 = vector.shape_cast %69 : vector<1x128x8xf32> to vector<128x8xf32>
    %71 = vector.shape_cast %68 : vector<128x8xf32> to vector<1x128x8xf32>
    tpu.vector_store %arg8[%c0_20, %c0_21, %c0_22], %71 {strides = array<i32>} : memref<1x128x8xf32, #tpu.memory_space<vmem>>, vector<1x128x8xf32>,
    return
  }
  func.func @transform_0(%arg0: i32, %arg1: i32) -> (i32, i32, i32, i32) {
    %c0_i32 = arith.constant 0 : i32
    %c0_i32_0 = arith.constant 0 : i32
    %c0_i32_1 = arith.constant 0 : i32
    %c0_i32_2 = arith.constant 0 : i32
    return %arg0, %c0_i32, %c0_i32_0, %c0_i32_1 : i32, i32, i32, i32
  }
  func.func @transform_1(%arg0: i32, %arg1: i32) -> (i32, i32, i32) {
    %c0_i32 = arith.constant 0 : i32
    %c0_i32_0 = arith.constant 0 : i32
    return %arg0, %arg1, %c0_i32 : i32, i32, i32
  }
  func.func @transform_2(%arg0: i32, %arg1: i32) -> (i32, i32) {
    %c0_i32 = arith.constant 0 : i32
    %c0_i32_0 = arith.constant 0 : i32
    %c0_i32_1 = arith.constant 0 : i32
    return %c0_i32, %c0_i32_0 : i32, i32
  }
  func.func @transform_3(%arg0: i32, %arg1: i32) -> (i32, i32) {
    %c0_i32 = arith.constant 0 : i32
    %c0_i32_0 = arith.constant 0 : i32
    %c0_i32_1 = arith.constant 0 : i32
    return %c0_i32, %c0_i32_0 : i32, i32
  }
  func.func @transform_4(%arg0: i32, %arg1: i32) -> (i32, i32) {
    %c0_i32 = arith.constant 0 : i32
    %c0_i32_0 = arith.constant 0 : i32
    %c0_i32_1 = arith.constant 0 : i32
    return %c0_i32, %c0_i32_0 : i32, i32
  }
  func.func @transform_5(%arg0: i32, %arg1: i32) -> (i32, i32) {
    %c0_i32 = arith.constant 0 : i32
    %c0_i32_0 = arith.constant 0 : i32
    %c0_i32_1 = arith.constant 0 : i32
    return %c0_i32, %c0_i32_0 : i32, i32
  }
  func.func @transform_6(%arg0: i32, %arg1: i32) -> (i32, i32, i32) {
    %c0_i32 = arith.constant 0 : i32
    %c0_i32_0 = arith.constant 0 : i32
    return %arg0, %arg1, %c0_i32 : i32, i32, i32
  }
}

</mosaic_0001>

<llo_original>
// kernel: tpu_custom_call.1
$region0: #{tpu_custom_call.1}
  #allocation0 [shape = 'u32[]', space=smem, size = 0x4, offset = 0x4, fixed_abs, tag = 'smem constant byte address 0x4 - core index']
  #allocation1 [shape = 'u32[144,128]{1,0:T(1,128)}', space=vmem, size = 0x12000, scoped, tag = 'internal scratch']
  %s0 = inlined_call_operand.vmem [shape: bf16[2,20,20,8], index: 0, kind: input, shape index: {}]
  %s1 = inlined_call_operand.vmem [shape: f32[2,256,8], index: 1, kind: input, shape index: {}]
  %s2 = inlined_call_operand.vmem [shape: bf16[72,8], index: 2, kind: input, shape index: {}]
  %s3 = inlined_call_operand.vmem [shape: f32[1,8], index: 3, kind: input, shape index: {}]
  %s4 = inlined_call_operand.vmem [shape: bf16[72,8], index: 4, kind: input, shape index: {}]
  %s5 = inlined_call_operand.vmem [shape: f32[1,8], index: 5, kind: input, shape index: {}]
  %s6 = inlined_call_operand.vmem [shape: f32[2,256,8], index: 6, kind: output, shape index: {}]
  %s7 = sld [smem:[#allocation0]]
  $region57: #{tpu_custom_call.1} parent=0
    _
  %s9 = ssub.s32 1, %s7
  %s10 = scalar_select 0, %s9, %s7
  loop: start=0, step=1, limit=6
  $region2: #{tpu_custom_call.1} parent=0 // loop_pre_header
    _
  $region3: #{tpu_custom_call.1} parent=0 // loop_header
    %s12 = sphi 0, %s16
    %p13 = scmp.ge.s32.totalorder %s12, 6
    %s19 = sphi 0, %s31
    %s20 = sphi 0, %s27
    %s21 = sphi 0, %s19
    %s22 = sphi 0, %s20
    %s23 = sphi 0, %s21
    %s24 = sphi 0, %s22
    %s34 = sphi 0, %s36
    %s37 = sphi 0, %s34
    %s38 = sphi 0, %s37
    %s54 = sphi 0, %s38
    %s62 = sphi 0, %s64
    %s65 = sphi 0, %s62
    %s66 = sphi 0, %s65
    %s82 = sphi 0, %s66
    %s86 = sphi 0, %s86
    %s88 = sphi 0, %s86
    %s89 = sphi 0, %s88
    %s103 = sphi 0, %s89
    %s107 = sphi 0, %s107
    %s109 = sphi 0, %s107
    %s110 = sphi 0, %s109
    %s124 = sphi 0, %s110
    %s128 = sphi 0, %s128
    %s130 = sphi 0, %s128
    %s131 = sphi 0, %s130
    %s145 = sphi 0, %s131
    %s149 = sphi 0, %s149
    %s151 = sphi 0, %s149
    %s152 = sphi 0, %s151
    %s166 = sphi 0, %s152
    %s174 = sphi 0, %s176
    %s177 = sphi 0, %s174
    %s178 = sphi 0, %s177
    %s194 = sphi 0, %s178
  $region4: #{tpu_custom_call.1} parent=0 // loop_header_branch
    %15 = sbr.rel (%p13) target = $region8
  $region5: #{tpu_custom_call.1} parent=0 // loop_body
    %s17 = ssub.s32 %s12, 1
    %s18 = ssub.s32 %s12, 2
    %s25 = sadd.s32 1, %s20
    %p26 = scmp.ge.s32.totalorder %s25, 2
    %s27 = scalar_select %p26, 0, %s25
    %s28 = sadd.s32 1, %s19
    %s29 = scalar_select %p26, %s28, %s19
    %p30 = scmp.ge.s32.totalorder %s29, 2
    %s31 = scalar_select %p30, 0, %s29
    %s32 = ssub.s32 %s19, %s31
    %p33 = scmp.eq.s32.totalorder %s32, 0
    %s35 = sadd.s32 %s34, 1
    %s36 = scalar_select %p33, %s34, %s35
    %p39 = pneg %p33
    %p40 = scmp.eq.s32.totalorder %s12, 3
    %p41 = por %p39, %p40
    %p42 = scmp.ne.s32.totalorder %s34, %s37
    %p43 = scmp.eq.s32.totalorder %s12, 0
    %p44 = por %p42, %p43
    %p45 = scmp.ne.s32.totalorder %s34, %s37
    %p46 = scmp.eq.s32.totalorder %s17, 3
    %p47 = por %p45, %p46
    %p48 = scmp.ne.s32.totalorder %s37, %s38
    %p49 = scmp.eq.s32.totalorder %s17, 0
    %p50 = por %p48, %p49
    %p51 = scmp.ne.s32.totalorder %s37, %s38
    %p52 = scmp.eq.s32.totalorder %s18, 3
    %p53 = por %p51, %p52
    %p55 = scmp.ne.s32.totalorder %s38, %s54
    %p56 = scmp.eq.s32.totalorder %s18, 0
    %p57 = por %p55, %p56
    %s58 = ssub.s32 %s19, %s31
    %s59 = ssub.s32 %s20, %s27
    %s60 = sor.u32 %s58, %s59
    %p61 = scmp.eq.s32.totalorder %s60, 0
    %s63 = sadd.s32 %s62, 1
    %s64 = scalar_select %p61, %s62, %s63
    %p67 = pneg %p61
    %p68 = scmp.eq.s32.totalorder %s12, 3
    %p69 = por %p67, %p68
    %p70 = scmp.ne.s32.totalorder %s62, %s65
    %p71 = scmp.eq.s32.totalorder %s12, 0
    %p72 = por %p70, %p71
    %p73 = scmp.ne.s32.totalorder %s62, %s65
    %p74 = scmp.eq.s32.totalorder %s17, 3
    %p75 = por %p73, %p74
    %p76 = scmp.ne.s32.totalorder %s65, %s66
    %p77 = scmp.eq.s32.totalorder %s17, 0
    %p78 = por %p76, %p77
    %p79 = scmp.ne.s32.totalorder %s65, %s66
    %p80 = scmp.eq.s32.totalorder %s18, 3
    %p81 = por %p79, %p80
    %p83 = scmp.ne.s32.totalorder %s66, %s82
    %p84 = scmp.eq.s32.totalorder %s18, 0
    %p85 = por %p83, %p84
    %s87 = sadd.s32 %s86, 1
    %p90 = scmp.eq.s32.totalorder %s12, 3
    %p91 = scmp.ne.s32.totalorder %s86, %s88
    %p92 = scmp.eq.s32.totalorder %s12, 0
    %p93 = por %p91, %p92
    %p94 = scmp.ne.s32.totalorder %s86, %s88
    %p95 = scmp.eq.s32.totalorder %s17, 3
    %p96 = por %p94, %p95
    %p97 = scmp.ne.s32.totalorder %s88, %s89
    %p98 = scmp.eq.s32.totalorder %s17, 0
    %p99 = por %p97, %p98
    %p100 = scmp.ne.s32.totalorder %s88, %s89
    %p101 = scmp.eq.s32.totalorder %s18, 3
    %p102 = por %p100, %p101
    %p104 = scmp.ne.s32.totalorder %s89, %s103
    %p105 = scmp.eq.s32.totalorder %s18, 0
    %p106 = por %p104, %p105
    %s108 = sadd.s32 %s107, 1
    %p111 = scmp.eq.s32.totalorder %s12, 3
    %p112 = scmp.ne.s32.totalorder %s107, %s109
    %p113 = scmp.eq.s32.totalorder %s12, 0
    %p114 = por %p112, %p113
    %p115 = scmp.ne.s32.totalorder %s107, %s109
    %p116 = scmp.eq.s32.totalorder %s17, 3
    %p117 = por %p115, %p116
    %p118 = scmp.ne.s32.totalorder %s109, %s110
    %p119 = scmp.eq.s32.totalorder %s17, 0
    %p120 = por %p118, %p119
    %p121 = scmp.ne.s32.totalorder %s109, %s110
    %p122 = scmp.eq.s32.totalorder %s18, 3
    %p123 = por %p121, %p122
    %p125 = scmp.ne.s32.totalorder %s110, %s124
    %p126 = scmp.eq.s32.totalorder %s18, 0
    %p127 = por %p125, %p126
    %s129 = sadd.s32 %s128, 1
    %p132 = scmp.eq.s32.totalorder %s12, 3
    %p133 = scmp.ne.s32.totalorder %s128, %s130
    %p134 = scmp.eq.s32.totalorder %s12, 0
    %p135 = por %p133, %p134
    %p136 = scmp.ne.s32.totalorder %s128, %s130
    %p137 = scmp.eq.s32.totalorder %s17, 3
    %p138 = por %p136, %p137
    %p139 = scmp.ne.s32.totalorder %s130, %s131
    %p140 = scmp.eq.s32.totalorder %s17, 0
    %p141 = por %p139, %p140
    %p142 = scmp.ne.s32.totalorder %s130, %s131
    %p143 = scmp.eq.s32.totalorder %s18, 3
    %p144 = por %p142, %p143
    %p146 = scmp.ne.s32.totalorder %s131, %s145
    %p147 = scmp.eq.s32.totalorder %s18, 0
    %p148 = por %p146, %p147
    %s150 = sadd.s32 %s149, 1
    %p153 = scmp.eq.s32.totalorder %s12, 3
    %p154 = scmp.ne.s32.totalorder %s149, %s151
    %p155 = scmp.eq.s32.totalorder %s12, 0
    %p156 = por %p154, %p155
    %p157 = scmp.ne.s32.totalorder %s149, %s151
    %p158 = scmp.eq.s32.totalorder %s17, 3
    %p159 = por %p157, %p158
    %p160 = scmp.ne.s32.totalorder %s151, %s152
    %p161 = scmp.eq.s32.totalorder %s17, 0
    %p162 = por %p160, %p161
    %p163 = scmp.ne.s32.totalorder %s151, %s152
    %p164 = scmp.eq.s32.totalorder %s18, 3
    %p165 = por %p163, %p164
    %p167 = scmp.ne.s32.totalorder %s152, %s166
    %p168 = scmp.eq.s32.totalorder %s18, 0
    %p169 = por %p167, %p168
    %s170 = ssub.s32 %s19, %s31
    %s171 = ssub.s32 %s20, %s27
    %s172 = sor.u32 %s170, %s171
    %p173 = scmp.eq.s32.totalorder %s172, 0
    %s175 = sadd.s32 %s174, 1
    %s176 = scalar_select %p173, %s174, %s175
    %p179 = pneg %p173
    %p180 = scmp.eq.s32.totalorder %s12, 3
    %p181 = por %p179, %p180
    %p182 = scmp.ne.s32.totalorder %s174, %s177
    %p183 = scmp.eq.s32.totalorder %s12, 0
    %p184 = por %p182, %p183
    %p185 = scmp.ne.s32.totalorder %s174, %s177
    %p186 = scmp.eq.s32.totalorder %s17, 3
    %p187 = por %p185, %p186
    %p188 = scmp.ne.s32.totalorder %s177, %s178
    %p189 = scmp.eq.s32.totalorder %s17, 0
    %p190 = por %p188, %p189
    %p191 = scmp.ne.s32.totalorder %s177, %s178
    %p192 = scmp.eq.s32.totalorder %s18, 3
    %p193 = por %p191, %p192
    %p195 = scmp.ne.s32.totalorder %s178, %s194
    %p196 = scmp.eq.s32.totalorder %s18, 0
    %p197 = por %p195, %p196
    %p198 = scmp.le.s32.totalorder 1, %s12
    %p199 = scmp.lt.s32.totalorder %s12, 5
    %p200 = pnand %p198, %p199
    %p201 = pneg %p200
    // Predicated region
    $region9: #{tpu_custom_call.1} parent=5 // pred_check
      _
    $region10: #{tpu_custom_call.1} parent=5 // pred_check_branch
      %203 = sbr.rel (%p200) target = $region12
    $region11: #{tpu_custom_call.1} parent=5 // pred_region
      %s204 = ssub.s32 %s12, 1
      // Predicated region
      $region13: #{tpu_custom_call.1} parent=11 // pred_check
        %p205 = pneg %p99
      $region14: #{tpu_custom_call.1} parent=11 // pred_check_branch
        %207 = sbr.rel (%p205) target = $region16
      $region15: #{tpu_custom_call.1} parent=11 // pred_region
        _
      $region16: #{tpu_custom_call.1} parent=11 // pred_fallthru
        _
      // Predicated region
      $region17: #{tpu_custom_call.1} parent=11 // pred_check
        %p208 = pneg %p120
      $region18: #{tpu_custom_call.1} parent=11 // pred_check_branch
        %210 = sbr.rel (%p208) target = $region20
      $region19: #{tpu_custom_call.1} parent=11 // pred_region
        _
      $region20: #{tpu_custom_call.1} parent=11 // pred_fallthru
        _
      // Predicated region
      $region21: #{tpu_custom_call.1} parent=11 // pred_check
        %p211 = pneg %p141
      $region22: #{tpu_custom_call.1} parent=11 // pred_check_branch
        %213 = sbr.rel (%p211) target = $region24
      $region23: #{tpu_custom_call.1} parent=11 // pred_region
        _
      $region24: #{tpu_custom_call.1} parent=11 // pred_fallthru
        _
      // Predicated region
      $region25: #{tpu_custom_call.1} parent=11 // pred_check
        %p214 = pneg %p162
      $region26: #{tpu_custom_call.1} parent=11 // pred_check_branch
        %216 = sbr.rel (%p214) target = $region28
      $region27: #{tpu_custom_call.1} parent=11 // pred_region
        _
      $region28: #{tpu_custom_call.1} parent=11 // pred_fallthru
        _
    $region12: #{tpu_custom_call.1} parent=5 // pred_fallthru
      _
    %p217 = scmp.lt.s32.totalorder %s12, 4
    // Predicated region
    $region29: #{tpu_custom_call.1} parent=5 // pred_check
      %p218 = pneg %p217
    $region30: #{tpu_custom_call.1} parent=5 // pred_check_branch
      %220 = sbr.rel (%p218) target = $region32
    $region31: #{tpu_custom_call.1} parent=5 // pred_region
      // Predicated region
      $region33: #{tpu_custom_call.1} parent=31 // pred_check
        %p221 = pneg %p44
      $region34: #{tpu_custom_call.1} parent=31 // pred_check_branch
        %223 = sbr.rel (%p221) target = $region36
      $region35: #{tpu_custom_call.1} parent=31 // pred_region
        %p224 = scmp.lt.s32.totalorder %s19, 1
        %s225 = scalar_select %p224, %s19, 1
        %s226 = smul.addr %s225, 60
        %s227 = smul.addr %s226, 4
        %s228 = scalar_lea.vmem %s0, %s227
      $region36: #{tpu_custom_call.1} parent=31 // pred_fallthru
        _
      // Predicated region
      $region37: #{tpu_custom_call.1} parent=31 // pred_check
        %p229 = pneg %p72
      $region38: #{tpu_custom_call.1} parent=31 // pred_check_branch
        %231 = sbr.rel (%p229) target = $region40
      $region39: #{tpu_custom_call.1} parent=31 // pred_region
        %s232 = smul.u32 16, %s20
        %p233 = scmp.lt.s32.totalorder %s19, 1
        %s234 = scalar_select %p233, %s19, 1
        %p235 = scmp.lt.s32.totalorder %s232, 31
        %s236 = scalar_select %p235, %s232, 31
        %s237 = smul.addr %s234, 32
        %s238 = sadd.s32 %s236, %s237
        %s239 = smul.addr %s238, 8
        %s240 = scalar_lea.vmem %s1, %s239
        %s241 = smul.u32 16, %s20
      $region40: #{tpu_custom_call.1} parent=31 // pred_fallthru
        _
    $region32: #{tpu_custom_call.1} parent=5 // pred_fallthru
      _
    %p242 = scmp.le.s32.totalorder 1, %s12
    %p243 = scmp.lt.s32.totalorder %s12, 5
    %p244 = pnand %p242, %p243
    %p245 = pneg %p244
    // Predicated region
    $region41: #{tpu_custom_call.1} parent=5 // pred_check
      _
    $region42: #{tpu_custom_call.1} parent=5 // pred_check_branch
      %247 = sbr.rel (%p244) target = $region44
    $region43: #{tpu_custom_call.1} parent=5 // pred_region
      %s248 = ssub.s32 %s12, 1
      %p249 = scmp.lt.s32.totalorder %s21, 1
      %s250 = scalar_select %p249, %s21, 1
      %s251 = smul.addr %s250, 60
      %s252 = smul.addr %s251, 4
      %s253 = scalar_lea.vmem %s0, %s252
      %p254 = pneg %p50
      %p255 = pneg %p47
      %s256 = smul.u32 16, %s22
      %p257 = scmp.lt.s32.totalorder %s21, 1
      %s258 = scalar_select %p257, %s21, 1
      %p259 = scmp.lt.s32.totalorder %s256, 31
      %s260 = scalar_select %p259, %s256, 31
      %s261 = smul.addr %s258, 32
      %s262 = sadd.s32 %s260, %s261
      %s263 = smul.addr %s262, 8
      %s264 = scalar_lea.vmem %s1, %s263
      %p265 = pneg %p78
      %p266 = pneg %p75
      %p267 = pneg %p99
      %p268 = pneg %p96
      %p269 = pneg %p120
      %p270 = pneg %p117
      %p271 = pneg %p141
      %p272 = pneg %p138
      %p273 = pneg %p162
      %p274 = pneg %p159
      %p275 = pneg %p190
      %p276 = pneg %p187
      %s277 = smul.u32 16, %s22
      %p278 = scmp.lt.s32.totalorder %s21, 1
      %s279 = scalar_select %p278, %s21, 1
      %p280 = scmp.lt.s32.totalorder %s277, 31
      %s281 = scalar_select %p280, %s277, 31
      %s282 = smul.addr %s279, 32
      %s283 = sadd.s32 %s281, %s282
      %s284 = smul.addr %s283, 8
      %s285 = scalar_lea.vmem %s6, %s284
      %p286 = scmp.lt.s32.totalorder %s21, 1
      %s287 = scalar_select %p286, %s21, 1
      %s288 = smul.addr %s287, 60
      %s289 = smul.addr %s288, 4
      %s290 = scalar_lea.vmem %s0, %s289
      %s291 = smul.u32 16, %s22
      %p292 = scmp.lt.s32.totalorder %s21, 1
      %s293 = scalar_select %p292, %s21, 1
      %p294 = scmp.lt.s32.totalorder %s291, 31
      %s295 = scalar_select %p294, %s291, 31
      %s296 = smul.addr %s293, 32
      %s297 = sadd.s32 %s295, %s296
      %s298 = smul.addr %s297, 8
      %s299 = scalar_lea.vmem %s1, %s298
      %s300 = smul.u32 16, %s22
      %s301 = smul.u32 16, %s22
      %p302 = scmp.lt.s32.totalorder %s21, 1
      %s303 = scalar_select %p302, %s21, 1
      %p304 = scmp.lt.s32.totalorder %s301, 31
      %s305 = scalar_select %p304, %s301, 31
      %s306 = smul.addr %s303, 32
      %s307 = sadd.s32 %s305, %s306
      %s308 = smul.addr %s307, 8
      %s309 = scalar_lea.vmem %s6, %s308
      %s310 = smul.u32 16, %s22
      %s312 = smul.u32 %s22, 8
      %s313 = smul.u32 %s312, 3
      %s314 = smul.addr %s313, 4
      %s315 = scalar_lea.vmem %s290, %s314
      %v316 = vld [vmem:[%s315] sm:$0xf]
      %v317 = vld [vmem:[%s315 + $0x4] sm:$0xf]
      %v318 = vld [vmem:[%s315 + $0x8] sm:$0x3]
      %v319 = vld [vmem:[%s315 + $0xc] sm:$0xf]
      %v320 = vld [vmem:[%s315 + $0x10] sm:$0xf]
      %v321 = vld [vmem:[%s315 + $0x14] sm:$0x3]
      %v322 = vld [vmem:[%s315 + $0x18] sm:$0xf]
      %v323 = vld [vmem:[%s315 + $0x1c] sm:$0xf]
      %v324 = vld [vmem:[%s315 + $0x20] sm:$0x3]
      %v325 = vld [vmem:[%s315 + $0x24] sm:$0xf]
      %v326 = vld [vmem:[%s315 + $0x28] sm:$0xf]
      %v327 = vld [vmem:[%s315 + $0x2c] sm:$0x3]
      %v328 = vld [vmem:[%s315 + $0x30] sm:$0xf]
      %v329 = vld [vmem:[%s315 + $0x34] sm:$0xf]
      %v330 = vld [vmem:[%s315 + $0x38] sm:$0x3]
      %v331 = vld [vmem:[%s315 + $0x3c] sm:$0xf]
      %v332 = vld [vmem:[%s315 + $0x40] sm:$0xf]
      %v333 = vld [vmem:[%s315 + $0x44] sm:$0x3]
      %v334 = vld [vmem:[%s315 + $0x48] sm:$0xf]
      %v335 = vld [vmem:[%s315 + $0x4c] sm:$0xf]
      %v336 = vld [vmem:[%s315 + $0x50] sm:$0x3]
      %v337 = vld [vmem:[%s315 + $0x54] sm:$0xf]
      %v338 = vld [vmem:[%s315 + $0x58] sm:$0xf]
      %v339 = vld [vmem:[%s315 + $0x5c] sm:$0x3]
      %v340 = vld [vmem:[%s315 + $0x60] sm:$0xf]
      %v341 = vld [vmem:[%s315 + $0x64] sm:$0xf]
      %v342 = vld [vmem:[%s315 + $0x68] sm:$0x3]
      %v343 = vld [vmem:[%s315 + $0x6c] sm:$0xf]
      %v344 = vld [vmem:[%s315 + $0x70] sm:$0xf]
      %v345 = vld [vmem:[%s315 + $0x74] sm:$0x3]
      %v346 = vld [vmem:[%s315 + $0x78] sm:$0xf]
      %v347 = vld [vmem:[%s315 + $0x7c] sm:$0xf]
      %v348 = vld [vmem:[%s315 + $0x80] sm:$0x3]
      %v349 = vld [vmem:[%s315 + $0x84] sm:$0xf]
      %v350 = vld [vmem:[%s315 + $0x88] sm:$0xf]
      %v351 = vld [vmem:[%s315 + $0x8c] sm:$0x3]
      %v382 = vunpack.c.l.b16 %v316
      %v383 = vunpack.c.l.b16 %v317
      %v384 = vunpack.c.l.b16 %v318
      %v385 = vunpack.c.l.b16 %v319
      %v386 = vunpack.c.l.b16 %v320
      %v387 = vunpack.c.l.b16 %v321
      %v388 = vunpack.c.l.b16 %v322
      %v389 = vunpack.c.l.b16 %v323
      %v390 = vunpack.c.l.b16 %v324
      %v391 = vunpack.c.l.b16 %v325
      %v392 = vunpack.c.l.b16 %v326
      %v393 = vunpack.c.l.b16 %v327
      %v394 = vunpack.c.l.b16 %v328
      %v395 = vunpack.c.l.b16 %v329
      %v396 = vunpack.c.l.b16 %v330
      %v397 = vunpack.c.l.b16 %v331
      %v398 = vunpack.c.l.b16 %v332
      %v399 = vunpack.c.l.b16 %v333
      %v400 = vunpack.c.l.b16 %v334
      %v401 = vunpack.c.l.b16 %v335
      %v402 = vunpack.c.l.b16 %v336
      %v403 = vunpack.c.l.b16 %v337
      %v404 = vunpack.c.l.b16 %v338
      %v405 = vunpack.c.l.b16 %v339
      %v406 = vunpack.c.l.b16 %v340
      %v407 = vunpack.c.l.b16 %v341
      %v408 = vunpack.c.l.b16 %v342
      %v409 = vunpack.c.l.b16 %v343
      %v410 = vunpack.c.l.b16 %v344
      %v411 = vunpack.c.l.b16 %v345
      %v412 = vpack.c.b16 %v383, %v382
      %v413 = vpack.c.b16 %v384, %v384
      %v414 = vpack.c.b16 %v386, %v385
      %v415 = vpack.c.b16 %v387, %v387
      %v416 = vpack.c.b16 %v389, %v388
      %v417 = vpack.c.b16 %v390, %v390
      %v418 = vpack.c.b16 %v392, %v391
      %v419 = vpack.c.b16 %v393, %v393
      %v420 = vpack.c.b16 %v395, %v394
      %v421 = vpack.c.b16 %v396, %v396
      %v422 = vpack.c.b16 %v398, %v397
      %v423 = vpack.c.b16 %v399, %v399
      %v424 = vpack.c.b16 %v401, %v400
      %v425 = vpack.c.b16 %v402, %v402
      %v426 = vpack.c.b16 %v404, %v403
      %v427 = vpack.c.b16 %v405, %v405
      %v428 = vpack.c.b16 %v407, %v406
      %v429 = vpack.c.b16 %v408, %v408
      %v430 = vpack.c.b16 %v410, %v409
      %v431 = vpack.c.b16 %v411, %v411
      %vm432 = vsmask.f32 7424
      %v434 = vshrl.u32 %v412, 16
      %v436 = vshll.u32 %v412, 16
      %v438 = vrot.slane %v436, 1
      %v439 = vor.u32 %v434, %v438
      %v441 = vshll.u32 %v413, 16
      %v443 = vrot.slane %v441, 1
      %v444 = vsel %vm432, %v439, %v443
      %v445 = vshrl.u32 %v413, 16
      %v447 = vor.u32 %v445, %v443
      %v449 = vshrl.u32 %v414, 16
      %v451 = vshll.u32 %v414, 16
      %v453 = vrot.slane %v451, 1
      %v454 = vor.u32 %v449, %v453
      %v456 = vshll.u32 %v415, 16
      %v458 = vrot.slane %v456, 1
      %v459 = vsel %vm432, %v454, %v458
      %v460 = vshrl.u32 %v415, 16
      %v462 = vor.u32 %v460, %v458
      %v464 = vshrl.u32 %v416, 16
      %v466 = vshll.u32 %v416, 16
      %v468 = vrot.slane %v466, 1
      %v469 = vor.u32 %v464, %v468
      %v471 = vshll.u32 %v417, 16
      %v473 = vrot.slane %v471, 1
      %v474 = vsel %vm432, %v469, %v473
      %v475 = vshrl.u32 %v417, 16
      %v477 = vor.u32 %v475, %v473
      %v479 = vshrl.u32 %v418, 16
      %v481 = vshll.u32 %v418, 16
      %v483 = vrot.slane %v481, 1
      %v484 = vor.u32 %v479, %v483
      %v486 = vshll.u32 %v419, 16
      %v488 = vrot.slane %v486, 1
      %v489 = vsel %vm432, %v484, %v488
      %v490 = vshrl.u32 %v419, 16
      %v492 = vor.u32 %v490, %v488
      %v494 = vshrl.u32 %v420, 16
      %v496 = vshll.u32 %v420, 16
      %v498 = vrot.slane %v496, 1
      %v499 = vor.u32 %v494, %v498
      %v501 = vshll.u32 %v421, 16
      %v503 = vrot.slane %v501, 1
      %v504 = vsel %vm432, %v499, %v503
      %v505 = vshrl.u32 %v421, 16
      %v507 = vor.u32 %v505, %v503
      %v509 = vshrl.u32 %v422, 16
      %v511 = vshll.u32 %v422, 16
      %v513 = vrot.slane %v511, 1
      %v514 = vor.u32 %v509, %v513
      %v516 = vshll.u32 %v423, 16
      %v518 = vrot.slane %v516, 1
      %v519 = vsel %vm432, %v514, %v518
      %v520 = vshrl.u32 %v423, 16
      %v522 = vor.u32 %v520, %v518
      %v524 = vshrl.u32 %v424, 16
      %v526 = vshll.u32 %v424, 16
      %v528 = vrot.slane %v526, 1
      %v529 = vor.u32 %v524, %v528
      %v531 = vshll.u32 %v425, 16
      %v533 = vrot.slane %v531, 1
      %v534 = vsel %vm432, %v529, %v533
      %v535 = vshrl.u32 %v425, 16
      %v537 = vor.u32 %v535, %v533
      %v539 = vshrl.u32 %v426, 16
      %v541 = vshll.u32 %v426, 16
      %v543 = vrot.slane %v541, 1
      %v544 = vor.u32 %v539, %v543
      %v546 = vshll.u32 %v427, 16
      %v548 = vrot.slane %v546, 1
      %v549 = vsel %vm432, %v544, %v548
      %v550 = vshrl.u32 %v427, 16
      %v552 = vor.u32 %v550, %v548
      %v554 = vshrl.u32 %v428, 16
      %v556 = vshll.u32 %v428, 16
      %v558 = vrot.slane %v556, 1
      %v559 = vor.u32 %v554, %v558
      %v561 = vshll.u32 %v429, 16
      %v563 = vrot.slane %v561, 1
      %v564 = vsel %vm432, %v559, %v563
      %v565 = vshrl.u32 %v429, 16
      %v567 = vor.u32 %v565, %v563
      %v569 = vshrl.u32 %v430, 16
      %v571 = vshll.u32 %v430, 16
      %v573 = vrot.slane %v571, 1
      %v574 = vor.u32 %v569, %v573
      %v576 = vshll.u32 %v431, 16
      %v578 = vrot.slane %v576, 1
      %v579 = vsel %vm432, %v574, %v578
      %v580 = vshrl.u32 %v431, 16
      %v582 = vor.u32 %v580, %v578
      %583 = vrot.lane.b32.xlu0 %v444, 8
      %v584 = vpop.permute.xlu0 %583
      %585 = vrot.lane.b32.xlu0 %v447, 8
      %v586 = vpop.permute.xlu0 %585
      %587 = vrot.lane.b32.xlu0 %v459, 8
      %v588 = vpop.permute.xlu0 %587
      %589 = vrot.lane.b32.xlu0 %v462, 8
      %v590 = vpop.permute.xlu0 %589
      %591 = vrot.lane.b32.xlu0 %v474, 8
      %v592 = vpop.permute.xlu0 %591
      %593 = vrot.lane.b32.xlu0 %v477, 8
      %v594 = vpop.permute.xlu0 %593
      %595 = vrot.lane.b32.xlu0 %v489, 8
      %v596 = vpop.permute.xlu0 %595
      %597 = vrot.lane.b32.xlu0 %v492, 8
      %v598 = vpop.permute.xlu0 %597
      %599 = vrot.lane.b32.xlu0 %v504, 8
      %v600 = vpop.permute.xlu0 %599
      %601 = vrot.lane.b32.xlu0 %v507, 8
      %v602 = vpop.permute.xlu0 %601
      %603 = vrot.lane.b32.xlu0 %v519, 8
      %v604 = vpop.permute.xlu0 %603
      %605 = vrot.lane.b32.xlu0 %v522, 8
      %v606 = vpop.permute.xlu0 %605
      %607 = vrot.lane.b32.xlu0 %v534, 8
      %v608 = vpop.permute.xlu0 %607
      %609 = vrot.lane.b32.xlu0 %v537, 8
      %v610 = vpop.permute.xlu0 %609
      %611 = vrot.lane.b32.xlu0 %v549, 8
      %v612 = vpop.permute.xlu0 %611
      %613 = vrot.lane.b32.xlu0 %v552, 8
      %v614 = vpop.permute.xlu0 %613
      %615 = vrot.lane.b32.xlu0 %v564, 8
      %v616 = vpop.permute.xlu0 %615
      %617 = vrot.lane.b32.xlu0 %v567, 8
      %v618 = vpop.permute.xlu0 %617
      %619 = vrot.lane.b32.xlu0 %v579, 8
      %v620 = vpop.permute.xlu0 %619
      %621 = vrot.lane.b32.xlu0 %v582, 8
      %v622 = vpop.permute.xlu0 %621
      %vm623 = vcmask 1046528
      %v624 = vrot.slane %v412, 1
      %v625 = vrot.slane %v413, 1
      %v626 = vsel %vm623, %v624, %v625
      %v627 = vrot.slane %v414, 1
      %v628 = vrot.slane %v415, 1
      %v629 = vsel %vm623, %v627, %v628
      %v630 = vrot.slane %v416, 1
      %v631 = vrot.slane %v417, 1
      %v632 = vsel %vm623, %v630, %v631
      %v633 = vrot.slane %v418, 1
      %v634 = vrot.slane %v419, 1
      %v635 = vsel %vm623, %v633, %v634
      %v636 = vrot.slane %v420, 1
      %v637 = vrot.slane %v421, 1
      %v638 = vsel %vm623, %v636, %v637
      %v639 = vrot.slane %v422, 1
      %v640 = vrot.slane %v423, 1
      %v641 = vsel %vm623, %v639, %v640
      %v642 = vrot.slane %v424, 1
      %v643 = vrot.slane %v425, 1
      %v644 = vsel %vm623, %v642, %v643
      %v645 = vrot.slane %v426, 1
      %v646 = vrot.slane %v427, 1
      %v647 = vsel %vm623, %v645, %v646
      %v648 = vrot.slane %v428, 1
      %v649 = vrot.slane %v429, 1
      %v650 = vsel %vm623, %v648, %v649
      %v651 = vrot.slane %v430, 1
      %v652 = vrot.slane %v431, 1
      %v653 = vsel %vm623, %v651, %v652
      %654 = vrot.lane.b32.xlu0 %v626, 16
      %v655 = vpop.permute.xlu0 %654
      %656 = vrot.lane.b32.xlu0 %v625, 16
      %v657 = vpop.permute.xlu0 %656
      %658 = vrot.lane.b32.xlu0 %v629, 16
      %v659 = vpop.permute.xlu0 %658
      %660 = vrot.lane.b32.xlu0 %v628, 16
      %v661 = vpop.permute.xlu0 %660
      %662 = vrot.lane.b32.xlu0 %v632, 16
      %v663 = vpop.permute.xlu0 %662
      %664 = vrot.lane.b32.xlu0 %v631, 16
      %v665 = vpop.permute.xlu0 %664
      %666 = vrot.lane.b32.xlu0 %v635, 16
      %v667 = vpop.permute.xlu0 %666
      %668 = vrot.lane.b32.xlu0 %v634, 16
      %v669 = vpop.permute.xlu0 %668
      %670 = vrot.lane.b32.xlu0 %v638, 16
      %v671 = vpop.permute.xlu0 %670
      %672 = vrot.lane.b32.xlu0 %v637, 16
      %v673 = vpop.permute.xlu0 %672
      %674 = vrot.lane.b32.xlu0 %v641, 16
      %v675 = vpop.permute.xlu0 %674
      %676 = vrot.lane.b32.xlu0 %v640, 16
      %v677 = vpop.permute.xlu0 %676
      %678 = vrot.lane.b32.xlu0 %v644, 16
      %v679 = vpop.permute.xlu0 %678
      %680 = vrot.lane.b32.xlu0 %v643, 16
      %v681 = vpop.permute.xlu0 %680
      %682 = vrot.lane.b32.xlu0 %v647, 16
      %v683 = vpop.permute.xlu0 %682
      %684 = vrot.lane.b32.xlu0 %v646, 16
      %v685 = vpop.permute.xlu0 %684
      %686 = vrot.lane.b32.xlu0 %v650, 16
      %v687 = vpop.permute.xlu0 %686
      %688 = vrot.lane.b32.xlu0 %v649, 16
      %v689 = vpop.permute.xlu0 %688
      %690 = vrot.lane.b32.xlu0 %v653, 16
      %v691 = vpop.permute.xlu0 %690
      %692 = vrot.lane.b32.xlu0 %v652, 16
      %v693 = vpop.permute.xlu0 %692
      %v697 = vunpack.c.l.b16 %v346
      %v698 = vunpack.c.l.b16 %v347
      %v699 = vunpack.c.l.b16 %v348
      %v700 = vpack.c.b16 %v698, %v697
      %v701 = vpack.c.b16 %v699, %v699
      %702 = vrot.lane.b32.xlu0 %v414, 24
      %v703 = vpop.permute.xlu0 %702
      %704 = vrot.lane.b32.xlu0 %v415, 24
      %v705 = vpop.permute.xlu0 %704
      %706 = vrot.lane.b32.xlu0 %v416, 24
      %v707 = vpop.permute.xlu0 %706
      %708 = vrot.lane.b32.xlu0 %v417, 24
      %v709 = vpop.permute.xlu0 %708
      %710 = vrot.lane.b32.xlu0 %v418, 24
      %v711 = vpop.permute.xlu0 %710
      %712 = vrot.lane.b32.xlu0 %v419, 24
      %v713 = vpop.permute.xlu0 %712
      %714 = vrot.lane.b32.xlu0 %v420, 24
      %v715 = vpop.permute.xlu0 %714
      %716 = vrot.lane.b32.xlu0 %v421, 24
      %v717 = vpop.permute.xlu0 %716
      %718 = vrot.lane.b32.xlu0 %v422, 24
      %v719 = vpop.permute.xlu0 %718
      %720 = vrot.lane.b32.xlu0 %v423, 24
      %v721 = vpop.permute.xlu0 %720
      %722 = vrot.lane.b32.xlu0 %v424, 24
      %v723 = vpop.permute.xlu0 %722
      %724 = vrot.lane.b32.xlu0 %v425, 24
      %v725 = vpop.permute.xlu0 %724
      %726 = vrot.lane.b32.xlu0 %v426, 24
      %v727 = vpop.permute.xlu0 %726
      %728 = vrot.lane.b32.xlu0 %v427, 24
      %v729 = vpop.permute.xlu0 %728
      %730 = vrot.lane.b32.xlu0 %v428, 24
      %v731 = vpop.permute.xlu0 %730
      %732 = vrot.lane.b32.xlu0 %v429, 24
      %v733 = vpop.permute.xlu0 %732
      %734 = vrot.lane.b32.xlu0 %v430, 24
      %v735 = vpop.permute.xlu0 %734
      %736 = vrot.lane.b32.xlu0 %v431, 24
      %v737 = vpop.permute.xlu0 %736
      %738 = vrot.lane.b32.xlu0 %v700, 24
      %v739 = vpop.permute.xlu0 %738
      %740 = vrot.lane.b32.xlu0 %v701, 24
      %v741 = vpop.permute.xlu0 %740
      %v743 = vshrl.u32 %v700, 16
      %v745 = vshll.u32 %v700, 16
      %v747 = vrot.slane %v745, 1
      %v748 = vor.u32 %v743, %v747
      %v750 = vshll.u32 %v701, 16
      %v752 = vrot.slane %v750, 1
      %v753 = vsel %vm432, %v748, %v752
      %v754 = vshrl.u32 %v701, 16
      %v756 = vor.u32 %v754, %v752
      %757 = vrot.lane.b32.xlu0 %v459, 32
      %v758 = vpop.permute.xlu0 %757
      %759 = vrot.lane.b32.xlu0 %v462, 32
      %v760 = vpop.permute.xlu0 %759
      %761 = vrot.lane.b32.xlu0 %v474, 32
      %v762 = vpop.permute.xlu0 %761
      %763 = vrot.lane.b32.xlu0 %v477, 32
      %v764 = vpop.permute.xlu0 %763
      %765 = vrot.lane.b32.xlu0 %v489, 32
      %v766 = vpop.permute.xlu0 %765
      %767 = vrot.lane.b32.xlu0 %v492, 32
      %v768 = vpop.permute.xlu0 %767
      %769 = vrot.lane.b32.xlu0 %v504, 32
      %v770 = vpop.permute.xlu0 %769
      %771 = vrot.lane.b32.xlu0 %v507, 32
      %v772 = vpop.permute.xlu0 %771
      %773 = vrot.lane.b32.xlu0 %v519, 32
      %v774 = vpop.permute.xlu0 %773
      %775 = vrot.lane.b32.xlu0 %v522, 32
      %v776 = vpop.permute.xlu0 %775
      %777 = vrot.lane.b32.xlu0 %v534, 32
      %v778 = vpop.permute.xlu0 %777
      %779 = vrot.lane.b32.xlu0 %v537, 32
      %v780 = vpop.permute.xlu0 %779
      %781 = vrot.lane.b32.xlu0 %v549, 32
      %v782 = vpop.permute.xlu0 %781
      %783 = vrot.lane.b32.xlu0 %v552, 32
      %v784 = vpop.permute.xlu0 %783
      %785 = vrot.lane.b32.xlu0 %v564, 32
      %v786 = vpop.permute.xlu0 %785
      %787 = vrot.lane.b32.xlu0 %v567, 32
      %v788 = vpop.permute.xlu0 %787
      %789 = vrot.lane.b32.xlu0 %v579, 32
      %v790 = vpop.permute.xlu0 %789
      %791 = vrot.lane.b32.xlu0 %v582, 32
      %v792 = vpop.permute.xlu0 %791
      %793 = vrot.lane.b32.xlu0 %v753, 32
      %v794 = vpop.permute.xlu0 %793
      %795 = vrot.lane.b32.xlu0 %v756, 32
      %v796 = vpop.permute.xlu0 %795
      %v797 = vrot.slane %v700, 1
      %v798 = vrot.slane %v701, 1
      %v799 = vsel %vm623, %v797, %v798
      %800 = vrot.lane.b32.xlu0 %v629, 40
      %v801 = vpop.permute.xlu0 %800
      %802 = vrot.lane.b32.xlu0 %v628, 40
      %v803 = vpop.permute.xlu0 %802
      %804 = vrot.lane.b32.xlu0 %v632, 40
      %v805 = vpop.permute.xlu0 %804
      %806 = vrot.lane.b32.xlu0 %v631, 40
      %v807 = vpop.permute.xlu0 %806
      %808 = vrot.lane.b32.xlu0 %v635, 40
      %v809 = vpop.permute.xlu0 %808
      %810 = vrot.lane.b32.xlu0 %v634, 40
      %v811 = vpop.permute.xlu0 %810
      %812 = vrot.lane.b32.xlu0 %v638, 40
      %v813 = vpop.permute.xlu0 %812
      %814 = vrot.lane.b32.xlu0 %v637, 40
      %v815 = vpop.permute.xlu0 %814
      %816 = vrot.lane.b32.xlu0 %v641, 40
      %v817 = vpop.permute.xlu0 %816
      %818 = vrot.lane.b32.xlu0 %v640, 40
      %v819 = vpop.permute.xlu0 %818
      %820 = vrot.lane.b32.xlu0 %v644, 40
      %v821 = vpop.permute.xlu0 %820
      %822 = vrot.lane.b32.xlu0 %v643, 40
      %v823 = vpop.permute.xlu0 %822
      %824 = vrot.lane.b32.xlu0 %v647, 40
      %v825 = vpop.permute.xlu0 %824
      %826 = vrot.lane.b32.xlu0 %v646, 40
      %v827 = vpop.permute.xlu0 %826
      %828 = vrot.lane.b32.xlu0 %v650, 40
      %v829 = vpop.permute.xlu0 %828
      %830 = vrot.lane.b32.xlu0 %v649, 40
      %v831 = vpop.permute.xlu0 %830
      %832 = vrot.lane.b32.xlu0 %v653, 40
      %v833 = vpop.permute.xlu0 %832
      %834 = vrot.lane.b32.xlu0 %v652, 40
      %v835 = vpop.permute.xlu0 %834
      %836 = vrot.lane.b32.xlu0 %v799, 40
      %v837 = vpop.permute.xlu0 %836
      %838 = vrot.lane.b32.xlu0 %v798, 40
      %v839 = vpop.permute.xlu0 %838
      %v843 = vunpack.c.l.b16 %v349
      %v844 = vunpack.c.l.b16 %v350
      %v845 = vunpack.c.l.b16 %v351
      %v846 = vpack.c.b16 %v844, %v843
      %v847 = vpack.c.b16 %v845, %v845
      %848 = vrot.lane.b32.xlu0 %v416, 48
      %v849 = vpop.permute.xlu0 %848
      %850 = vrot.lane.b32.xlu0 %v417, 48
      %v851 = vpop.permute.xlu0 %850
      %852 = vrot.lane.b32.xlu0 %v418, 48
      %v853 = vpop.permute.xlu0 %852
      %854 = vrot.lane.b32.xlu0 %v419, 48
      %v855 = vpop.permute.xlu0 %854
      %856 = vrot.lane.b32.xlu0 %v420, 48
      %v857 = vpop.permute.xlu0 %856
      %858 = vrot.lane.b32.xlu0 %v421, 48
      %v859 = vpop.permute.xlu0 %858
      %860 = vrot.lane.b32.xlu0 %v422, 48
      %v861 = vpop.permute.xlu0 %860
      %862 = vrot.lane.b32.xlu0 %v423, 48
      %v863 = vpop.permute.xlu0 %862
      %864 = vrot.lane.b32.xlu0 %v424, 48
      %v865 = vpop.permute.xlu0 %864
      %866 = vrot.lane.b32.xlu0 %v425, 48
      %v867 = vpop.permute.xlu0 %866
      %868 = vrot.lane.b32.xlu0 %v426, 48
      %v869 = vpop.permute.xlu0 %868
      %870 = vrot.lane.b32.xlu0 %v427, 48
      %v871 = vpop.permute.xlu0 %870
      %872 = vrot.lane.b32.xlu0 %v428, 48
      %v873 = vpop.permute.xlu0 %872
      %874 = vrot.lane.b32.xlu0 %v429, 48
      %v875 = vpop.permute.xlu0 %874
      %876 = vrot.lane.b32.xlu0 %v430, 48
      %v877 = vpop.permute.xlu0 %876
      %878 = vrot.lane.b32.xlu0 %v431, 48
      %v879 = vpop.permute.xlu0 %878
      %880 = vrot.lane.b32.xlu0 %v700, 48
      %v881 = vpop.permute.xlu0 %880
      %882 = vrot.lane.b32.xlu0 %v701, 48
      %v883 = vpop.permute.xlu0 %882
      %884 = vrot.lane.b32.xlu0 %v846, 48
      %v885 = vpop.permute.xlu0 %884
      %886 = vrot.lane.b32.xlu0 %v847, 48
      %v887 = vpop.permute.xlu0 %886
      %v889 = vshrl.u32 %v846, 16
      %v891 = vshll.u32 %v846, 16
      %v893 = vrot.slane %v891, 1
      %v894 = vor.u32 %v889, %v893
      %v896 = vshll.u32 %v847, 16
      %v898 = vrot.slane %v896, 1
      %v899 = vsel %vm432, %v894, %v898
      %v900 = vshrl.u32 %v847, 16
      %v902 = vor.u32 %v900, %v898
      %903 = vrot.lane.b32.xlu0 %v474, 56
      %v904 = vpop.permute.xlu0 %903
      %905 = vrot.lane.b32.xlu0 %v477, 56
      %v906 = vpop.permute.xlu0 %905
      %907 = vrot.lane.b32.xlu0 %v489, 56
      %v908 = vpop.permute.xlu0 %907
      %909 = vrot.lane.b32.xlu0 %v492, 56
      %v910 = vpop.permute.xlu0 %909
      %911 = vrot.lane.b32.xlu0 %v504, 56
      %v912 = vpop.permute.xlu0 %911
      %913 = vrot.lane.b32.xlu0 %v507, 56
      %v914 = vpop.permute.xlu0 %913
      %915 = vrot.lane.b32.xlu0 %v519, 56
      %v916 = vpop.permute.xlu0 %915
      %917 = vrot.lane.b32.xlu0 %v522, 56
      %v918 = vpop.permute.xlu0 %917
      %919 = vrot.lane.b32.xlu0 %v534, 56
      %v920 = vpop.permute.xlu0 %919
      %921 = vrot.lane.b32.xlu0 %v537, 56
      %v922 = vpop.permute.xlu0 %921
      %923 = vrot.lane.b32.xlu0 %v549, 56
      %v924 = vpop.permute.xlu0 %923
      %925 = vrot.lane.b32.xlu0 %v552, 56
      %v926 = vpop.permute.xlu0 %925
      %927 = vrot.lane.b32.xlu0 %v564, 56
      %v928 = vpop.permute.xlu0 %927
      %929 = vrot.lane.b32.xlu0 %v567, 56
      %v930 = vpop.permute.xlu0 %929
      %931 = vrot.lane.b32.xlu0 %v579, 56
      %v932 = vpop.permute.xlu0 %931
      %933 = vrot.lane.b32.xlu0 %v582, 56
      %v934 = vpop.permute.xlu0 %933
      %935 = vrot.lane.b32.xlu0 %v753, 56
      %v936 = vpop.permute.xlu0 %935
      %937 = vrot.lane.b32.xlu0 %v756, 56
      %v938 = vpop.permute.xlu0 %937
      %939 = vrot.lane.b32.xlu0 %v899, 56
      %v940 = vpop.permute.xlu0 %939
      %941 = vrot.lane.b32.xlu0 %v902, 56
      %v942 = vpop.permute.xlu0 %941
      %v943 = vrot.slane %v846, 1
      %v944 = vrot.slane %v847, 1
      %v945 = vsel %vm623, %v943, %v944
      %946 = vrot.lane.b32.xlu0 %v632, 64
      %v947 = vpop.permute.xlu0 %946
      %948 = vrot.lane.b32.xlu0 %v631, 64
      %v949 = vpop.permute.xlu0 %948
      %950 = vrot.lane.b32.xlu0 %v635, 64
      %v951 = vpop.permute.xlu0 %950
      %952 = vrot.lane.b32.xlu0 %v634, 64
      %v953 = vpop.permute.xlu0 %952
      %954 = vrot.lane.b32.xlu0 %v638, 64
      %v955 = vpop.permute.xlu0 %954
      %956 = vrot.lane.b32.xlu0 %v637, 64
      %v957 = vpop.permute.xlu0 %956
      %958 = vrot.lane.b32.xlu0 %v641, 64
      %v959 = vpop.permute.xlu0 %958
      %960 = vrot.lane.b32.xlu0 %v640, 64
      %v961 = vpop.permute.xlu0 %960
      %962 = vrot.lane.b32.xlu0 %v644, 64
      %v963 = vpop.permute.xlu0 %962
      %964 = vrot.lane.b32.xlu0 %v643, 64
      %v965 = vpop.permute.xlu0 %964
      %966 = vrot.lane.b32.xlu0 %v647, 64
      %v967 = vpop.permute.xlu0 %966
      %968 = vrot.lane.b32.xlu0 %v646, 64
      %v969 = vpop.permute.xlu0 %968
      %970 = vrot.lane.b32.xlu0 %v650, 64
      %v971 = vpop.permute.xlu0 %970
      %972 = vrot.lane.b32.xlu0 %v649, 64
      %v973 = vpop.permute.xlu0 %972
      %974 = vrot.lane.b32.xlu0 %v653, 64
      %v975 = vpop.permute.xlu0 %974
      %976 = vrot.lane.b32.xlu0 %v652, 64
      %v977 = vpop.permute.xlu0 %976
      %978 = vrot.lane.b32.xlu0 %v799, 64
      %v979 = vpop.permute.xlu0 %978
      %980 = vrot.lane.b32.xlu0 %v798, 64
      %v981 = vpop.permute.xlu0 %980
      %982 = vrot.lane.b32.xlu0 %v945, 64
      %v983 = vpop.permute.xlu0 %982
      %984 = vrot.lane.b32.xlu0 %v944, 64
      %v985 = vpop.permute.xlu0 %984
      %vm986 = vcmask 64512
      %v988 = vsel %vm986, %v412, %v584
      %v990 = vsel %vm986, %v413, %v586
      %v992 = vsel %vm986, %v414, %v588
      %v994 = vsel %vm986, %v415, %v590
      %v996 = vsel %vm986, %v416, %v592
      %v998 = vsel %vm986, %v417, %v594
      %v1000 = vsel %vm986, %v418, %v596
      %v1002 = vsel %vm986, %v419, %v598
      %v1004 = vsel %vm986, %v420, %v600
      %v1006 = vsel %vm986, %v421, %v602
      %v1008 = vsel %vm986, %v422, %v604
      %v1010 = vsel %vm986, %v423, %v606
      %v1012 = vsel %vm986, %v424, %v608
      %v1014 = vsel %vm986, %v425, %v610
      %v1016 = vsel %vm986, %v426, %v612
      %v1018 = vsel %vm986, %v427, %v614
      %v1020 = vsel %vm986, %v428, %v616
      %v1022 = vsel %vm986, %v429, %v618
      %v1024 = vsel %vm986, %v430, %v620
      %v1026 = vsel %vm986, %v431, %v622
      %vm1027 = vcmask 130048
      %v1029 = vsel %vm1027, %v988, %v655
      %v1031 = vsel %vm1027, %v990, %v657
      %v1033 = vsel %vm1027, %v992, %v659
      %v1035 = vsel %vm1027, %v994, %v661
      %v1037 = vsel %vm1027, %v996, %v663
      %v1039 = vsel %vm1027, %v998, %v665
      %v1041 = vsel %vm1027, %v1000, %v667
      %v1043 = vsel %vm1027, %v1002, %v669
      %v1045 = vsel %vm1027, %v1004, %v671
      %v1047 = vsel %vm1027, %v1006, %v673
      %v1049 = vsel %vm1027, %v1008, %v675
      %v1051 = vsel %vm1027, %v1010, %v677
      %v1053 = vsel %vm1027, %v1012, %v679
      %v1055 = vsel %vm1027, %v1014, %v681
      %v1057 = vsel %vm1027, %v1016, %v683
      %v1059 = vsel %vm1027, %v1018, %v685
      %v1061 = vsel %vm1027, %v1020, %v687
      %v1063 = vsel %vm1027, %v1022, %v689
      %v1065 = vsel %vm1027, %v1024, %v691
      %v1067 = vsel %vm1027, %v1026, %v693
      %vm1068 = vcmask 195584
      %v1070 = vsel %vm1068, %v1029, %v703
      %v1072 = vsel %vm1068, %v1031, %v705
      %v1074 = vsel %vm1068, %v1033, %v707
      %v1076 = vsel %vm1068, %v1035, %v709
      %v1078 = vsel %vm1068, %v1037, %v711
      %v1080 = vsel %vm1068, %v1039, %v713
      %v1082 = vsel %vm1068, %v1041, %v715
      %v1084 = vsel %vm1068, %v1043, %v717
      %v1086 = vsel %vm1068, %v1045, %v719
      %v1088 = vsel %vm1068, %v1047, %v721
      %v1090 = vsel %vm1068, %v1049, %v723
      %v1092 = vsel %vm1068, %v1051, %v725
      %v1094 = vsel %vm1068, %v1053, %v727
      %v1096 = vsel %vm1068, %v1055, %v729
      %v1098 = vsel %vm1068, %v1057, %v731
      %v1100 = vsel %vm1068, %v1059, %v733
      %v1102 = vsel %vm1068, %v1061, %v735
      %v1104 = vsel %vm1068, %v1063, %v737
      %v1106 = vsel %vm1068, %v1065, %v739
      %v1108 = vsel %vm1068, %v1067, %v741
      %vm1109 = vcmask 261120
      %v1111 = vsel %vm1109, %v1070, %v758
      %v1113 = vsel %vm1109, %v1072, %v760
      %v1115 = vsel %vm1109, %v1074, %v762
      %v1117 = vsel %vm1109, %v1076, %v764
      %v1119 = vsel %vm1109, %v1078, %v766
      %v1121 = vsel %vm1109, %v1080, %v768
      %v1123 = vsel %vm1109, %v1082, %v770
      %v1125 = vsel %vm1109, %v1084, %v772
      %v1127 = vsel %vm1109, %v1086, %v774
      %v1129 = vsel %vm1109, %v1088, %v776
      %v1131 = vsel %vm1109, %v1090, %v778
      %v1133 = vsel %vm1109, %v1092, %v780
      %v1135 = vsel %vm1109, %v1094, %v782
      %v1137 = vsel %vm1109, %v1096, %v784
      %v1139 = vsel %vm1109, %v1098, %v786
      %v1141 = vsel %vm1109, %v1100, %v788
      %v1143 = vsel %vm1109, %v1102, %v790
      %v1145 = vsel %vm1109, %v1104, %v792
      %v1147 = vsel %vm1109, %v1106, %v794
      %v1149 = vsel %vm1109, %v1108, %v796
      %vm1150 = vcmask 326656
      %v1152 = vsel %vm1150, %v1111, %v801
      %v1154 = vsel %vm1150, %v1113, %v803
      %v1156 = vsel %vm1150, %v1115, %v805
      %v1158 = vsel %vm1150, %v1117, %v807
      %v1160 = vsel %vm1150, %v1119, %v809
      %v1162 = vsel %vm1150, %v1121, %v811
      %v1164 = vsel %vm1150, %v1123, %v813
      %v1166 = vsel %vm1150, %v1125, %v815
      %v1168 = vsel %vm1150, %v1127, %v817
      %v1170 = vsel %vm1150, %v1129, %v819
      %v1172 = vsel %vm1150, %v1131, %v821
      %v1174 = vsel %vm1150, %v1133, %v823
      %v1176 = vsel %vm1150, %v1135, %v825
      %v1178 = vsel %vm1150, %v1137, %v827
      %v1180 = vsel %vm1150, %v1139, %v829
      %v1182 = vsel %vm1150, %v1141, %v831
      %v1184 = vsel %vm1150, %v1143, %v833
      %v1186 = vsel %vm1150, %v1145, %v835
      %v1188 = vsel %vm1150, %v1147, %v837
      %v1190 = vsel %vm1150, %v1149, %v839
      %vm1191 = vcmask 392192
      %v1193 = vsel %vm1191, %v1152, %v849
      %v1195 = vsel %vm1191, %v1154, %v851
      %v1197 = vsel %vm1191, %v1156, %v853
      %v1199 = vsel %vm1191, %v1158, %v855
      %v1201 = vsel %vm1191, %v1160, %v857
      %v1203 = vsel %vm1191, %v1162, %v859
      %v1205 = vsel %vm1191, %v1164, %v861
      %v1207 = vsel %vm1191, %v1166, %v863
      %v1209 = vsel %vm1191, %v1168, %v865
      %v1211 = vsel %vm1191, %v1170, %v867
      %v1213 = vsel %vm1191, %v1172, %v869
      %v1215 = vsel %vm1191, %v1174, %v871
      %v1217 = vsel %vm1191, %v1176, %v873
      %v1219 = vsel %vm1191, %v1178, %v875
      %v1221 = vsel %vm1191, %v1180, %v877
      %v1223 = vsel %vm1191, %v1182, %v879
      %v1225 = vsel %vm1191, %v1184, %v881
      %v1227 = vsel %vm1191, %v1186, %v883
      %v1229 = vsel %vm1191, %v1188, %v885
      %v1231 = vsel %vm1191, %v1190, %v887
      %vm1232 = vcmask 457728
      %v1234 = vsel %vm1232, %v1193, %v904
      %v1236 = vsel %vm1232, %v1195, %v906
      %v1238 = vsel %vm1232, %v1197, %v908
      %v1240 = vsel %vm1232, %v1199, %v910
      %v1242 = vsel %vm1232, %v1201, %v912
      %v1244 = vsel %vm1232, %v1203, %v914
      %v1246 = vsel %vm1232, %v1205, %v916
      %v1248 = vsel %vm1232, %v1207, %v918
      %v1250 = vsel %vm1232, %v1209, %v920
      %v1252 = vsel %vm1232, %v1211, %v922
      %v1254 = vsel %vm1232, %v1213, %v924
      %v1256 = vsel %vm1232, %v1215, %v926
      %v1258 = vsel %vm1232, %v1217, %v928
      %v1260 = vsel %vm1232, %v1219, %v930
      %v1262 = vsel %vm1232, %v1221, %v932
      %v1264 = vsel %vm1232, %v1223, %v934
      %v1266 = vsel %vm1232, %v1225, %v936
      %v1268 = vsel %vm1232, %v1227, %v938
      %v1270 = vsel %vm1232, %v1229, %v940
      %v1272 = vsel %vm1232, %v1231, %v942
      %vm1273 = vcmask 523264
      %v1275 = vsel %vm1273, %v1234, %v947
      %v1277 = vsel %vm1273, %v1236, %v949
      %v1279 = vsel %vm1273, %v1238, %v951
      %v1281 = vsel %vm1273, %v1240, %v953
      %v1283 = vsel %vm1273, %v1242, %v955
      %v1285 = vsel %vm1273, %v1244, %v957
      %v1287 = vsel %vm1273, %v1246, %v959
      %v1289 = vsel %vm1273, %v1248, %v961
      %v1291 = vsel %vm1273, %v1250, %v963
      %v1293 = vsel %vm1273, %v1252, %v965
      %v1295 = vsel %vm1273, %v1254, %v967
      %v1297 = vsel %vm1273, %v1256, %v969
      %v1299 = vsel %vm1273, %v1258, %v971
      %v1301 = vsel %vm1273, %v1260, %v973
      %v1303 = vsel %vm1273, %v1262, %v975
      %v1305 = vsel %vm1273, %v1264, %v977
      %v1307 = vsel %vm1273, %v1266, %v979
      %v1309 = vsel %vm1273, %v1268, %v981
      %v1311 = vsel %vm1273, %v1270, %v983
      %v1313 = vsel %vm1273, %v1272, %v985
      %v1334 = vcombine.high %v1275, %v1275
      %v1336 = vunpack.c.l.s4 1966171168
      %v1337 = vunpack.c.0.s8 %v1336
      %v1338 = vlaneseq
      %v1339 = vshrl.u32 %v1338, 7
      %v1340 = vsub.s32 %v1337, %v1339
      %v1341 = vrot.slane %v1275, %v1340
      %v1343 = vunpack.c.l.s4 1966171168
      %v1344 = vunpack.c.0.s8 %v1343
      %v1345 = vlaneseq
      %v1346 = vshrl.u32 %v1345, 7
      %v1347 = vsub.s32 %v1344, %v1346
      %v1348 = vrot.slane %v1334, %v1347
      %v1349 = vcombine.high %v1341, %v1341
      %v1350 = vcombine.high %v1348, %v1348
      %v1352 = vunpack.c.l.s4 1966171168
      %v1353 = vunpack.c.0.s8 %v1352
      %v1354 = vlaneseq
      %v1355 = vshrl.u32 %v1354, 7
      %v1356 = vsub.s32 %v1353, %v1355
      %v1357 = vrot.slane %v1341, %v1356
      %v1359 = vunpack.c.l.s4 1966171168
      %v1360 = vunpack.c.0.s8 %v1359
      %v1361 = vlaneseq
      %v1362 = vshrl.u32 %v1361, 7
      %v1363 = vsub.s32 %v1360, %v1362
      %v1364 = vrot.slane %v1348, %v1363
      %v1366 = vunpack.c.l.s4 1966171168
      %v1367 = vunpack.c.0.s8 %v1366
      %v1368 = vlaneseq
      %v1369 = vshrl.u32 %v1368, 7
      %v1370 = vsub.s32 %v1367, %v1369
      %v1371 = vrot.slane %v1349, %v1370
      %v1373 = vunpack.c.l.s4 1966171168
      %v1374 = vunpack.c.0.s8 %v1373
      %v1375 = vlaneseq
      %v1376 = vshrl.u32 %v1375, 7
      %v1377 = vsub.s32 %v1374, %v1376
      %v1378 = vrot.slane %v1350, %v1377
      %v1379 = vcombine.high %v1357, %v1357
      %v1380 = vcombine.high %v1364, %v1364
      %v1381 = vcombine.high %v1371, %v1371
      %v1382 = vcombine.high %v1378, %v1378
      %v1384 = vunpack.c.l.s4 1966171168
      %v1385 = vunpack.c.0.s8 %v1384
      %v1386 = vlaneseq
      %v1387 = vshrl.u32 %v1386, 7
      %v1388 = vsub.s32 %v1385, %v1387
      %v1389 = vrot.slane %v1277, %v1388
      %v1391 = vunpack.c.l.s4 1966171168
      %v1392 = vunpack.c.0.s8 %v1391
      %v1393 = vlaneseq
      %v1394 = vshrl.u32 %v1393, 7
      %v1395 = vsub.s32 %v1392, %v1394
      %v1396 = vrot.slane %v1389, %v1395
      %v1397 = vcombine.high %v1279, %v1279
      %v1399 = vunpack.c.l.s4 1966171168
      %v1400 = vunpack.c.0.s8 %v1399
      %v1401 = vlaneseq
      %v1402 = vshrl.u32 %v1401, 7
      %v1403 = vsub.s32 %v1400, %v1402
      %v1404 = vrot.slane %v1279, %v1403
      %v1406 = vunpack.c.l.s4 1966171168
      %v1407 = vunpack.c.0.s8 %v1406
      %v1408 = vlaneseq
      %v1409 = vshrl.u32 %v1408, 7
      %v1410 = vsub.s32 %v1407, %v1409
      %v1411 = vrot.slane %v1397, %v1410
      %v1412 = vcombine.high %v1404, %v1404
      %v1413 = vcombine.high %v1411, %v1411
      %v1415 = vunpack.c.l.s4 1966171168
      %v1416 = vunpack.c.0.s8 %v1415
      %v1417 = vlaneseq
      %v1418 = vshrl.u32 %v1417, 7
      %v1419 = vsub.s32 %v1416, %v1418
      %v1420 = vrot.slane %v1404, %v1419
      %v1422 = vunpack.c.l.s4 1966171168
      %v1423 = vunpack.c.0.s8 %v1422
      %v1424 = vlaneseq
      %v1425 = vshrl.u32 %v1424, 7
      %v1426 = vsub.s32 %v1423, %v1425
      %v1427 = vrot.slane %v1411, %v1426
      %v1429 = vunpack.c.l.s4 1966171168
      %v1430 = vunpack.c.0.s8 %v1429
      %v1431 = vlaneseq
      %v1432 = vshrl.u32 %v1431, 7
      %v1433 = vsub.s32 %v1430, %v1432
      %v1434 = vrot.slane %v1412, %v1433
      %v1436 = vunpack.c.l.s4 1966171168
      %v1437 = vunpack.c.0.s8 %v1436
      %v1438 = vlaneseq
      %v1439 = vshrl.u32 %v1438, 7
      %v1440 = vsub.s32 %v1437, %v1439
      %v1441 = vrot.slane %v1413, %v1440
      %v1442 = vcombine.high %v1420, %v1420
      %v1443 = vcombine.high %v1427, %v1427
      %v1444 = vcombine.high %v1434, %v1434
      %v1445 = vcombine.high %v1441, %v1441
      %v1447 = vunpack.c.l.s4 1966171168
      %v1448 = vunpack.c.0.s8 %v1447
      %v1449 = vlaneseq
      %v1450 = vshrl.u32 %v1449, 7
      %v1451 = vsub.s32 %v1448, %v1450
      %v1452 = vrot.slane %v1281, %v1451
      %v1454 = vunpack.c.l.s4 1966171168
      %v1455 = vunpack.c.0.s8 %v1454
      %v1456 = vlaneseq
      %v1457 = vshrl.u32 %v1456, 7
      %v1458 = vsub.s32 %v1455, %v1457
      %v1459 = vrot.slane %v1452, %v1458
      %v1460 = vcombine.high %v1283, %v1283
      %v1462 = vunpack.c.l.s4 1966171168
      %v1463 = vunpack.c.0.s8 %v1462
      %v1464 = vlaneseq
      %v1465 = vshrl.u32 %v1464, 7
      %v1466 = vsub.s32 %v1463, %v1465
      %v1467 = vrot.slane %v1283, %v1466
      %v1469 = vunpack.c.l.s4 1966171168
      %v1470 = vunpack.c.0.s8 %v1469
      %v1471 = vlaneseq
      %v1472 = vshrl.u32 %v1471, 7
      %v1473 = vsub.s32 %v1470, %v1472
      %v1474 = vrot.slane %v1460, %v1473
      %v1475 = vcombine.high %v1467, %v1467
      %v1476 = vcombine.high %v1474, %v1474
      %v1478 = vunpack.c.l.s4 1966171168
      %v1479 = vunpack.c.0.s8 %v1478
      %v1480 = vlaneseq
      %v1481 = vshrl.u32 %v1480, 7
      %v1482 = vsub.s32 %v1479, %v1481
      %v1483 = vrot.slane %v1467, %v1482
      %v1485 = vunpack.c.l.s4 1966171168
      %v1486 = vunpack.c.0.s8 %v1485
      %v1487 = vlaneseq
      %v1488 = vshrl.u32 %v1487, 7
      %v1489 = vsub.s32 %v1486, %v1488
      %v1490 = vrot.slane %v1474, %v1489
      %v1492 = vunpack.c.l.s4 1966171168
      %v1493 = vunpack.c.0.s8 %v1492
      %v1494 = vlaneseq
      %v1495 = vshrl.u32 %v1494, 7
      %v1496 = vsub.s32 %v1493, %v1495
      %v1497 = vrot.slane %v1475, %v1496
      %v1499 = vunpack.c.l.s4 1966171168
      %v1500 = vunpack.c.0.s8 %v1499
      %v1501 = vlaneseq
      %v1502 = vshrl.u32 %v1501, 7
      %v1503 = vsub.s32 %v1500, %v1502
      %v1504 = vrot.slane %v1476, %v1503
      %v1505 = vcombine.high %v1483, %v1483
      %v1506 = vcombine.high %v1490, %v1490
      %v1507 = vcombine.high %v1497, %v1497
      %v1508 = vcombine.high %v1504, %v1504
      %v1510 = vunpack.c.l.s4 1966171168
      %v1511 = vunpack.c.0.s8 %v1510
      %v1512 = vlaneseq
      %v1513 = vshrl.u32 %v1512, 7
      %v1514 = vsub.s32 %v1511, %v1513
      %v1515 = vrot.slane %v1285, %v1514
      %v1517 = vunpack.c.l.s4 1966171168
      %v1518 = vunpack.c.0.s8 %v1517
      %v1519 = vlaneseq
      %v1520 = vshrl.u32 %v1519, 7
      %v1521 = vsub.s32 %v1518, %v1520
      %v1522 = vrot.slane %v1515, %v1521
      %v1523 = vcombine.high %v1287, %v1287
      %v1525 = vunpack.c.l.s4 1966171168
      %v1526 = vunpack.c.0.s8 %v1525
      %v1527 = vlaneseq
      %v1528 = vshrl.u32 %v1527, 7
      %v1529 = vsub.s32 %v1526, %v1528
      %v1530 = vrot.slane %v1287, %v1529
      %v1532 = vunpack.c.l.s4 1966171168
      %v1533 = vunpack.c.0.s8 %v1532
      %v1534 = vlaneseq
      %v1535 = vshrl.u32 %v1534, 7
      %v1536 = vsub.s32 %v1533, %v1535
      %v1537 = vrot.slane %v1523, %v1536
      %v1538 = vcombine.high %v1530, %v1530
      %v1539 = vcombine.high %v1537, %v1537
      %v1541 = vunpack.c.l.s4 1966171168
      %v1542 = vunpack.c.0.s8 %v1541
      %v1543 = vlaneseq
      %v1544 = vshrl.u32 %v1543, 7
      %v1545 = vsub.s32 %v1542, %v1544
      %v1546 = vrot.slane %v1530, %v1545
      %v1548 = vunpack.c.l.s4 1966171168
      %v1549 = vunpack.c.0.s8 %v1548
      %v1550 = vlaneseq
      %v1551 = vshrl.u32 %v1550, 7
      %v1552 = vsub.s32 %v1549, %v1551
      %v1553 = vrot.slane %v1537, %v1552
      %v1555 = vunpack.c.l.s4 1966171168
      %v1556 = vunpack.c.0.s8 %v1555
      %v1557 = vlaneseq
      %v1558 = vshrl.u32 %v1557, 7
      %v1559 = vsub.s32 %v1556, %v1558
      %v1560 = vrot.slane %v1538, %v1559
      %v1562 = vunpack.c.l.s4 1966171168
      %v1563 = vunpack.c.0.s8 %v1562
      %v1564 = vlaneseq
      %v1565 = vshrl.u32 %v1564, 7
      %v1566 = vsub.s32 %v1563, %v1565
      %v1567 = vrot.slane %v1539, %v1566
      %v1568 = vcombine.high %v1546, %v1546
      %v1569 = vcombine.high %v1553, %v1553
      %v1570 = vcombine.high %v1560, %v1560
      %v1571 = vcombine.high %v1567, %v1567
      %v1573 = vunpack.c.l.s4 1966171168
      %v1574 = vunpack.c.0.s8 %v1573
      %v1575 = vlaneseq
      %v1576 = vshrl.u32 %v1575, 7
      %v1577 = vsub.s32 %v1574, %v1576
      %v1578 = vrot.slane %v1289, %v1577
      %v1580 = vunpack.c.l.s4 1966171168
      %v1581 = vunpack.c.0.s8 %v1580
      %v1582 = vlaneseq
      %v1583 = vshrl.u32 %v1582, 7
      %v1584 = vsub.s32 %v1581, %v1583
      %v1585 = vrot.slane %v1578, %v1584
      %v1586 = vcombine.high %v1291, %v1291
      %v1588 = vunpack.c.l.s4 1966171168
      %v1589 = vunpack.c.0.s8 %v1588
      %v1590 = vlaneseq
      %v1591 = vshrl.u32 %v1590, 7
      %v1592 = vsub.s32 %v1589, %v1591
      %v1593 = vrot.slane %v1291, %v1592
      %v1595 = vunpack.c.l.s4 1966171168
      %v1596 = vunpack.c.0.s8 %v1595
      %v1597 = vlaneseq
      %v1598 = vshrl.u32 %v1597, 7
      %v1599 = vsub.s32 %v1596, %v1598
      %v1600 = vrot.slane %v1586, %v1599
      %v1601 = vcombine.high %v1593, %v1593
      %v1602 = vcombine.high %v1600, %v1600
      %v1604 = vunpack.c.l.s4 1966171168
      %v1605 = vunpack.c.0.s8 %v1604
      %v1606 = vlaneseq
      %v1607 = vshrl.u32 %v1606, 7
      %v1608 = vsub.s32 %v1605, %v1607
      %v1609 = vrot.slane %v1593, %v1608
      %v1611 = vunpack.c.l.s4 1966171168
      %v1612 = vunpack.c.0.s8 %v1611
      %v1613 = vlaneseq
      %v1614 = vshrl.u32 %v1613, 7
      %v1615 = vsub.s32 %v1612, %v1614
      %v1616 = vrot.slane %v1600, %v1615
      %v1618 = vunpack.c.l.s4 1966171168
      %v1619 = vunpack.c.0.s8 %v1618
      %v1620 = vlaneseq
      %v1621 = vshrl.u32 %v1620, 7
      %v1622 = vsub.s32 %v1619, %v1621
      %v1623 = vrot.slane %v1601, %v1622
      %v1625 = vunpack.c.l.s4 1966171168
      %v1626 = vunpack.c.0.s8 %v1625
      %v1627 = vlaneseq
      %v1628 = vshrl.u32 %v1627, 7
      %v1629 = vsub.s32 %v1626, %v1628
      %v1630 = vrot.slane %v1602, %v1629
      %v1631 = vcombine.high %v1609, %v1609
      %v1632 = vcombine.high %v1616, %v1616
      %v1633 = vcombine.high %v1623, %v1623
      %v1634 = vcombine.high %v1630, %v1630
      %v1636 = vunpack.c.l.s4 1966171168
      %v1637 = vunpack.c.0.s8 %v1636
      %v1638 = vlaneseq
      %v1639 = vshrl.u32 %v1638, 7
      %v1640 = vsub.s32 %v1637, %v1639
      %v1641 = vrot.slane %v1293, %v1640
      %v1643 = vunpack.c.l.s4 1966171168
      %v1644 = vunpack.c.0.s8 %v1643
      %v1645 = vlaneseq
      %v1646 = vshrl.u32 %v1645, 7
      %v1647 = vsub.s32 %v1644, %v1646
      %v1648 = vrot.slane %v1641, %v1647
      %v1649 = vcombine.high %v1295, %v1295
      %v1651 = vunpack.c.l.s4 1966171168
      %v1652 = vunpack.c.0.s8 %v1651
      %v1653 = vlaneseq
      %v1654 = vshrl.u32 %v1653, 7
      %v1655 = vsub.s32 %v1652, %v1654
      %v1656 = vrot.slane %v1295, %v1655
      %v1658 = vunpack.c.l.s4 1966171168
      %v1659 = vunpack.c.0.s8 %v1658
      %v1660 = vlaneseq
      %v1661 = vshrl.u32 %v1660, 7
      %v1662 = vsub.s32 %v1659, %v1661
      %v1663 = vrot.slane %v1649, %v1662
      %v1664 = vcombine.high %v1656, %v1656
      %v1665 = vcombine.high %v1663, %v1663
      %v1667 = vunpack.c.l.s4 1966171168
      %v1668 = vunpack.c.0.s8 %v1667
      %v1669 = vlaneseq
      %v1670 = vshrl.u32 %v1669, 7
      %v1671 = vsub.s32 %v1668, %v1670
      %v1672 = vrot.slane %v1656, %v1671
      %v1674 = vunpack.c.l.s4 1966171168
      %v1675 = vunpack.c.0.s8 %v1674
      %v1676 = vlaneseq
      %v1677 = vshrl.u32 %v1676, 7
      %v1678 = vsub.s32 %v1675, %v1677
      %v1679 = vrot.slane %v1663, %v1678
      %v1681 = vunpack.c.l.s4 1966171168
      %v1682 = vunpack.c.0.s8 %v1681
      %v1683 = vlaneseq
      %v1684 = vshrl.u32 %v1683, 7
      %v1685 = vsub.s32 %v1682, %v1684
      %v1686 = vrot.slane %v1664, %v1685
      %v1688 = vunpack.c.l.s4 1966171168
      %v1689 = vunpack.c.0.s8 %v1688
      %v1690 = vlaneseq
      %v1691 = vshrl.u32 %v1690, 7
      %v1692 = vsub.s32 %v1689, %v1691
      %v1693 = vrot.slane %v1665, %v1692
      %v1694 = vcombine.high %v1672, %v1672
      %v1695 = vcombine.high %v1679, %v1679
      %v1696 = vcombine.high %v1686, %v1686
      %v1697 = vcombine.high %v1693, %v1693
      %v1699 = vunpack.c.l.s4 1966171168
      %v1700 = vunpack.c.0.s8 %v1699
      %v1701 = vlaneseq
      %v1702 = vshrl.u32 %v1701, 7
      %v1703 = vsub.s32 %v1700, %v1702
      %v1704 = vrot.slane %v1297, %v1703
      %v1706 = vunpack.c.l.s4 1966171168
      %v1707 = vunpack.c.0.s8 %v1706
      %v1708 = vlaneseq
      %v1709 = vshrl.u32 %v1708, 7
      %v1710 = vsub.s32 %v1707, %v1709
      %v1711 = vrot.slane %v1704, %v1710
      %v1712 = vcombine.high %v1299, %v1299
      %v1714 = vunpack.c.l.s4 1966171168
      %v1715 = vunpack.c.0.s8 %v1714
      %v1716 = vlaneseq
      %v1717 = vshrl.u32 %v1716, 7
      %v1718 = vsub.s32 %v1715, %v1717
      %v1719 = vrot.slane %v1299, %v1718
      %v1721 = vunpack.c.l.s4 1966171168
      %v1722 = vunpack.c.0.s8 %v1721
      %v1723 = vlaneseq
      %v1724 = vshrl.u32 %v1723, 7
      %v1725 = vsub.s32 %v1722, %v1724
      %v1726 = vrot.slane %v1712, %v1725
      %v1727 = vcombine.high %v1719, %v1719
      %v1728 = vcombine.high %v1726, %v1726
      %v1730 = vunpack.c.l.s4 1966171168
      %v1731 = vunpack.c.0.s8 %v1730
      %v1732 = vlaneseq
      %v1733 = vshrl.u32 %v1732, 7
      %v1734 = vsub.s32 %v1731, %v1733
      %v1735 = vrot.slane %v1719, %v1734
      %v1737 = vunpack.c.l.s4 1966171168
      %v1738 = vunpack.c.0.s8 %v1737
      %v1739 = vlaneseq
      %v1740 = vshrl.u32 %v1739, 7
      %v1741 = vsub.s32 %v1738, %v1740
      %v1742 = vrot.slane %v1726, %v1741
      %v1744 = vunpack.c.l.s4 1966171168
      %v1745 = vunpack.c.0.s8 %v1744
      %v1746 = vlaneseq
      %v1747 = vshrl.u32 %v1746, 7
      %v1748 = vsub.s32 %v1745, %v1747
      %v1749 = vrot.slane %v1727, %v1748
      %v1751 = vunpack.c.l.s4 1966171168
      %v1752 = vunpack.c.0.s8 %v1751
      %v1753 = vlaneseq
      %v1754 = vshrl.u32 %v1753, 7
      %v1755 = vsub.s32 %v1752, %v1754
      %v1756 = vrot.slane %v1728, %v1755
      %v1757 = vcombine.high %v1735, %v1735
      %v1758 = vcombine.high %v1742, %v1742
      %v1759 = vcombine.high %v1749, %v1749
      %v1760 = vcombine.high %v1756, %v1756
      %v1762 = vunpack.c.l.s4 1966171168
      %v1763 = vunpack.c.0.s8 %v1762
      %v1764 = vlaneseq
      %v1765 = vshrl.u32 %v1764, 7
      %v1766 = vsub.s32 %v1763, %v1765
      %v1767 = vrot.slane %v1301, %v1766
      %v1769 = vunpack.c.l.s4 1966171168
      %v1770 = vunpack.c.0.s8 %v1769
      %v1771 = vlaneseq
      %v1772 = vshrl.u32 %v1771, 7
      %v1773 = vsub.s32 %v1770, %v1772
      %v1774 = vrot.slane %v1767, %v1773
      %v1775 = vcombine.high %v1303, %v1303
      %v1777 = vunpack.c.l.s4 1966171168
      %v1778 = vunpack.c.0.s8 %v1777
      %v1779 = vlaneseq
      %v1780 = vshrl.u32 %v1779, 7
      %v1781 = vsub.s32 %v1778, %v1780
      %v1782 = vrot.slane %v1303, %v1781
      %v1784 = vunpack.c.l.s4 1966171168
      %v1785 = vunpack.c.0.s8 %v1784
      %v1786 = vlaneseq
      %v1787 = vshrl.u32 %v1786, 7
      %v1788 = vsub.s32 %v1785, %v1787
      %v1789 = vrot.slane %v1775, %v1788
      %v1790 = vcombine.high %v1782, %v1782
      %v1791 = vcombine.high %v1789, %v1789
      %v1793 = vunpack.c.l.s4 1966171168
      %v1794 = vunpack.c.0.s8 %v1793
      %v1795 = vlaneseq
      %v1796 = vshrl.u32 %v1795, 7
      %v1797 = vsub.s32 %v1794, %v1796
      %v1798 = vrot.slane %v1782, %v1797
      %v1800 = vunpack.c.l.s4 1966171168
      %v1801 = vunpack.c.0.s8 %v1800
      %v1802 = vlaneseq
      %v1803 = vshrl.u32 %v1802, 7
      %v1804 = vsub.s32 %v1801, %v1803
      %v1805 = vrot.slane %v1789, %v1804
      %v1807 = vunpack.c.l.s4 1966171168
      %v1808 = vunpack.c.0.s8 %v1807
      %v1809 = vlaneseq
      %v1810 = vshrl.u32 %v1809, 7
      %v1811 = vsub.s32 %v1808, %v1810
      %v1812 = vrot.slane %v1790, %v1811
      %v1814 = vunpack.c.l.s4 1966171168
      %v1815 = vunpack.c.0.s8 %v1814
      %v1816 = vlaneseq
      %v1817 = vshrl.u32 %v1816, 7
      %v1818 = vsub.s32 %v1815, %v1817
      %v1819 = vrot.slane %v1791, %v1818
      %v1820 = vcombine.high %v1798, %v1798
      %v1821 = vcombine.high %v1805, %v1805
      %v1822 = vcombine.high %v1812, %v1812
      %v1823 = vcombine.high %v1819, %v1819
      %v1825 = vunpack.c.l.s4 1966171168
      %v1826 = vunpack.c.0.s8 %v1825
      %v1827 = vlaneseq
      %v1828 = vshrl.u32 %v1827, 7
      %v1829 = vsub.s32 %v1826, %v1828
      %v1830 = vrot.slane %v1305, %v1829
      %v1832 = vunpack.c.l.s4 1966171168
      %v1833 = vunpack.c.0.s8 %v1832
      %v1834 = vlaneseq
      %v1835 = vshrl.u32 %v1834, 7
      %v1836 = vsub.s32 %v1833, %v1835
      %v1837 = vrot.slane %v1830, %v1836
      %v1838 = vcombine.high %v1307, %v1307
      %v1840 = vunpack.c.l.s4 1966171168
      %v1841 = vunpack.c.0.s8 %v1840
      %v1842 = vlaneseq
      %v1843 = vshrl.u32 %v1842, 7
      %v1844 = vsub.s32 %v1841, %v1843
      %v1845 = vrot.slane %v1307, %v1844
      %v1847 = vunpack.c.l.s4 1966171168
      %v1848 = vunpack.c.0.s8 %v1847
      %v1849 = vlaneseq
      %v1850 = vshrl.u32 %v1849, 7
      %v1851 = vsub.s32 %v1848, %v1850
      %v1852 = vrot.slane %v1838, %v1851
      %v1853 = vcombine.high %v1845, %v1845
      %v1854 = vcombine.high %v1852, %v1852
      %v1856 = vunpack.c.l.s4 1966171168
      %v1857 = vunpack.c.0.s8 %v1856
      %v1858 = vlaneseq
      %v1859 = vshrl.u32 %v1858, 7
      %v1860 = vsub.s32 %v1857, %v1859
      %v1861 = vrot.slane %v1845, %v1860
      %v1863 = vunpack.c.l.s4 1966171168
      %v1864 = vunpack.c.0.s8 %v1863
      %v1865 = vlaneseq
      %v1866 = vshrl.u32 %v1865, 7
      %v1867 = vsub.s32 %v1864, %v1866
      %v1868 = vrot.slane %v1852, %v1867
      %v1870 = vunpack.c.l.s4 1966171168
      %v1871 = vunpack.c.0.s8 %v1870
      %v1872 = vlaneseq
      %v1873 = vshrl.u32 %v1872, 7
      %v1874 = vsub.s32 %v1871, %v1873
      %v1875 = vrot.slane %v1853, %v1874
      %v1877 = vunpack.c.l.s4 1966171168
      %v1878 = vunpack.c.0.s8 %v1877
      %v1879 = vlaneseq
      %v1880 = vshrl.u32 %v1879, 7
      %v1881 = vsub.s32 %v1878, %v1880
      %v1882 = vrot.slane %v1854, %v1881
      %v1883 = vcombine.high %v1861, %v1861
      %v1884 = vcombine.high %v1868, %v1868
      %v1885 = vcombine.high %v1875, %v1875
      %v1886 = vcombine.high %v1882, %v1882
      %v1888 = vunpack.c.l.s4 1966171168
      %v1889 = vunpack.c.0.s8 %v1888
      %v1890 = vlaneseq
      %v1891 = vshrl.u32 %v1890, 7
      %v1892 = vsub.s32 %v1889, %v1891
      %v1893 = vrot.slane %v1309, %v1892
      %v1895 = vunpack.c.l.s4 1966171168
      %v1896 = vunpack.c.0.s8 %v1895
      %v1897 = vlaneseq
      %v1898 = vshrl.u32 %v1897, 7
      %v1899 = vsub.s32 %v1896, %v1898
      %v1900 = vrot.slane %v1893, %v1899
      %v1901 = vcombine.high %v1311, %v1311
      %v1903 = vunpack.c.l.s4 1966171168
      %v1904 = vunpack.c.0.s8 %v1903
      %v1905 = vlaneseq
      %v1906 = vshrl.u32 %v1905, 7
      %v1907 = vsub.s32 %v1904, %v1906
      %v1908 = vrot.slane %v1311, %v1907
      %v1910 = vunpack.c.l.s4 1966171168
      %v1911 = vunpack.c.0.s8 %v1910
      %v1912 = vlaneseq
      %v1913 = vshrl.u32 %v1912, 7
      %v1914 = vsub.s32 %v1911, %v1913
      %v1915 = vrot.slane %v1901, %v1914
      %v1916 = vcombine.high %v1908, %v1908
      %v1917 = vcombine.high %v1915, %v1915
      %v1919 = vunpack.c.l.s4 1966171168
      %v1920 = vunpack.c.0.s8 %v1919
      %v1921 = vlaneseq
      %v1922 = vshrl.u32 %v1921, 7
      %v1923 = vsub.s32 %v1920, %v1922
      %v1924 = vrot.slane %v1908, %v1923
      %v1926 = vunpack.c.l.s4 1966171168
      %v1927 = vunpack.c.0.s8 %v1926
      %v1928 = vlaneseq
      %v1929 = vshrl.u32 %v1928, 7
      %v1930 = vsub.s32 %v1927, %v1929
      %v1931 = vrot.slane %v1915, %v1930
      %v1933 = vunpack.c.l.s4 1966171168
      %v1934 = vunpack.c.0.s8 %v1933
      %v1935 = vlaneseq
      %v1936 = vshrl.u32 %v1935, 7
      %v1937 = vsub.s32 %v1934, %v1936
      %v1938 = vrot.slane %v1916, %v1937
      %v1940 = vunpack.c.l.s4 1966171168
      %v1941 = vunpack.c.0.s8 %v1940
      %v1942 = vlaneseq
      %v1943 = vshrl.u32 %v1942, 7
      %v1944 = vsub.s32 %v1941, %v1943
      %v1945 = vrot.slane %v1917, %v1944
      %v1946 = vcombine.high %v1924, %v1924
      %v1947 = vcombine.high %v1931, %v1931
      %v1948 = vcombine.high %v1938, %v1938
      %v1949 = vcombine.high %v1945, %v1945
      %v1951 = vunpack.c.l.s4 1966171168
      %v1952 = vunpack.c.0.s8 %v1951
      %v1953 = vlaneseq
      %v1954 = vshrl.u32 %v1953, 7
      %v1955 = vsub.s32 %v1952, %v1954
      %v1956 = vrot.slane %v1313, %v1955
      %v1958 = vunpack.c.l.s4 1966171168
      %v1959 = vunpack.c.0.s8 %v1958
      %v1960 = vlaneseq
      %v1961 = vshrl.u32 %v1960, 7
      %v1962 = vsub.s32 %v1959, %v1961
      %v1963 = vrot.slane %v1956, %v1962
      %v1964 = vld [vmem:[%s2] sm:$0xf]
      %v1965 = vld [vmem:[%s2 + $0x4] sm:$0xf]
      %v1966 = vld [vmem:[%s2 + $0x8] sm:$0xf]
      %v1967 = vld [vmem:[%s2 + $0xc] sm:$0xf]
      %v1968 = vld [vmem:[%s2 + $0x10] sm:$0xf]
      %v1969 = vld [vmem:[%s2 + $0x14] sm:$0xf]
      %v1970 = vld [vmem:[%s2 + $0x18] sm:$0xf]
      %v1971 = vld [vmem:[%s2 + $0x1c] sm:$0xf]
      %v1972 = vld [vmem:[%s2 + $0x20] sm:$0xf]
      %v1973 = vld [vmem:[%s3] sm:$0x1]
      %v1975 = vlaneseq
      %v1976 = vshrl.u32 %v1975, 7
      %v1977 = vsub.s32 0, %v1976
      %v1978 = vrot.slane %v1973, %v1977
      %v1980 = vcombine.low %v1357, %v1371
      %v1981 = vcombine.low %v1379, %v1381
      %v1982 = vcombine.low %v1364, %v1378
      %v1983 = vcombine.low %v1380, %v1382
      %v1985 = vunpack.c.l.s4 1966171168
      %v1986 = vunpack.c.0.s8 %v1985
      %v1987 = vlaneseq
      %v1988 = vshrl.u32 %v1987, 7
      %v1989 = vsub.s32 %v1986, %v1988
      %v1990 = vrot.slane %v1980, %v1989
      %v1992 = vunpack.c.l.s4 1966171168
      %v1993 = vunpack.c.0.s8 %v1992
      %v1994 = vlaneseq
      %v1995 = vshrl.u32 %v1994, 7
      %v1996 = vsub.s32 %v1993, %v1995
      %v1997 = vrot.slane %v1981, %v1996
      %v1999 = vunpack.c.l.s4 1966171168
      %v2000 = vunpack.c.0.s8 %v1999
      %v2001 = vlaneseq
      %v2002 = vshrl.u32 %v2001, 7
      %v2003 = vsub.s32 %v2000, %v2002
      %v2004 = vrot.slane %v1982, %v2003
      %v2006 = vunpack.c.l.s4 1966171168
      %v2007 = vunpack.c.0.s8 %v2006
      %v2008 = vlaneseq
      %v2009 = vshrl.u32 %v2008, 7
      %v2010 = vsub.s32 %v2007, %v2009
      %v2011 = vrot.slane %v1983, %v2010
      %v2012 = vcombine.low %v1990, %v1997
      %v2013 = vcombine.low %v2004, %v2011
      %v2015 = vunpack.c.l.s4 1966171168
      %v2016 = vunpack.c.0.s8 %v2015
      %v2017 = vlaneseq
      %v2018 = vshrl.u32 %v2017, 7
      %v2019 = vsub.s32 %v2016, %v2018
      %v2020 = vrot.slane %v2012, %v2019
      %v2022 = vunpack.c.l.s4 1966171168
      %v2023 = vunpack.c.0.s8 %v2022
      %v2024 = vlaneseq
      %v2025 = vshrl.u32 %v2024, 7
      %v2026 = vsub.s32 %v2023, %v2025
      %v2027 = vrot.slane %v2013, %v2026
      %v2028 = vcombine.low %v2020, %v2027
      %v2029 = vcombine.low %v1396, %v1420
      %v2030 = vcombine.low %v1434, %v1442
      %v2031 = vcombine.low %v1444, %v1427
      %v2032 = vcombine.low %v1441, %v1443
      %v2034 = vunpack.c.l.s4 1966171168
      %v2035 = vunpack.c.0.s8 %v2034
      %v2036 = vlaneseq
      %v2037 = vshrl.u32 %v2036, 7
      %v2038 = vsub.s32 %v2035, %v2037
      %v2039 = vrot.slane %v2029, %v2038
      %v2041 = vunpack.c.l.s4 1966171168
      %v2042 = vunpack.c.0.s8 %v2041
      %v2043 = vlaneseq
      %v2044 = vshrl.u32 %v2043, 7
      %v2045 = vsub.s32 %v2042, %v2044
      %v2046 = vrot.slane %v2030, %v2045
      %v2048 = vunpack.c.l.s4 1966171168
      %v2049 = vunpack.c.0.s8 %v2048
      %v2050 = vlaneseq
      %v2051 = vshrl.u32 %v2050, 7
      %v2052 = vsub.s32 %v2049, %v2051
      %v2053 = vrot.slane %v2031, %v2052
      %v2055 = vunpack.c.l.s4 1966171168
      %v2056 = vunpack.c.0.s8 %v2055
      %v2057 = vlaneseq
      %v2058 = vshrl.u32 %v2057, 7
      %v2059 = vsub.s32 %v2056, %v2058
      %v2060 = vrot.slane %v2032, %v2059
      %v2061 = vcombine.low %v2039, %v2046
      %v2062 = vcombine.low %v2053, %v2060
      %v2064 = vunpack.c.l.s4 1966171168
      %v2065 = vunpack.c.0.s8 %v2064
      %v2066 = vlaneseq
      %v2067 = vshrl.u32 %v2066, 7
      %v2068 = vsub.s32 %v2065, %v2067
      %v2069 = vrot.slane %v2061, %v2068
      %v2071 = vunpack.c.l.s4 1966171168
      %v2072 = vunpack.c.0.s8 %v2071
      %v2073 = vlaneseq
      %v2074 = vshrl.u32 %v2073, 7
      %v2075 = vsub.s32 %v2072, %v2074
      %v2076 = vrot.slane %v2062, %v2075
      %v2077 = vcombine.low %v2069, %v2076
      %v2078 = vcombine.low %v1445, %v1459
      %v2079 = vcombine.low %v1483, %v1497
      %v2080 = vcombine.low %v1505, %v1507
      %v2081 = vcombine.low %v1490, %v1504
      %v2083 = vunpack.c.l.s4 1966171168
      %v2084 = vunpack.c.0.s8 %v2083
      %v2085 = vlaneseq
      %v2086 = vshrl.u32 %v2085, 7
      %v2087 = vsub.s32 %v2084, %v2086
      %v2088 = vrot.slane %v2078, %v2087
      %v2090 = vunpack.c.l.s4 1966171168
      %v2091 = vunpack.c.0.s8 %v2090
      %v2092 = vlaneseq
      %v2093 = vshrl.u32 %v2092, 7
      %v2094 = vsub.s32 %v2091, %v2093
      %v2095 = vrot.slane %v2079, %v2094
      %v2097 = vunpack.c.l.s4 1966171168
      %v2098 = vunpack.c.0.s8 %v2097
      %v2099 = vlaneseq
      %v2100 = vshrl.u32 %v2099, 7
      %v2101 = vsub.s32 %v2098, %v2100
      %v2102 = vrot.slane %v2080, %v2101
      %v2104 = vunpack.c.l.s4 1966171168
      %v2105 = vunpack.c.0.s8 %v2104
      %v2106 = vlaneseq
      %v2107 = vshrl.u32 %v2106, 7
      %v2108 = vsub.s32 %v2105, %v2107
      %v2109 = vrot.slane %v2081, %v2108
      %v2110 = vcombine.low %v2088, %v2095
      %v2111 = vcombine.low %v2102, %v2109
      %v2113 = vunpack.c.l.s4 1966171168
      %v2114 = vunpack.c.0.s8 %v2113
      %v2115 = vlaneseq
      %v2116 = vshrl.u32 %v2115, 7
      %v2117 = vsub.s32 %v2114, %v2116
      %v2118 = vrot.slane %v2110, %v2117
      %v2120 = vunpack.c.l.s4 1966171168
      %v2121 = vunpack.c.0.s8 %v2120
      %v2122 = vlaneseq
      %v2123 = vshrl.u32 %v2122, 7
      %v2124 = vsub.s32 %v2121, %v2123
      %v2125 = vrot.slane %v2111, %v2124
      %v2126 = vcombine.low %v2118, %v2125
      %v2127 = vcombine.low %v1506, %v1508
      %v2128 = vcombine.low %v1522, %v1546
      %v2129 = vcombine.low %v1560, %v1568
      %v2130 = vcombine.low %v1570, %v1553
      %v2132 = vunpack.c.l.s4 1966171168
      %v2133 = vunpack.c.0.s8 %v2132
      %v2134 = vlaneseq
      %v2135 = vshrl.u32 %v2134, 7
      %v2136 = vsub.s32 %v2133, %v2135
      %v2137 = vrot.slane %v2127, %v2136
      %v2139 = vunpack.c.l.s4 1966171168
      %v2140 = vunpack.c.0.s8 %v2139
      %v2141 = vlaneseq
      %v2142 = vshrl.u32 %v2141, 7
      %v2143 = vsub.s32 %v2140, %v2142
      %v2144 = vrot.slane %v2128, %v2143
      %v2146 = vunpack.c.l.s4 1966171168
      %v2147 = vunpack.c.0.s8 %v2146
      %v2148 = vlaneseq
      %v2149 = vshrl.u32 %v2148, 7
      %v2150 = vsub.s32 %v2147, %v2149
      %v2151 = vrot.slane %v2129, %v2150
      %v2153 = vunpack.c.l.s4 1966171168
      %v2154 = vunpack.c.0.s8 %v2153
      %v2155 = vlaneseq
      %v2156 = vshrl.u32 %v2155, 7
      %v2157 = vsub.s32 %v2154, %v2156
      %v2158 = vrot.slane %v2130, %v2157
      %v2159 = vcombine.low %v2137, %v2144
      %v2160 = vcombine.low %v2151, %v2158
      %v2162 = vunpack.c.l.s4 1966171168
      %v2163 = vunpack.c.0.s8 %v2162
      %v2164 = vlaneseq
      %v2165 = vshrl.u32 %v2164, 7
      %v2166 = vsub.s32 %v2163, %v2165
      %v2167 = vrot.slane %v2159, %v2166
      %v2169 = vunpack.c.l.s4 1966171168
      %v2170 = vunpack.c.0.s8 %v2169
      %v2171 = vlaneseq
      %v2172 = vshrl.u32 %v2171, 7
      %v2173 = vsub.s32 %v2170, %v2172
      %v2174 = vrot.slane %v2160, %v2173
      %v2175 = vcombine.low %v2167, %v2174
      %v2176 = vcombine.low %v1567, %v1569
      %v2177 = vcombine.low %v1571, %v1585
      %v2178 = vcombine.low %v1609, %v1623
      %v2179 = vcombine.low %v1631, %v1633
      %v2181 = vunpack.c.l.s4 1966171168
      %v2182 = vunpack.c.0.s8 %v2181
      %v2183 = vlaneseq
      %v2184 = vshrl.u32 %v2183, 7
      %v2185 = vsub.s32 %v2182, %v2184
      %v2186 = vrot.slane %v2176, %v2185
      %v2188 = vunpack.c.l.s4 1966171168
      %v2189 = vunpack.c.0.s8 %v2188
      %v2190 = vlaneseq
      %v2191 = vshrl.u32 %v2190, 7
      %v2192 = vsub.s32 %v2189, %v2191
      %v2193 = vrot.slane %v2177, %v2192
      %v2195 = vunpack.c.l.s4 1966171168
      %v2196 = vunpack.c.0.s8 %v2195
      %v2197 = vlaneseq
      %v2198 = vshrl.u32 %v2197, 7
      %v2199 = vsub.s32 %v2196, %v2198
      %v2200 = vrot.slane %v2178, %v2199
      %v2202 = vunpack.c.l.s4 1966171168
      %v2203 = vunpack.c.0.s8 %v2202
      %v2204 = vlaneseq
      %v2205 = vshrl.u32 %v2204, 7
      %v2206 = vsub.s32 %v2203, %v2205
      %v2207 = vrot.slane %v2179, %v2206
      %v2208 = vcombine.low %v2186, %v2193
      %v2209 = vcombine.low %v2200, %v2207
      %v2211 = vunpack.c.l.s4 1966171168
      %v2212 = vunpack.c.0.s8 %v2211
      %v2213 = vlaneseq
      %v2214 = vshrl.u32 %v2213, 7
      %v2215 = vsub.s32 %v2212, %v2214
      %v2216 = vrot.slane %v2208, %v2215
      %v2218 = vunpack.c.l.s4 1966171168
      %v2219 = vunpack.c.0.s8 %v2218
      %v2220 = vlaneseq
      %v2221 = vshrl.u32 %v2220, 7
      %v2222 = vsub.s32 %v2219, %v2221
      %v2223 = vrot.slane %v2209, %v2222
      %v2224 = vcombine.low %v2216, %v2223
      %v2225 = vcombine.low %v1616, %v1630
      %v2226 = vcombine.low %v1632, %v1634
      %v2227 = vcombine.low %v1648, %v1672
      %v2228 = vcombine.low %v1686, %v1694
      %v2230 = vunpack.c.l.s4 1966171168
      %v2231 = vunpack.c.0.s8 %v2230
      %v2232 = vlaneseq
      %v2233 = vshrl.u32 %v2232, 7
      %v2234 = vsub.s32 %v2231, %v2233
      %v2235 = vrot.slane %v2225, %v2234
      %v2237 = vunpack.c.l.s4 1966171168
      %v2238 = vunpack.c.0.s8 %v2237
      %v2239 = vlaneseq
      %v2240 = vshrl.u32 %v2239, 7
      %v2241 = vsub.s32 %v2238, %v2240
      %v2242 = vrot.slane %v2226, %v2241
      %v2244 = vunpack.c.l.s4 1966171168
      %v2245 = vunpack.c.0.s8 %v2244
      %v2246 = vlaneseq
      %v2247 = vshrl.u32 %v2246, 7
      %v2248 = vsub.s32 %v2245, %v2247
      %v2249 = vrot.slane %v2227, %v2248
      %v2251 = vunpack.c.l.s4 1966171168
      %v2252 = vunpack.c.0.s8 %v2251
      %v2253 = vlaneseq
      %v2254 = vshrl.u32 %v2253, 7
      %v2255 = vsub.s32 %v2252, %v2254
      %v2256 = vrot.slane %v2228, %v2255
      %v2257 = vcombine.low %v2235, %v2242
      %v2258 = vcombine.low %v2249, %v2256
      %v2260 = vunpack.c.l.s4 1966171168
      %v2261 = vunpack.c.0.s8 %v2260
      %v2262 = vlaneseq
      %v2263 = vshrl.u32 %v2262, 7
      %v2264 = vsub.s32 %v2261, %v2263
      %v2265 = vrot.slane %v2257, %v2264
      %v2267 = vunpack.c.l.s4 1966171168
      %v2268 = vunpack.c.0.s8 %v2267
      %v2269 = vlaneseq
      %v2270 = vshrl.u32 %v2269, 7
      %v2271 = vsub.s32 %v2268, %v2270
      %v2272 = vrot.slane %v2258, %v2271
      %v2273 = vcombine.low %v2265, %v2272
      %v2274 = vcombine.low %v1696, %v1679
      %v2275 = vcombine.low %v1693, %v1695
      %v2276 = vcombine.low %v1697, %v1711
      %v2277 = vcombine.low %v1735, %v1749
      %v2279 = vunpack.c.l.s4 1966171168
      %v2280 = vunpack.c.0.s8 %v2279
      %v2281 = vlaneseq
      %v2282 = vshrl.u32 %v2281, 7
      %v2283 = vsub.s32 %v2280, %v2282
      %v2284 = vrot.slane %v2274, %v2283
      %v2286 = vunpack.c.l.s4 1966171168
      %v2287 = vunpack.c.0.s8 %v2286
      %v2288 = vlaneseq
      %v2289 = vshrl.u32 %v2288, 7
      %v2290 = vsub.s32 %v2287, %v2289
      %v2291 = vrot.slane %v2275, %v2290
      %v2293 = vunpack.c.l.s4 1966171168
      %v2294 = vunpack.c.0.s8 %v2293
      %v2295 = vlaneseq
      %v2296 = vshrl.u32 %v2295, 7
      %v2297 = vsub.s32 %v2294, %v2296
      %v2298 = vrot.slane %v2276, %v2297
      %v2300 = vunpack.c.l.s4 1966171168
      %v2301 = vunpack.c.0.s8 %v2300
      %v2302 = vlaneseq
      %v2303 = vshrl.u32 %v2302, 7
      %v2304 = vsub.s32 %v2301, %v2303
      %v2305 = vrot.slane %v2277, %v2304
      %v2306 = vcombine.low %v2284, %v2291
      %v2307 = vcombine.low %v2298, %v2305
      %v2309 = vunpack.c.l.s4 1966171168
      %v2310 = vunpack.c.0.s8 %v2309
      %v2311 = vlaneseq
      %v2312 = vshrl.u32 %v2311, 7
      %v2313 = vsub.s32 %v2310, %v2312
      %v2314 = vrot.slane %v2306, %v2313
      %v2316 = vunpack.c.l.s4 1966171168
      %v2317 = vunpack.c.0.s8 %v2316
      %v2318 = vlaneseq
      %v2319 = vshrl.u32 %v2318, 7
      %v2320 = vsub.s32 %v2317, %v2319
      %v2321 = vrot.slane %v2307, %v2320
      %v2322 = vcombine.low %v2314, %v2321
      %v2323 = vcombine.low %v1757, %v1759
      %v2324 = vcombine.low %v1742, %v1756
      %v2325 = vcombine.low %v1758, %v1760
      %v2326 = vcombine.low %v1774, %v1798
      %v2328 = vunpack.c.l.s4 1966171168
      %v2329 = vunpack.c.0.s8 %v2328
      %v2330 = vlaneseq
      %v2331 = vshrl.u32 %v2330, 7
      %v2332 = vsub.s32 %v2329, %v2331
      %v2333 = vrot.slane %v2323, %v2332
      %v2335 = vunpack.c.l.s4 1966171168
      %v2336 = vunpack.c.0.s8 %v2335
      %v2337 = vlaneseq
      %v2338 = vshrl.u32 %v2337, 7
      %v2339 = vsub.s32 %v2336, %v2338
      %v2340 = vrot.slane %v2324, %v2339
      %v2342 = vunpack.c.l.s4 1966171168
      %v2343 = vunpack.c.0.s8 %v2342
      %v2344 = vlaneseq
      %v2345 = vshrl.u32 %v2344, 7
      %v2346 = vsub.s32 %v2343, %v2345
      %v2347 = vrot.slane %v2325, %v2346
      %v2349 = vunpack.c.l.s4 1966171168
      %v2350 = vunpack.c.0.s8 %v2349
      %v2351 = vlaneseq
      %v2352 = vshrl.u32 %v2351, 7
      %v2353 = vsub.s32 %v2350, %v2352
      %v2354 = vrot.slane %v2326, %v2353
      %v2355 = vcombine.low %v2333, %v2340
      %v2356 = vcombine.low %v2347, %v2354
      %v2358 = vunpack.c.l.s4 1966171168
      %v2359 = vunpack.c.0.s8 %v2358
      %v2360 = vlaneseq
      %v2361 = vshrl.u32 %v2360, 7
      %v2362 = vsub.s32 %v2359, %v2361
      %v2363 = vrot.slane %v2355, %v2362
      %v2365 = vunpack.c.l.s4 1966171168
      %v2366 = vunpack.c.0.s8 %v2365
      %v2367 = vlaneseq
      %v2368 = vshrl.u32 %v2367, 7
      %v2369 = vsub.s32 %v2366, %v2368
      %v2370 = vrot.slane %v2356, %v2369
      %v2371 = vcombine.low %v2363, %v2370
      %v2372 = vcombine.low %v1812, %v1820
      %v2373 = vcombine.low %v1822, %v1805
      %v2374 = vcombine.low %v1819, %v1821
      %v2375 = vcombine.low %v1823, %v1837
      %v2377 = vunpack.c.l.s4 1966171168
      %v2378 = vunpack.c.0.s8 %v2377
      %v2379 = vlaneseq
      %v2380 = vshrl.u32 %v2379, 7
      %v2381 = vsub.s32 %v2378, %v2380
      %v2382 = vrot.slane %v2372, %v2381
      %v2384 = vunpack.c.l.s4 1966171168
      %v2385 = vunpack.c.0.s8 %v2384
      %v2386 = vlaneseq
      %v2387 = vshrl.u32 %v2386, 7
      %v2388 = vsub.s32 %v2385, %v2387
      %v2389 = vrot.slane %v2373, %v2388
      %v2391 = vunpack.c.l.s4 1966171168
      %v2392 = vunpack.c.0.s8 %v2391
      %v2393 = vlaneseq
      %v2394 = vshrl.u32 %v2393, 7
      %v2395 = vsub.s32 %v2392, %v2394
      %v2396 = vrot.slane %v2374, %v2395
      %v2398 = vunpack.c.l.s4 1966171168
      %v2399 = vunpack.c.0.s8 %v2398
      %v2400 = vlaneseq
      %v2401 = vshrl.u32 %v2400, 7
      %v2402 = vsub.s32 %v2399, %v2401
      %v2403 = vrot.slane %v2375, %v2402
      %v2404 = vcombine.low %v2382, %v2389
      %v2405 = vcombine.low %v2396, %v2403
      %v2407 = vunpack.c.l.s4 1966171168
      %v2408 = vunpack.c.0.s8 %v2407
      %v2409 = vlaneseq
      %v2410 = vshrl.u32 %v2409, 7
      %v2411 = vsub.s32 %v2408, %v2410
      %v2412 = vrot.slane %v2404, %v2411
      %v2414 = vunpack.c.l.s4 1966171168
      %v2415 = vunpack.c.0.s8 %v2414
      %v2416 = vlaneseq
      %v2417 = vshrl.u32 %v2416, 7
      %v2418 = vsub.s32 %v2415, %v2417
      %v2419 = vrot.slane %v2405, %v2418
      %v2420 = vcombine.low %v2412, %v2419
      %v2421 = vcombine.low %v1861, %v1875
      %v2422 = vcombine.low %v1883, %v1885
      %v2423 = vcombine.low %v1868, %v1882
      %v2424 = vcombine.low %v1884, %v1886
      %v2426 = vunpack.c.l.s4 1966171168
      %v2427 = vunpack.c.0.s8 %v2426
      %v2428 = vlaneseq
      %v2429 = vshrl.u32 %v2428, 7
      %v2430 = vsub.s32 %v2427, %v2429
      %v2431 = vrot.slane %v2421, %v2430
      %v2433 = vunpack.c.l.s4 1966171168
      %v2434 = vunpack.c.0.s8 %v2433
      %v2435 = vlaneseq
      %v2436 = vshrl.u32 %v2435, 7
      %v2437 = vsub.s32 %v2434, %v2436
      %v2438 = vrot.slane %v2422, %v2437
      %v2440 = vunpack.c.l.s4 1966171168
      %v2441 = vunpack.c.0.s8 %v2440
      %v2442 = vlaneseq
      %v2443 = vshrl.u32 %v2442, 7
      %v2444 = vsub.s32 %v2441, %v2443
      %v2445 = vrot.slane %v2423, %v2444
      %v2447 = vunpack.c.l.s4 1966171168
      %v2448 = vunpack.c.0.s8 %v2447
      %v2449 = vlaneseq
      %v2450 = vshrl.u32 %v2449, 7
      %v2451 = vsub.s32 %v2448, %v2450
      %v2452 = vrot.slane %v2424, %v2451
      %v2453 = vcombine.low %v2431, %v2438
      %v2454 = vcombine.low %v2445, %v2452
      %v2456 = vunpack.c.l.s4 1966171168
      %v2457 = vunpack.c.0.s8 %v2456
      %v2458 = vlaneseq
      %v2459 = vshrl.u32 %v2458, 7
      %v2460 = vsub.s32 %v2457, %v2459
      %v2461 = vrot.slane %v2453, %v2460
      %v2463 = vunpack.c.l.s4 1966171168
      %v2464 = vunpack.c.0.s8 %v2463
      %v2465 = vlaneseq
      %v2466 = vshrl.u32 %v2465, 7
      %v2467 = vsub.s32 %v2464, %v2466
      %v2468 = vrot.slane %v2454, %v2467
      %v2469 = vcombine.low %v2461, %v2468
      %v2470 = vcombine.low %v1900, %v1924
      %v2471 = vcombine.low %v1938, %v1946
      %v2472 = vcombine.low %v1948, %v1931
      %v2473 = vcombine.low %v1945, %v1947
      %v2475 = vunpack.c.l.s4 1966171168
      %v2476 = vunpack.c.0.s8 %v2475
      %v2477 = vlaneseq
      %v2478 = vshrl.u32 %v2477, 7
      %v2479 = vsub.s32 %v2476, %v2478
      %v2480 = vrot.slane %v2470, %v2479
      %v2482 = vunpack.c.l.s4 1966171168
      %v2483 = vunpack.c.0.s8 %v2482
      %v2484 = vlaneseq
      %v2485 = vshrl.u32 %v2484, 7
      %v2486 = vsub.s32 %v2483, %v2485
      %v2487 = vrot.slane %v2471, %v2486
      %v2489 = vunpack.c.l.s4 1966171168
      %v2490 = vunpack.c.0.s8 %v2489
      %v2491 = vlaneseq
      %v2492 = vshrl.u32 %v2491, 7
      %v2493 = vsub.s32 %v2490, %v2492
      %v2494 = vrot.slane %v2472, %v2493
      %v2496 = vunpack.c.l.s4 1966171168
      %v2497 = vunpack.c.0.s8 %v2496
      %v2498 = vlaneseq
      %v2499 = vshrl.u32 %v2498, 7
      %v2500 = vsub.s32 %v2497, %v2499
      %v2501 = vrot.slane %v2473, %v2500
      %v2502 = vcombine.low %v2480, %v2487
      %v2503 = vcombine.low %v2494, %v2501
      %v2505 = vunpack.c.l.s4 1966171168
      %v2506 = vunpack.c.0.s8 %v2505
      %v2507 = vlaneseq
      %v2508 = vshrl.u32 %v2507, 7
      %v2509 = vsub.s32 %v2506, %v2508
      %v2510 = vrot.slane %v2502, %v2509
      %v2512 = vunpack.c.l.s4 1966171168
      %v2513 = vunpack.c.0.s8 %v2512
      %v2514 = vlaneseq
      %v2515 = vshrl.u32 %v2514, 7
      %v2516 = vsub.s32 %v2513, %v2515
      %v2517 = vrot.slane %v2503, %v2516
      %v2518 = vcombine.low %v2510, %v2517
      %v2519 = vcombine.low %v1949, %v1963
      %v2521 = vunpack.c.l.s4 1966171168
      %v2522 = vunpack.c.0.s8 %v2521
      %v2523 = vlaneseq
      %v2524 = vshrl.u32 %v2523, 7
      %v2525 = vsub.s32 %v2522, %v2524
      %v2526 = vrot.slane %v2519, %v2525
      %v2528 = vunpack.c.l.s4 1966171168
      %v2529 = vunpack.c.0.s8 %v2528
      %v2530 = vlaneseq
      %v2531 = vshrl.u32 %v2530, 7
      %v2532 = vsub.s32 %v2529, %v2531
      %v2533 = vrot.slane %v2526, %v2532
      %v2543 = vunpack.c.l.b16 %v1964
      %v2544 = vunpack.c.l.b16 %v1965
      %v2545 = vunpack.c.l.b16 %v1966
      %v2546 = vunpack.c.l.b16 %v1967
      %v2547 = vunpack.c.l.b16 %v1968
      %v2548 = vunpack.c.l.b16 %v1969
      %v2549 = vunpack.c.l.b16 %v1970
      %v2550 = vunpack.c.l.b16 %v1971
      %v2551 = vunpack.c.l.b16 %v1972
      %v2552 = vpack.c.b16 %v2544, %v2543
      %v2553 = vpack.c.b16 %v2546, %v2545
      %v2554 = vpack.c.b16 %v2548, %v2547
      %v2555 = vpack.c.b16 %v2550, %v2549
      %v2556 = vpack.c.b16 %v2551, %v2551
      %vm2561 = vcmask 588800
      %v2563 = vsel %vm2561, %v2028, 0
      %v2566 = vsel %vm2561, %v2077, 0
      %v2569 = vsel %vm2561, %v2126, 0
      %v2572 = vsel %vm2561, %v2175, 0
      %v2575 = vsel %vm2561, %v2224, 0
      %v2578 = vsel %vm2561, %v2273, 0
      %v2581 = vsel %vm2561, %v2322, 0
      %v2584 = vsel %vm2561, %v2371, 0
      %v2587 = vsel %vm2561, %v2420, 0
      %v2590 = vsel %vm2561, %v2469, 0
      %v2593 = vsel %vm2561, %v2518, 0
      %v2596 = vsel %vm2561, %v2533, 0
      %vm2598 = vcmask 1043456
      %v2600 = vsel %vm2598, %v2556, 0
      %2602 = vmatprep.subr.bf16.mxu0 0
      %2603 = vmatpush1.bf16.msra.mxu0 %v2552
      %2604 = vmatprep.subr.bf16.mxu0 0
      %2605 = vmatpush1.bf16.msra.mxu0 %v2553
      %2606 = vmatprep.subr.bf16.mxu0 0
      %2607 = vmatpush1.bf16.msra.mxu0 %v2554
      %2608 = vmatprep.subr.bf16.mxu0 0
      %2609 = vmatpush1.bf16.msra.mxu0 %v2555
      %2610 = vmatprep.subr.bf16.mxu0 0
      %2611 = vmatpush1.bf16.msra.mxu0 %v2600
      %2612 = vmatprep.subr.bf16.mxu0 0
      %2613 = vmatpush1.bf16.msra.mxu0 0
      %2614 = vmatprep.subr.bf16.mxu0 0
      %2615 = vmatpush1.bf16.msra.mxu0 0
      %2616 = vmatprep.subr.bf16.mxu0 0
      %2617 = vmatpush1.bf16.msra.mxu0 0
      %2618 = vmatprep.subr.bf16.mxu0 0
      %2619 = vmatpush1.bf16.msra.mxu0 0
      %2620 = vmatprep.subr.bf16.mxu0 0
      %2621 = vmatpush1.bf16.msra.mxu0 0
      %2622 = vmatprep.subr.bf16.mxu0 0
      %2623 = vmatpush1.bf16.msra.mxu0 0
      %2624 = vmatprep.subr.bf16.mxu0 0
      %2625 = vmatpush1.bf16.msra.mxu0 0
      %2626 = vmatprep.subr.bf16.mxu0 0
      %2627 = vmatpush1.bf16.msra.mxu0 0
      %2628 = vmatprep.subr.bf16.mxu0 0
      %2629 = vmatpush1.bf16.msra.mxu0 0
      %2630 = vmatprep.subr.bf16.mxu0 0
      %2631 = vmatpush1.bf16.msra.mxu0 0
      %2632 = vmatprep.subr.bf16.mxu0 0
      %2633 = vmatpush1.bf16.msra.mxu0 0
      %2634 = vmatprep.mubr.bf16.mxu0 0
      %2635 = vmatmul.mubr.bf16.gmra.mrb[0].mxu0 %v2563
      %v2636 = vpop.f32.mrb[0].mxu0
      %v2637 = vadd.f32 %v1978, %v2636
      %v2638 = vpop.f32.mrb[0].mxu0
      %v2639 = vpop.f32.mrb[0].mxu0
      %v2640 = vadd.f32 %v1978, %v2639
      %v2641 = vpop.f32.mrb[0].mxu0
      %2642 = vmatprep.mubr.bf16.mxu0 0
      %2643 = vmatmul.mubr.bf16.gmra.mrb[0].mxu0 %v2566
      %v2644 = vpop.f32.mrb[0].mxu0
      %v2645 = vadd.f32 %v1978, %v2644
      %v2646 = vpop.f32.mrb[0].mxu0
      %v2647 = vpop.f32.mrb[0].mxu0
      %v2648 = vadd.f32 %v1978, %v2647
      %v2649 = vpop.f32.mrb[0].mxu0
      %2650 = vmatprep.mubr.bf16.mxu0 0
      %2651 = vmatmul.mubr.bf16.gmra.mrb[0].mxu0 %v2569
      %v2652 = vpop.f32.mrb[0].mxu0
      %v2653 = vadd.f32 %v1978, %v2652
      %v2654 = vpop.f32.mrb[0].mxu0
      %v2655 = vpop.f32.mrb[0].mxu0
      %v2656 = vadd.f32 %v1978, %v2655
      %v2657 = vpop.f32.mrb[0].mxu0
      %2658 = vmatprep.mubr.bf16.mxu0 0
      %2659 = vmatmul.mubr.bf16.gmra.mrb[0].mxu0 %v2572
      %v2660 = vpop.f32.mrb[0].mxu0
      %v2661 = vadd.f32 %v1978, %v2660
      %v2662 = vpop.f32.mrb[0].mxu0
      %v2663 = vpop.f32.mrb[0].mxu0
      %v2664 = vadd.f32 %v1978, %v2663
      %v2665 = vpop.f32.mrb[0].mxu0
      %2666 = vmatprep.mubr.bf16.mxu0 0
      %2667 = vmatmul.mubr.bf16.gmra.mrb[0].mxu0 %v2575
      %v2668 = vpop.f32.mrb[0].mxu0
      %v2669 = vadd.f32 %v1978, %v2668
      %v2670 = vpop.f32.mrb[0].mxu0
      %v2671 = vpop.f32.mrb[0].mxu0
      %v2672 = vadd.f32 %v1978, %v2671
      %v2673 = vpop.f32.mrb[0].mxu0
      %2674 = vmatprep.mubr.bf16.mxu0 0
      %2675 = vmatmul.mubr.bf16.gmra.mrb[0].mxu0 %v2578
      %v2676 = vpop.f32.mrb[0].mxu0
      %v2677 = vadd.f32 %v1978, %v2676
      %v2678 = vpop.f32.mrb[0].mxu0
      %v2679 = vpop.f32.mrb[0].mxu0
      %v2680 = vadd.f32 %v1978, %v2679
      %v2681 = vpop.f32.mrb[0].mxu0
      %2682 = vmatprep.mubr.bf16.mxu0 0
      %2683 = vmatmul.mubr.bf16.gmra.mrb[0].mxu0 %v2581
      %v2684 = vpop.f32.mrb[0].mxu0
      %v2685 = vadd.f32 %v1978, %v2684
      %v2686 = vpop.f32.mrb[0].mxu0
      %v2687 = vpop.f32.mrb[0].mxu0
      %v2688 = vadd.f32 %v1978, %v2687
      %v2689 = vpop.f32.mrb[0].mxu0
      %2690 = vmatprep.mubr.bf16.mxu0 0
      %2691 = vmatmul.mubr.bf16.gmra.mrb[0].mxu0 %v2584
      %v2692 = vpop.f32.mrb[0].mxu0
      %v2693 = vadd.f32 %v1978, %v2692
      %v2694 = vpop.f32.mrb[0].mxu0
      %v2695 = vpop.f32.mrb[0].mxu0
      %v2696 = vadd.f32 %v1978, %v2695
      %v2697 = vpop.f32.mrb[0].mxu0
      %2698 = vmatprep.mubr.bf16.mxu0 0
      %2699 = vmatmul.mubr.bf16.gmra.mrb[0].mxu0 %v2587
      %v2700 = vpop.f32.mrb[0].mxu0
      %v2701 = vadd.f32 %v1978, %v2700
      %v2702 = vpop.f32.mrb[0].mxu0
      %v2703 = vpop.f32.mrb[0].mxu0
      %v2704 = vadd.f32 %v1978, %v2703
      %v2705 = vpop.f32.mrb[0].mxu0
      %2706 = vmatprep.mubr.bf16.mxu0 0
      %2707 = vmatmul.mubr.bf16.gmra.mrb[0].mxu0 %v2590
      %v2708 = vpop.f32.mrb[0].mxu0
      %v2709 = vadd.f32 %v1978, %v2708
      %v2710 = vpop.f32.mrb[0].mxu0
      %v2711 = vpop.f32.mrb[0].mxu0
      %v2712 = vadd.f32 %v1978, %v2711
      %v2713 = vpop.f32.mrb[0].mxu0
      %2714 = vmatprep.mubr.bf16.mxu0 0
      %2715 = vmatmul.mubr.bf16.gmra.mrb[0].mxu0 %v2593
      %v2716 = vpop.f32.mrb[0].mxu0
      %v2717 = vadd.f32 %v1978, %v2716
      %v2718 = vpop.f32.mrb[0].mxu0
      %v2719 = vpop.f32.mrb[0].mxu0
      %v2720 = vadd.f32 %v1978, %v2719
      %v2721 = vpop.f32.mrb[0].mxu0
      %2722 = vmatprep.mubr.bf16.mxu0 0
      %2723 = vmatmul.mubr.bf16.gmra.mrb[0].mxu0 %v2596
      %v2724 = vpop.f32.mrb[0].mxu0
      %v2725 = vadd.f32 %v1978, %v2724
      %v2726 = vpop.f32.mrb[0].mxu0
      %v2727 = vpop.f32.mrb[0].mxu0
      %v2728 = vpop.f32.mrb[0].mxu0
      %2729 = vdwg.mxu0
      %v2730 = vmax.f32 %v2637, 0.0
      %v2731 = vmax.f32 %v2640, 0.0
      %v2732 = vmax.f32 %v2645, 0.0
      %v2733 = vmax.f32 %v2648, 0.0
      %v2734 = vmax.f32 %v2653, 0.0
      %v2735 = vmax.f32 %v2656, 0.0
      %v2736 = vmax.f32 %v2661, 0.0
      %v2737 = vmax.f32 %v2664, 0.0
      %v2738 = vmax.f32 %v2669, 0.0
      %v2739 = vmax.f32 %v2672, 0.0
      %v2740 = vmax.f32 %v2677, 0.0
      %v2741 = vmax.f32 %v2680, 0.0
      %v2742 = vmax.f32 %v2685, 0.0
      %v2743 = vmax.f32 %v2688, 0.0
      %v2744 = vmax.f32 %v2693, 0.0
      %v2745 = vmax.f32 %v2696, 0.0
      %v2746 = vmax.f32 %v2701, 0.0
      %v2747 = vmax.f32 %v2704, 0.0
      %v2748 = vmax.f32 %v2709, 0.0
      %v2749 = vmax.f32 %v2712, 0.0
      %v2750 = vmax.f32 %v2717, 0.0
      %v2751 = vmax.f32 %v2720, 0.0
      %v2752 = vmax.f32 %v2725, 0.0
      %v2776 = vcombine.high %v2730, %v2730
      %v2778 = vunpack.c.l.s4 1983009808
      %v2779 = vunpack.c.0.s8 %v2778
      %v2780 = vlaneseq
      %v2781 = vshrl.u32 %v2780, 7
      %v2782 = vsub.s32 %v2779, %v2781
      %v2783 = vrot.slane %v2730, %v2782
      %v2785 = vunpack.c.l.s4 1983009808
      %v2786 = vunpack.c.0.s8 %v2785
      %v2787 = vlaneseq
      %v2788 = vshrl.u32 %v2787, 7
      %v2789 = vsub.s32 %v2786, %v2788
      %v2790 = vrot.slane %v2776, %v2789
      %v2791 = vcombine.high %v2783, %v2783
      %v2792 = vcombine.high %v2790, %v2790
      %v2793 = vcombine.high %v2731, %v2731
      %v2795 = vunpack.c.l.s4 1983009808
      %v2796 = vunpack.c.0.s8 %v2795
      %v2797 = vlaneseq
      %v2798 = vshrl.u32 %v2797, 7
      %v2799 = vsub.s32 %v2796, %v2798
      %v2800 = vrot.slane %v2731, %v2799
      %v2802 = vunpack.c.l.s4 1983009808
      %v2803 = vunpack.c.0.s8 %v2802
      %v2804 = vlaneseq
      %v2805 = vshrl.u32 %v2804, 7
      %v2806 = vsub.s32 %v2803, %v2805
      %v2807 = vrot.slane %v2793, %v2806
      %v2808 = vcombine.high %v2800, %v2800
      %v2809 = vcombine.high %v2807, %v2807
      %v2810 = vcombine.high %v2732, %v2732
      %v2812 = vunpack.c.l.s4 1983009808
      %v2813 = vunpack.c.0.s8 %v2812
      %v2814 = vlaneseq
      %v2815 = vshrl.u32 %v2814, 7
      %v2816 = vsub.s32 %v2813, %v2815
      %v2817 = vrot.slane %v2732, %v2816
      %v2819 = vunpack.c.l.s4 1983009808
      %v2820 = vunpack.c.0.s8 %v2819
      %v2821 = vlaneseq
      %v2822 = vshrl.u32 %v2821, 7
      %v2823 = vsub.s32 %v2820, %v2822
      %v2824 = vrot.slane %v2810, %v2823
      %v2825 = vcombine.high %v2817, %v2817
      %v2826 = vcombine.high %v2824, %v2824
      %v2827 = vcombine.high %v2733, %v2733
      %v2829 = vunpack.c.l.s4 1983009808
      %v2830 = vunpack.c.0.s8 %v2829
      %v2831 = vlaneseq
      %v2832 = vshrl.u32 %v2831, 7
      %v2833 = vsub.s32 %v2830, %v2832
      %v2834 = vrot.slane %v2733, %v2833
      %v2836 = vunpack.c.l.s4 1983009808
      %v2837 = vunpack.c.0.s8 %v2836
      %v2838 = vlaneseq
      %v2839 = vshrl.u32 %v2838, 7
      %v2840 = vsub.s32 %v2837, %v2839
      %v2841 = vrot.slane %v2827, %v2840
      %v2842 = vcombine.high %v2834, %v2834
      %v2843 = vcombine.high %v2841, %v2841
      %v2844 = vcombine.high %v2734, %v2734
      %v2846 = vunpack.c.l.s4 1983009808
      %v2847 = vunpack.c.0.s8 %v2846
      %v2848 = vlaneseq
      %v2849 = vshrl.u32 %v2848, 7
      %v2850 = vsub.s32 %v2847, %v2849
      %v2851 = vrot.slane %v2734, %v2850
      %v2853 = vunpack.c.l.s4 1983009808
      %v2854 = vunpack.c.0.s8 %v2853
      %v2855 = vlaneseq
      %v2856 = vshrl.u32 %v2855, 7
      %v2857 = vsub.s32 %v2854, %v2856
      %v2858 = vrot.slane %v2844, %v2857
      %v2859 = vcombine.high %v2851, %v2851
      %v2860 = vcombine.high %v2858, %v2858
      %v2861 = vcombine.high %v2735, %v2735
      %v2863 = vunpack.c.l.s4 1983009808
      %v2864 = vunpack.c.0.s8 %v2863
      %v2865 = vlaneseq
      %v2866 = vshrl.u32 %v2865, 7
      %v2867 = vsub.s32 %v2864, %v2866
      %v2868 = vrot.slane %v2735, %v2867
      %v2870 = vunpack.c.l.s4 1983009808
      %v2871 = vunpack.c.0.s8 %v2870
      %v2872 = vlaneseq
      %v2873 = vshrl.u32 %v2872, 7
      %v2874 = vsub.s32 %v2871, %v2873
      %v2875 = vrot.slane %v2861, %v2874
      %v2876 = vcombine.high %v2868, %v2868
      %v2877 = vcombine.high %v2875, %v2875
      %v2878 = vcombine.high %v2736, %v2736
      %v2880 = vunpack.c.l.s4 1983009808
      %v2881 = vunpack.c.0.s8 %v2880
      %v2882 = vlaneseq
      %v2883 = vshrl.u32 %v2882, 7
      %v2884 = vsub.s32 %v2881, %v2883
      %v2885 = vrot.slane %v2736, %v2884
      %v2887 = vunpack.c.l.s4 1983009808
      %v2888 = vunpack.c.0.s8 %v2887
      %v2889 = vlaneseq
      %v2890 = vshrl.u32 %v2889, 7
      %v2891 = vsub.s32 %v2888, %v2890
      %v2892 = vrot.slane %v2878, %v2891
      %v2893 = vcombine.high %v2885, %v2885
      %v2894 = vcombine.high %v2892, %v2892
      %v2895 = vcombine.high %v2737, %v2737
      %v2897 = vunpack.c.l.s4 1983009808
      %v2898 = vunpack.c.0.s8 %v2897
      %v2899 = vlaneseq
      %v2900 = vshrl.u32 %v2899, 7
      %v2901 = vsub.s32 %v2898, %v2900
      %v2902 = vrot.slane %v2737, %v2901
      %v2904 = vunpack.c.l.s4 1983009808
      %v2905 = vunpack.c.0.s8 %v2904
      %v2906 = vlaneseq
      %v2907 = vshrl.u32 %v2906, 7
      %v2908 = vsub.s32 %v2905, %v2907
      %v2909 = vrot.slane %v2895, %v2908
      %v2910 = vcombine.high %v2902, %v2902
      %v2911 = vcombine.high %v2909, %v2909
      %v2912 = vcombine.high %v2738, %v2738
      %v2914 = vunpack.c.l.s4 1983009808
      %v2915 = vunpack.c.0.s8 %v2914
      %v2916 = vlaneseq
      %v2917 = vshrl.u32 %v2916, 7
      %v2918 = vsub.s32 %v2915, %v2917
      %v2919 = vrot.slane %v2738, %v2918
      %v2921 = vunpack.c.l.s4 1983009808
      %v2922 = vunpack.c.0.s8 %v2921
      %v2923 = vlaneseq
      %v2924 = vshrl.u32 %v2923, 7
      %v2925 = vsub.s32 %v2922, %v2924
      %v2926 = vrot.slane %v2912, %v2925
      %v2927 = vcombine.high %v2919, %v2919
      %v2928 = vcombine.high %v2926, %v2926
      %v2929 = vcombine.high %v2739, %v2739
      %v2931 = vunpack.c.l.s4 1983009808
      %v2932 = vunpack.c.0.s8 %v2931
      %v2933 = vlaneseq
      %v2934 = vshrl.u32 %v2933, 7
      %v2935 = vsub.s32 %v2932, %v2934
      %v2936 = vrot.slane %v2739, %v2935
      %v2938 = vunpack.c.l.s4 1983009808
      %v2939 = vunpack.c.0.s8 %v2938
      %v2940 = vlaneseq
      %v2941 = vshrl.u32 %v2940, 7
      %v2942 = vsub.s32 %v2939, %v2941
      %v2943 = vrot.slane %v2929, %v2942
      %v2944 = vcombine.high %v2936, %v2936
      %v2945 = vcombine.high %v2943, %v2943
      %v2946 = vcombine.high %v2740, %v2740
      %v2948 = vunpack.c.l.s4 1983009808
      %v2949 = vunpack.c.0.s8 %v2948
      %v2950 = vlaneseq
      %v2951 = vshrl.u32 %v2950, 7
      %v2952 = vsub.s32 %v2949, %v2951
      %v2953 = vrot.slane %v2740, %v2952
      %v2955 = vunpack.c.l.s4 1983009808
      %v2956 = vunpack.c.0.s8 %v2955
      %v2957 = vlaneseq
      %v2958 = vshrl.u32 %v2957, 7
      %v2959 = vsub.s32 %v2956, %v2958
      %v2960 = vrot.slane %v2946, %v2959
      %v2961 = vcombine.high %v2953, %v2953
      %v2962 = vcombine.high %v2960, %v2960
      %v2963 = vcombine.high %v2741, %v2741
      %v2965 = vunpack.c.l.s4 1983009808
      %v2966 = vunpack.c.0.s8 %v2965
      %v2967 = vlaneseq
      %v2968 = vshrl.u32 %v2967, 7
      %v2969 = vsub.s32 %v2966, %v2968
      %v2970 = vrot.slane %v2741, %v2969
      %v2972 = vunpack.c.l.s4 1983009808
      %v2973 = vunpack.c.0.s8 %v2972
      %v2974 = vlaneseq
      %v2975 = vshrl.u32 %v2974, 7
      %v2976 = vsub.s32 %v2973, %v2975
      %v2977 = vrot.slane %v2963, %v2976
      %v2978 = vcombine.high %v2970, %v2970
      %v2979 = vcombine.high %v2977, %v2977
      %v2980 = vcombine.high %v2742, %v2742
      %v2982 = vunpack.c.l.s4 1983009808
      %v2983 = vunpack.c.0.s8 %v2982
      %v2984 = vlaneseq
      %v2985 = vshrl.u32 %v2984, 7
      %v2986 = vsub.s32 %v2983, %v2985
      %v2987 = vrot.slane %v2742, %v2986
      %v2989 = vunpack.c.l.s4 1983009808
      %v2990 = vunpack.c.0.s8 %v2989
      %v2991 = vlaneseq
      %v2992 = vshrl.u32 %v2991, 7
      %v2993 = vsub.s32 %v2990, %v2992
      %v2994 = vrot.slane %v2980, %v2993
      %v2995 = vcombine.high %v2987, %v2987
      %v2996 = vcombine.high %v2994, %v2994
      %v2997 = vcombine.high %v2743, %v2743
      %v2999 = vunpack.c.l.s4 1983009808
      %v3000 = vunpack.c.0.s8 %v2999
      %v3001 = vlaneseq
      %v3002 = vshrl.u32 %v3001, 7
      %v3003 = vsub.s32 %v3000, %v3002
      %v3004 = vrot.slane %v2743, %v3003
      %v3006 = vunpack.c.l.s4 1983009808
      %v3007 = vunpack.c.0.s8 %v3006
      %v3008 = vlaneseq
      %v3009 = vshrl.u32 %v3008, 7
      %v3010 = vsub.s32 %v3007, %v3009
      %v3011 = vrot.slane %v2997, %v3010
      %v3012 = vcombine.high %v3004, %v3004
      %v3013 = vcombine.high %v3011, %v3011
      %v3014 = vcombine.high %v2744, %v2744
      %v3016 = vunpack.c.l.s4 1983009808
      %v3017 = vunpack.c.0.s8 %v3016
      %v3018 = vlaneseq
      %v3019 = vshrl.u32 %v3018, 7
      %v3020 = vsub.s32 %v3017, %v3019
      %v3021 = vrot.slane %v2744, %v3020
      %v3023 = vunpack.c.l.s4 1983009808
      %v3024 = vunpack.c.0.s8 %v3023
      %v3025 = vlaneseq
      %v3026 = vshrl.u32 %v3025, 7
      %v3027 = vsub.s32 %v3024, %v3026
      %v3028 = vrot.slane %v3014, %v3027
      %v3029 = vcombine.high %v3021, %v3021
      %v3030 = vcombine.high %v3028, %v3028
      %v3031 = vcombine.high %v2745, %v2745
      %v3033 = vunpack.c.l.s4 1983009808
      %v3034 = vunpack.c.0.s8 %v3033
      %v3035 = vlaneseq
      %v3036 = vshrl.u32 %v3035, 7
      %v3037 = vsub.s32 %v3034, %v3036
      %v3038 = vrot.slane %v2745, %v3037
      %v3040 = vunpack.c.l.s4 1983009808
      %v3041 = vunpack.c.0.s8 %v3040
      %v3042 = vlaneseq
      %v3043 = vshrl.u32 %v3042, 7
      %v3044 = vsub.s32 %v3041, %v3043
      %v3045 = vrot.slane %v3031, %v3044
      %v3046 = vcombine.high %v3038, %v3038
      %v3047 = vcombine.high %v3045, %v3045
      %v3048 = vcombine.high %v2746, %v2746
      %v3050 = vunpack.c.l.s4 1983009808
      %v3051 = vunpack.c.0.s8 %v3050
      %v3052 = vlaneseq
      %v3053 = vshrl.u32 %v3052, 7
      %v3054 = vsub.s32 %v3051, %v3053
      %v3055 = vrot.slane %v2746, %v3054
      %v3057 = vunpack.c.l.s4 1983009808
      %v3058 = vunpack.c.0.s8 %v3057
      %v3059 = vlaneseq
      %v3060 = vshrl.u32 %v3059, 7
      %v3061 = vsub.s32 %v3058, %v3060
      %v3062 = vrot.slane %v3048, %v3061
      %v3063 = vcombine.high %v3055, %v3055
      %v3064 = vcombine.high %v3062, %v3062
      %v3065 = vcombine.high %v2747, %v2747
      %v3067 = vunpack.c.l.s4 1983009808
      %v3068 = vunpack.c.0.s8 %v3067
      %v3069 = vlaneseq
      %v3070 = vshrl.u32 %v3069, 7
      %v3071 = vsub.s32 %v3068, %v3070
      %v3072 = vrot.slane %v2747, %v3071
      %v3074 = vunpack.c.l.s4 1983009808
      %v3075 = vunpack.c.0.s8 %v3074
      %v3076 = vlaneseq
      %v3077 = vshrl.u32 %v3076, 7
      %v3078 = vsub.s32 %v3075, %v3077
      %v3079 = vrot.slane %v3065, %v3078
      %v3080 = vcombine.high %v3072, %v3072
      %v3081 = vcombine.high %v3079, %v3079
      %v3082 = vcombine.high %v2748, %v2748
      %v3084 = vunpack.c.l.s4 1983009808
      %v3085 = vunpack.c.0.s8 %v3084
      %v3086 = vlaneseq
      %v3087 = vshrl.u32 %v3086, 7
      %v3088 = vsub.s32 %v3085, %v3087
      %v3089 = vrot.slane %v2748, %v3088
      %v3091 = vunpack.c.l.s4 1983009808
      %v3092 = vunpack.c.0.s8 %v3091
      %v3093 = vlaneseq
      %v3094 = vshrl.u32 %v3093, 7
      %v3095 = vsub.s32 %v3092, %v3094
      %v3096 = vrot.slane %v3082, %v3095
      %v3097 = vcombine.high %v3089, %v3089
      %v3098 = vcombine.high %v3096, %v3096
      %v3099 = vcombine.high %v2749, %v2749
      %v3101 = vunpack.c.l.s4 1983009808
      %v3102 = vunpack.c.0.s8 %v3101
      %v3103 = vlaneseq
      %v3104 = vshrl.u32 %v3103, 7
      %v3105 = vsub.s32 %v3102, %v3104
      %v3106 = vrot.slane %v2749, %v3105
      %v3108 = vunpack.c.l.s4 1983009808
      %v3109 = vunpack.c.0.s8 %v3108
      %v3110 = vlaneseq
      %v3111 = vshrl.u32 %v3110, 7
      %v3112 = vsub.s32 %v3109, %v3111
      %v3113 = vrot.slane %v3099, %v3112
      %v3114 = vcombine.high %v3106, %v3106
      %v3115 = vcombine.high %v3113, %v3113
      %v3116 = vcombine.high %v2750, %v2750
      %v3118 = vunpack.c.l.s4 1983009808
      %v3119 = vunpack.c.0.s8 %v3118
      %v3120 = vlaneseq
      %v3121 = vshrl.u32 %v3120, 7
      %v3122 = vsub.s32 %v3119, %v3121
      %v3123 = vrot.slane %v2750, %v3122
      %v3125 = vunpack.c.l.s4 1983009808
      %v3126 = vunpack.c.0.s8 %v3125
      %v3127 = vlaneseq
      %v3128 = vshrl.u32 %v3127, 7
      %v3129 = vsub.s32 %v3126, %v3128
      %v3130 = vrot.slane %v3116, %v3129
      %v3131 = vcombine.high %v3123, %v3123
      %v3132 = vcombine.high %v3130, %v3130
      %v3133 = vcombine.high %v2751, %v2751
      %v3135 = vunpack.c.l.s4 1983009808
      %v3136 = vunpack.c.0.s8 %v3135
      %v3137 = vlaneseq
      %v3138 = vshrl.u32 %v3137, 7
      %v3139 = vsub.s32 %v3136, %v3138
      %v3140 = vrot.slane %v2751, %v3139
      %v3142 = vunpack.c.l.s4 1983009808
      %v3143 = vunpack.c.0.s8 %v3142
      %v3144 = vlaneseq
      %v3145 = vshrl.u32 %v3144, 7
      %v3146 = vsub.s32 %v3143, %v3145
      %v3147 = vrot.slane %v3133, %v3146
      %v3148 = vcombine.high %v3140, %v3140
      %v3149 = vcombine.high %v3147, %v3147
      %v3151 = vunpack.c.l.s4 1983009808
      %v3152 = vunpack.c.0.s8 %v3151
      %v3153 = vlaneseq
      %v3154 = vshrl.u32 %v3153, 7
      %v3155 = vsub.s32 %v3152, %v3154
      %v3156 = vrot.slane %v2752, %v3155
      %v3157 = vcombine.high %v3156, %v3156
      %s3158 = ssub.s32 %s312, 1
      %v3159 = vstv %s3158
      %v3160 = vadd.s32 %v3159, 1
      %v3161 = vadd.s32 %v3159, 2
      %v3162 = vadd.s32 %v3159, 3
      %v3163 = vadd.s32 %v3159, 4
      %v3164 = vadd.s32 %v3159, 5
      %v3165 = vadd.s32 %v3159, 6
      %v3166 = vadd.s32 %v3159, 7
      %v3167 = vadd.s32 %v3159, 8
      %v3168 = vadd.s32 %v3159, 9
      %v3169 = vlaneseq
      %v3170 = vshrl.u32 %v3169, 7
      %v3171 = vadd.s32 %v3170, 8
      %v3172 = vadd.s32 %v3170, 16
      %v3173 = vadd.s32 %v3170, 4294967295
      %v3174 = vadd.s32 %v3171, 4294967295
      %v3175 = vadd.s32 %v3172, 4294967295
      %vm3176 = vcmp.ge.s32.totalorder %v3159, 0
      %vm3177 = vcmp.ge.s32.totalorder %v3160, 0
      %vm3178 = vcmp.ge.s32.totalorder %v3161, 0
      %vm3179 = vcmp.ge.s32.totalorder %v3162, 0
      %vm3180 = vcmp.ge.s32.totalorder %v3163, 0
      %vm3181 = vcmp.ge.s32.totalorder %v3164, 0
      %vm3182 = vcmp.ge.s32.totalorder %v3165, 0
      %vm3183 = vcmp.ge.s32.totalorder %v3166, 0
      %vm3184 = vcmp.ge.s32.totalorder %v3167, 0
      %vm3185 = vcmp.ge.s32.totalorder %v3168, 0
      %vm3186 = vcmp.lt.s32.totalorder %v3159, 16
      %vm3187 = vcmp.lt.s32.totalorder %v3160, 16
      %vm3188 = vcmp.lt.s32.totalorder %v3161, 16
      %vm3189 = vcmp.lt.s32.totalorder %v3162, 16
      %vm3190 = vcmp.lt.s32.totalorder %v3163, 16
      %vm3191 = vcmp.lt.s32.totalorder %v3164, 16
      %vm3192 = vcmp.lt.s32.totalorder %v3165, 16
      %vm3193 = vcmp.lt.s32.totalorder %v3166, 16
      %vm3194 = vcmp.lt.s32.totalorder %v3167, 16
      %vm3195 = vcmp.lt.s32.totalorder %v3168, 16
      %vm3196 = vmand %vm3176, %vm3186
      %vm3197 = vmand %vm3177, %vm3187
      %vm3198 = vmand %vm3178, %vm3188
      %vm3199 = vmand %vm3179, %vm3189
      %vm3200 = vmand %vm3180, %vm3190
      %vm3201 = vmand %vm3181, %vm3191
      %vm3202 = vmand %vm3182, %vm3192
      %vm3203 = vmand %vm3183, %vm3193
      %vm3204 = vmand %vm3184, %vm3194
      %vm3205 = vmand %vm3185, %vm3195
      %vm3206 = vcmp.ge.s32.totalorder %v3173, 0
      %vm3207 = vcmp.ge.s32.totalorder %v3174, 0
      %vm3208 = vcmp.ge.s32.totalorder %v3175, 0
      %vm3209 = vmand %vm3196, %vm3206
      %vm3210 = vmand %vm3196, %vm3207
      %vm3211 = vmand %vm3196, %vm3208
      %vm3212 = vmand %vm3197, %vm3206
      %vm3213 = vmand %vm3197, %vm3207
      %vm3214 = vmand %vm3197, %vm3208
      %vm3215 = vmand %vm3198, %vm3206
      %vm3216 = vmand %vm3198, %vm3207
      %vm3217 = vmand %vm3198, %vm3208
      %vm3218 = vmand %vm3199, %vm3206
      %vm3219 = vmand %vm3199, %vm3207
      %vm3220 = vmand %vm3199, %vm3208
      %vm3221 = vmand %vm3200, %vm3206
      %vm3222 = vmand %vm3200, %vm3207
      %vm3223 = vmand %vm3200, %vm3208
      %vm3224 = vmand %vm3201, %vm3206
      %vm3225 = vmand %vm3201, %vm3207
      %vm3226 = vmand %vm3201, %vm3208
      %vm3227 = vmand %vm3202, %vm3206
      %vm3228 = vmand %vm3202, %vm3207
      %vm3229 = vmand %vm3202, %vm3208
      %vm3230 = vmand %vm3203, %vm3206
      %vm3231 = vmand %vm3203, %vm3207
      %vm3232 = vmand %vm3203, %vm3208
      %vm3233 = vmand %vm3204, %vm3206
      %vm3234 = vmand %vm3204, %vm3207
      %vm3235 = vmand %vm3204, %vm3208
      %vm3236 = vmand %vm3205, %vm3206
      %vm3237 = vmand %vm3205, %vm3207
      %vm3238 = vmand %vm3205, %vm3208
      %vm3239 = vcmp.lt.s32.totalorder %v3173, 16
      %vm3240 = vcmp.lt.s32.totalorder %v3174, 16
      %vm3241 = vcmp.lt.s32.totalorder %v3175, 16
      %vm3242 = vmand %vm3209, %vm3239
      %vm3243 = vmand %vm3210, %vm3240
      %vm3244 = vmand %vm3211, %vm3241
      %vm3245 = vmand %vm3212, %vm3239
      %vm3246 = vmand %vm3213, %vm3240
      %vm3247 = vmand %vm3214, %vm3241
      %vm3248 = vmand %vm3215, %vm3239
      %vm3249 = vmand %vm3216, %vm3240
      %vm3250 = vmand %vm3217, %vm3241
      %vm3251 = vmand %vm3218, %vm3239
      %vm3252 = vmand %vm3219, %vm3240
      %vm3253 = vmand %vm3220, %vm3241
      %vm3254 = vmand %vm3221, %vm3239
      %vm3255 = vmand %vm3222, %vm3240
      %vm3256 = vmand %vm3223, %vm3241
      %vm3257 = vmand %vm3224, %vm3239
      %vm3258 = vmand %vm3225, %vm3240
      %vm3259 = vmand %vm3226, %vm3241
      %vm3260 = vmand %vm3227, %vm3239
      %vm3261 = vmand %vm3228, %vm3240
      %vm3262 = vmand %vm3229, %vm3241
      %vm3263 = vmand %vm3230, %vm3239
      %vm3264 = vmand %vm3231, %vm3240
      %vm3265 = vmand %vm3232, %vm3241
      %vm3266 = vmand %vm3233, %vm3239
      %vm3267 = vmand %vm3234, %vm3240
      %vm3268 = vmand %vm3235, %vm3241
      %vm3269 = vmand %vm3236, %vm3239
      %vm3270 = vmand %vm3237, %vm3240
      %vm3271 = vmand %vm3238, %vm3241
      %v3272 = vsel %vm3242, 1, 0
      %v3273 = vsel %vm3243, 1, 0
      %v3274 = vsel %vm3244, 1, 0
      %v3275 = vsel %vm3245, 1, 0
      %v3276 = vsel %vm3246, 1, 0
      %v3277 = vsel %vm3247, 1, 0
      %v3278 = vsel %vm3248, 1, 0
      %v3279 = vsel %vm3249, 1, 0
      %v3280 = vsel %vm3250, 1, 0
      %v3281 = vsel %vm3251, 1, 0
      %v3282 = vsel %vm3252, 1, 0
      %v3283 = vsel %vm3253, 1, 0
      %v3284 = vsel %vm3254, 1, 0
      %v3285 = vsel %vm3255, 1, 0
      %v3286 = vsel %vm3256, 1, 0
      %v3287 = vsel %vm3257, 1, 0
      %v3288 = vsel %vm3258, 1, 0
      %v3289 = vsel %vm3259, 1, 0
      %v3290 = vsel %vm3260, 1, 0
      %v3291 = vsel %vm3261, 1, 0
      %v3292 = vsel %vm3262, 1, 0
      %v3293 = vsel %vm3263, 1, 0
      %v3294 = vsel %vm3264, 1, 0
      %v3295 = vsel %vm3265, 1, 0
      %v3296 = vsel %vm3266, 1, 0
      %v3297 = vsel %vm3267, 1, 0
      %v3298 = vsel %vm3268, 1, 0
      %v3299 = vsel %vm3269, 1, 0
      %v3300 = vsel %vm3270, 1, 0
      %v3301 = vsel %vm3271, 1, 0
      %vm3302 = vcmp.eq.s32.totalorder %v3272, 1
      %vm3303 = vcmp.eq.s32.totalorder %v3273, 1
      %vm3304 = vcmp.eq.s32.totalorder %v3274, 1
      %vm3305 = vcmp.eq.s32.totalorder %v3275, 1
      %vm3306 = vcmp.eq.s32.totalorder %v3276, 1
      %vm3307 = vcmp.eq.s32.totalorder %v3277, 1
      %vm3308 = vcmp.eq.s32.totalorder %v3278, 1
      %vm3309 = vcmp.eq.s32.totalorder %v3279, 1
      %vm3310 = vcmp.eq.s32.totalorder %v3280, 1
      %vm3311 = vcmp.eq.s32.totalorder %v3281, 1
      %vm3312 = vcmp.eq.s32.totalorder %v3282, 1
      %vm3313 = vcmp.eq.s32.totalorder %v3283, 1
      %vm3314 = vcmp.eq.s32.totalorder %v3284, 1
      %vm3315 = vcmp.eq.s32.totalorder %v3285, 1
      %vm3316 = vcmp.eq.s32.totalorder %v3286, 1
      %vm3317 = vcmp.eq.s32.totalorder %v3287, 1
      %vm3318 = vcmp.eq.s32.totalorder %v3288, 1
      %vm3319 = vcmp.eq.s32.totalorder %v3289, 1
      %vm3320 = vcmp.eq.s32.totalorder %v3290, 1
      %vm3321 = vcmp.eq.s32.totalorder %v3291, 1
      %vm3322 = vcmp.eq.s32.totalorder %v3292, 1
      %vm3323 = vcmp.eq.s32.totalorder %v3293, 1
      %vm3324 = vcmp.eq.s32.totalorder %v3294, 1
      %vm3325 = vcmp.eq.s32.totalorder %v3295, 1
      %vm3326 = vcmp.eq.s32.totalorder %v3296, 1
      %vm3327 = vcmp.eq.s32.totalorder %v3297, 1
      %vm3328 = vcmp.eq.s32.totalorder %v3298, 1
      %vm3329 = vcmp.eq.s32.totalorder %v3299, 1
      %vm3330 = vcmp.eq.s32.totalorder %v3300, 1
      %vm3331 = vcmp.eq.s32.totalorder %v3301, 1
      %v3332 = vcombine.low %v2783, %v2791
      %v3333 = vcombine.low %v2790, %v2792
      %v3335 = vunpack.c.l.s4 1983009808
      %v3336 = vunpack.c.0.s8 %v3335
      %v3337 = vlaneseq
      %v3338 = vshrl.u32 %v3337, 7
      %v3339 = vsub.s32 %v3336, %v3338
      %v3340 = vrot.slane %v3332, %v3339
      %v3342 = vunpack.c.l.s4 1983009808
      %v3343 = vunpack.c.0.s8 %v3342
      %v3344 = vlaneseq
      %v3345 = vshrl.u32 %v3344, 7
      %v3346 = vsub.s32 %v3343, %v3345
      %v3347 = vrot.slane %v3333, %v3346
      %v3348 = vcombine.low %v3340, %v3347
      %v3349 = vcombine.low %v2800, %v2808
      %v3350 = vcombine.low %v2807, %v2809
      %v3352 = vunpack.c.l.s4 1983009808
      %v3353 = vunpack.c.0.s8 %v3352
      %v3354 = vlaneseq
      %v3355 = vshrl.u32 %v3354, 7
      %v3356 = vsub.s32 %v3353, %v3355
      %v3357 = vrot.slane %v3349, %v3356
      %v3359 = vunpack.c.l.s4 1983009808
      %v3360 = vunpack.c.0.s8 %v3359
      %v3361 = vlaneseq
      %v3362 = vshrl.u32 %v3361, 7
      %v3363 = vsub.s32 %v3360, %v3362
      %v3364 = vrot.slane %v3350, %v3363
      %v3365 = vcombine.low %v3357, %v3364
      %v3367 = vunpack.c.l.s4 1983009808
      %v3368 = vunpack.c.0.s8 %v3367
      %v3369 = vlaneseq
      %v3370 = vshrl.u32 %v3369, 7
      %v3371 = vsub.s32 %v3368, %v3370
      %v3372 = vrot.slane %v2817, %v3371
      %v3373 = vcombine.low %v2825, %v2824
      %v3374 = vcombine.low %v2826, %v2834
      %v3376 = vunpack.c.l.s4 1983009808
      %v3377 = vunpack.c.0.s8 %v3376
      %v3378 = vlaneseq
      %v3379 = vshrl.u32 %v3378, 7
      %v3380 = vsub.s32 %v3377, %v3379
      %v3381 = vrot.slane %v3373, %v3380
      %v3383 = vunpack.c.l.s4 1983009808
      %v3384 = vunpack.c.0.s8 %v3383
      %v3385 = vlaneseq
      %v3386 = vshrl.u32 %v3385, 7
      %v3387 = vsub.s32 %v3384, %v3386
      %v3388 = vrot.slane %v3374, %v3387
      %v3389 = vcombine.low %v3381, %v3388
      %v3390 = vcombine.low %v2842, %v2841
      %v3391 = vcombine.low %v2843, %v2851
      %v3393 = vunpack.c.l.s4 1983009808
      %v3394 = vunpack.c.0.s8 %v3393
      %v3395 = vlaneseq
      %v3396 = vshrl.u32 %v3395, 7
      %v3397 = vsub.s32 %v3394, %v3396
      %v3398 = vrot.slane %v3390, %v3397
      %v3400 = vunpack.c.l.s4 1983009808
      %v3401 = vunpack.c.0.s8 %v3400
      %v3402 = vlaneseq
      %v3403 = vshrl.u32 %v3402, 7
      %v3404 = vsub.s32 %v3401, %v3403
      %v3405 = vrot.slane %v3391, %v3404
      %v3406 = vcombine.low %v3398, %v3405
      %v3408 = vunpack.c.l.s4 1983009808
      %v3409 = vunpack.c.0.s8 %v3408
      %v3410 = vlaneseq
      %v3411 = vshrl.u32 %v3410, 7
      %v3412 = vsub.s32 %v3409, %v3411
      %v3413 = vrot.slane %v2859, %v3412
      %v3414 = vcombine.low %v2858, %v2860
      %v3415 = vcombine.low %v2868, %v2876
      %v3417 = vunpack.c.l.s4 1983009808
      %v3418 = vunpack.c.0.s8 %v3417
      %v3419 = vlaneseq
      %v3420 = vshrl.u32 %v3419, 7
      %v3421 = vsub.s32 %v3418, %v3420
      %v3422 = vrot.slane %v3414, %v3421
      %v3424 = vunpack.c.l.s4 1983009808
      %v3425 = vunpack.c.0.s8 %v3424
      %v3426 = vlaneseq
      %v3427 = vshrl.u32 %v3426, 7
      %v3428 = vsub.s32 %v3425, %v3427
      %v3429 = vrot.slane %v3415, %v3428
      %v3430 = vcombine.low %v3422, %v3429
      %v3431 = vcombine.low %v2875, %v2877
      %v3432 = vcombine.low %v2885, %v2893
      %v3434 = vunpack.c.l.s4 1983009808
      %v3435 = vunpack.c.0.s8 %v3434
      %v3436 = vlaneseq
      %v3437 = vshrl.u32 %v3436, 7
      %v3438 = vsub.s32 %v3435, %v3437
      %v3439 = vrot.slane %v3431, %v3438
      %v3441 = vunpack.c.l.s4 1983009808
      %v3442 = vunpack.c.0.s8 %v3441
      %v3443 = vlaneseq
      %v3444 = vshrl.u32 %v3443, 7
      %v3445 = vsub.s32 %v3442, %v3444
      %v3446 = vrot.slane %v3432, %v3445
      %v3447 = vcombine.low %v3439, %v3446
      %v3449 = vunpack.c.l.s4 1983009808
      %v3450 = vunpack.c.0.s8 %v3449
      %v3451 = vlaneseq
      %v3452 = vshrl.u32 %v3451, 7
      %v3453 = vsub.s32 %v3450, %v3452
      %v3454 = vrot.slane %v2892, %v3453
      %v3455 = vcombine.low %v2894, %v2902
      %v3456 = vcombine.low %v2910, %v2909
      %v3458 = vunpack.c.l.s4 1983009808
      %v3459 = vunpack.c.0.s8 %v3458
      %v3460 = vlaneseq
      %v3461 = vshrl.u32 %v3460, 7
      %v3462 = vsub.s32 %v3459, %v3461
      %v3463 = vrot.slane %v3455, %v3462
      %v3465 = vunpack.c.l.s4 1983009808
      %v3466 = vunpack.c.0.s8 %v3465
      %v3467 = vlaneseq
      %v3468 = vshrl.u32 %v3467, 7
      %v3469 = vsub.s32 %v3466, %v3468
      %v3470 = vrot.slane %v3456, %v3469
      %v3471 = vcombine.low %v3463, %v3470
      %v3472 = vcombine.low %v2911, %v2919
      %v3473 = vcombine.low %v2927, %v2926
      %v3475 = vunpack.c.l.s4 1983009808
      %v3476 = vunpack.c.0.s8 %v3475
      %v3477 = vlaneseq
      %v3478 = vshrl.u32 %v3477, 7
      %v3479 = vsub.s32 %v3476, %v3478
      %v3480 = vrot.slane %v3472, %v3479
      %v3482 = vunpack.c.l.s4 1983009808
      %v3483 = vunpack.c.0.s8 %v3482
      %v3484 = vlaneseq
      %v3485 = vshrl.u32 %v3484, 7
      %v3486 = vsub.s32 %v3483, %v3485
      %v3487 = vrot.slane %v3473, %v3486
      %v3488 = vcombine.low %v3480, %v3487
      %v3490 = vunpack.c.l.s4 1983009808
      %v3491 = vunpack.c.0.s8 %v3490
      %v3492 = vlaneseq
      %v3493 = vshrl.u32 %v3492, 7
      %v3494 = vsub.s32 %v3491, %v3493
      %v3495 = vrot.slane %v2928, %v3494
      %v3496 = vcombine.low %v2936, %v2944
      %v3497 = vcombine.low %v2943, %v2945
      %v3499 = vunpack.c.l.s4 1983009808
      %v3500 = vunpack.c.0.s8 %v3499
      %v3501 = vlaneseq
      %v3502 = vshrl.u32 %v3501, 7
      %v3503 = vsub.s32 %v3500, %v3502
      %v3504 = vrot.slane %v3496, %v3503
      %v3506 = vunpack.c.l.s4 1983009808
      %v3507 = vunpack.c.0.s8 %v3506
      %v3508 = vlaneseq
      %v3509 = vshrl.u32 %v3508, 7
      %v3510 = vsub.s32 %v3507, %v3509
      %v3511 = vrot.slane %v3497, %v3510
      %v3512 = vcombine.low %v3504, %v3511
      %v3513 = vcombine.low %v2953, %v2961
      %v3514 = vcombine.low %v2960, %v2962
      %v3516 = vunpack.c.l.s4 1983009808
      %v3517 = vunpack.c.0.s8 %v3516
      %v3518 = vlaneseq
      %v3519 = vshrl.u32 %v3518, 7
      %v3520 = vsub.s32 %v3517, %v3519
      %v3521 = vrot.slane %v3513, %v3520
      %v3523 = vunpack.c.l.s4 1983009808
      %v3524 = vunpack.c.0.s8 %v3523
      %v3525 = vlaneseq
      %v3526 = vshrl.u32 %v3525, 7
      %v3527 = vsub.s32 %v3524, %v3526
      %v3528 = vrot.slane %v3514, %v3527
      %v3529 = vcombine.low %v3521, %v3528
      %v3531 = vunpack.c.l.s4 1983009808
      %v3532 = vunpack.c.0.s8 %v3531
      %v3533 = vlaneseq
      %v3534 = vshrl.u32 %v3533, 7
      %v3535 = vsub.s32 %v3532, %v3534
      %v3536 = vrot.slane %v2970, %v3535
      %v3537 = vcombine.low %v2978, %v2977
      %v3538 = vcombine.low %v2979, %v2987
      %v3540 = vunpack.c.l.s4 1983009808
      %v3541 = vunpack.c.0.s8 %v3540
      %v3542 = vlaneseq
      %v3543 = vshrl.u32 %v3542, 7
      %v3544 = vsub.s32 %v3541, %v3543
      %v3545 = vrot.slane %v3537, %v3544
      %v3547 = vunpack.c.l.s4 1983009808
      %v3548 = vunpack.c.0.s8 %v3547
      %v3549 = vlaneseq
      %v3550 = vshrl.u32 %v3549, 7
      %v3551 = vsub.s32 %v3548, %v3550
      %v3552 = vrot.slane %v3538, %v3551
      %v3553 = vcombine.low %v3545, %v3552
      %v3554 = vcombine.low %v2995, %v2994
      %v3555 = vcombine.low %v2996, %v3004
      %v3557 = vunpack.c.l.s4 1983009808
      %v3558 = vunpack.c.0.s8 %v3557
      %v3559 = vlaneseq
      %v3560 = vshrl.u32 %v3559, 7
      %v3561 = vsub.s32 %v3558, %v3560
      %v3562 = vrot.slane %v3554, %v3561
      %v3564 = vunpack.c.l.s4 1983009808
      %v3565 = vunpack.c.0.s8 %v3564
      %v3566 = vlaneseq
      %v3567 = vshrl.u32 %v3566, 7
      %v3568 = vsub.s32 %v3565, %v3567
      %v3569 = vrot.slane %v3555, %v3568
      %v3570 = vcombine.low %v3562, %v3569
      %v3572 = vunpack.c.l.s4 1983009808
      %v3573 = vunpack.c.0.s8 %v3572
      %v3574 = vlaneseq
      %v3575 = vshrl.u32 %v3574, 7
      %v3576 = vsub.s32 %v3573, %v3575
      %v3577 = vrot.slane %v3012, %v3576
      %v3578 = vcombine.low %v3011, %v3013
      %v3579 = vcombine.low %v3021, %v3029
      %v3581 = vunpack.c.l.s4 1983009808
      %v3582 = vunpack.c.0.s8 %v3581
      %v3583 = vlaneseq
      %v3584 = vshrl.u32 %v3583, 7
      %v3585 = vsub.s32 %v3582, %v3584
      %v3586 = vrot.slane %v3578, %v3585
      %v3588 = vunpack.c.l.s4 1983009808
      %v3589 = vunpack.c.0.s8 %v3588
      %v3590 = vlaneseq
      %v3591 = vshrl.u32 %v3590, 7
      %v3592 = vsub.s32 %v3589, %v3591
      %v3593 = vrot.slane %v3579, %v3592
      %v3594 = vcombine.low %v3586, %v3593
      %v3595 = vcombine.low %v3028, %v3030
      %v3596 = vcombine.low %v3038, %v3046
      %v3598 = vunpack.c.l.s4 1983009808
      %v3599 = vunpack.c.0.s8 %v3598
      %v3600 = vlaneseq
      %v3601 = vshrl.u32 %v3600, 7
      %v3602 = vsub.s32 %v3599, %v3601
      %v3603 = vrot.slane %v3595, %v3602
      %v3605 = vunpack.c.l.s4 1983009808
      %v3606 = vunpack.c.0.s8 %v3605
      %v3607 = vlaneseq
      %v3608 = vshrl.u32 %v3607, 7
      %v3609 = vsub.s32 %v3606, %v3608
      %v3610 = vrot.slane %v3596, %v3609
      %v3611 = vcombine.low %v3603, %v3610
      %v3613 = vunpack.c.l.s4 1983009808
      %v3614 = vunpack.c.0.s8 %v3613
      %v3615 = vlaneseq
      %v3616 = vshrl.u32 %v3615, 7
      %v3617 = vsub.s32 %v3614, %v3616
      %v3618 = vrot.slane %v3045, %v3617
      %v3619 = vcombine.low %v3047, %v3055
      %v3620 = vcombine.low %v3063, %v3062
      %v3622 = vunpack.c.l.s4 1983009808
      %v3623 = vunpack.c.0.s8 %v3622
      %v3624 = vlaneseq
      %v3625 = vshrl.u32 %v3624, 7
      %v3626 = vsub.s32 %v3623, %v3625
      %v3627 = vrot.slane %v3619, %v3626
      %v3629 = vunpack.c.l.s4 1983009808
      %v3630 = vunpack.c.0.s8 %v3629
      %v3631 = vlaneseq
      %v3632 = vshrl.u32 %v3631, 7
      %v3633 = vsub.s32 %v3630, %v3632
      %v3634 = vrot.slane %v3620, %v3633
      %v3635 = vcombine.low %v3627, %v3634
      %v3636 = vcombine.low %v3064, %v3072
      %v3637 = vcombine.low %v3080, %v3079
      %v3639 = vunpack.c.l.s4 1983009808
      %v3640 = vunpack.c.0.s8 %v3639
      %v3641 = vlaneseq
      %v3642 = vshrl.u32 %v3641, 7
      %v3643 = vsub.s32 %v3640, %v3642
      %v3644 = vrot.slane %v3636, %v3643
      %v3646 = vunpack.c.l.s4 1983009808
      %v3647 = vunpack.c.0.s8 %v3646
      %v3648 = vlaneseq
      %v3649 = vshrl.u32 %v3648, 7
      %v3650 = vsub.s32 %v3647, %v3649
      %v3651 = vrot.slane %v3637, %v3650
      %v3652 = vcombine.low %v3644, %v3651
      %v3654 = vunpack.c.l.s4 1983009808
      %v3655 = vunpack.c.0.s8 %v3654
      %v3656 = vlaneseq
      %v3657 = vshrl.u32 %v3656, 7
      %v3658 = vsub.s32 %v3655, %v3657
      %v3659 = vrot.slane %v3081, %v3658
      %v3660 = vcombine.low %v3089, %v3097
      %v3661 = vcombine.low %v3096, %v3098
      %v3663 = vunpack.c.l.s4 1983009808
      %v3664 = vunpack.c.0.s8 %v3663
      %v3665 = vlaneseq
      %v3666 = vshrl.u32 %v3665, 7
      %v3667 = vsub.s32 %v3664, %v3666
      %v3668 = vrot.slane %v3660, %v3667
      %v3670 = vunpack.c.l.s4 1983009808
      %v3671 = vunpack.c.0.s8 %v3670
      %v3672 = vlaneseq
      %v3673 = vshrl.u32 %v3672, 7
      %v3674 = vsub.s32 %v3671, %v3673
      %v3675 = vrot.slane %v3661, %v3674
      %v3676 = vcombine.low %v3668, %v3675
      %v3677 = vcombine.low %v3106, %v3114
      %v3678 = vcombine.low %v3113, %v3115
      %v3680 = vunpack.c.l.s4 1983009808
      %v3681 = vunpack.c.0.s8 %v3680
      %v3682 = vlaneseq
      %v3683 = vshrl.u32 %v3682, 7
      %v3684 = vsub.s32 %v3681, %v3683
      %v3685 = vrot.slane %v3677, %v3684
      %v3687 = vunpack.c.l.s4 1983009808
      %v3688 = vunpack.c.0.s8 %v3687
      %v3689 = vlaneseq
      %v3690 = vshrl.u32 %v3689, 7
      %v3691 = vsub.s32 %v3688, %v3690
      %v3692 = vrot.slane %v3678, %v3691
      %v3693 = vcombine.low %v3685, %v3692
      %v3695 = vunpack.c.l.s4 1983009808
      %v3696 = vunpack.c.0.s8 %v3695
      %v3697 = vlaneseq
      %v3698 = vshrl.u32 %v3697, 7
      %v3699 = vsub.s32 %v3696, %v3698
      %v3700 = vrot.slane %v3123, %v3699
      %v3701 = vcombine.low %v3131, %v3130
      %v3702 = vcombine.low %v3132, %v3140
      %v3704 = vunpack.c.l.s4 1983009808
      %v3705 = vunpack.c.0.s8 %v3704
      %v3706 = vlaneseq
      %v3707 = vshrl.u32 %v3706, 7
      %v3708 = vsub.s32 %v3705, %v3707
      %v3709 = vrot.slane %v3701, %v3708
      %v3711 = vunpack.c.l.s4 1983009808
      %v3712 = vunpack.c.0.s8 %v3711
      %v3713 = vlaneseq
      %v3714 = vshrl.u32 %v3713, 7
      %v3715 = vsub.s32 %v3712, %v3714
      %v3716 = vrot.slane %v3702, %v3715
      %v3717 = vcombine.low %v3709, %v3716
      %v3718 = vcombine.low %v3148, %v3147
      %v3719 = vcombine.low %v3149, %v3156
      %v3721 = vunpack.c.l.s4 1983009808
      %v3722 = vunpack.c.0.s8 %v3721
      %v3723 = vlaneseq
      %v3724 = vshrl.u32 %v3723, 7
      %v3725 = vsub.s32 %v3722, %v3724
      %v3726 = vrot.slane %v3718, %v3725
      %v3728 = vunpack.c.l.s4 1983009808
      %v3729 = vunpack.c.0.s8 %v3728
      %v3730 = vlaneseq
      %v3731 = vshrl.u32 %v3730, 7
      %v3732 = vsub.s32 %v3729, %v3731
      %v3733 = vrot.slane %v3719, %v3732
      %v3734 = vcombine.low %v3726, %v3733
      %v3736 = vunpack.c.l.s4 1983009808
      %v3737 = vunpack.c.0.s8 %v3736
      %v3738 = vlaneseq
      %v3739 = vshrl.u32 %v3738, 7
      %v3740 = vsub.s32 %v3737, %v3739
      %v3741 = vrot.slane %v3157, %v3740
      %v3772 = vsel %vm3302, %v3348, 0.0
      %v3773 = vsel %vm3303, %v3365, 0.0
      %v3774 = vsel %vm3304, %v3372, 0.0
      %v3775 = vsel %vm3305, %v3389, 0.0
      %v3776 = vsel %vm3306, %v3406, 0.0
      %v3777 = vsel %vm3307, %v3413, 0.0
      %v3778 = vsel %vm3308, %v3430, 0.0
      %v3779 = vsel %vm3309, %v3447, 0.0
      %v3780 = vsel %vm3310, %v3454, 0.0
      %v3781 = vsel %vm3311, %v3471, 0.0
      %v3782 = vsel %vm3312, %v3488, 0.0
      %v3783 = vsel %vm3313, %v3495, 0.0
      %v3784 = vsel %vm3314, %v3512, 0.0
      %v3785 = vsel %vm3315, %v3529, 0.0
      %v3786 = vsel %vm3316, %v3536, 0.0
      %v3787 = vsel %vm3317, %v3553, 0.0
      %v3788 = vsel %vm3318, %v3570, 0.0
      %v3789 = vsel %vm3319, %v3577, 0.0
      %v3790 = vsel %vm3320, %v3594, 0.0
      %v3791 = vsel %vm3321, %v3611, 0.0
      %v3792 = vsel %vm3322, %v3618, 0.0
      %v3793 = vsel %vm3323, %v3635, 0.0
      %v3794 = vsel %vm3324, %v3652, 0.0
      %v3795 = vsel %vm3325, %v3659, 0.0
      %v3796 = vsel %vm3326, %v3676, 0.0
      %v3797 = vsel %vm3327, %v3693, 0.0
      %v3798 = vsel %vm3328, %v3700, 0.0
      %v3799 = vsel %vm3329, %v3717, 0.0
      %v3800 = vsel %vm3330, %v3734, 0.0
      %v3801 = vsel %vm3331, %v3741, 0.0
      %v3802 = vpack.c.bf16 %v3773, %v3772
      %v3803 = vpack.c.bf16 %v3774, %v3774
      %v3804 = vpack.c.bf16 %v3776, %v3775
      %v3805 = vpack.c.bf16 %v3777, %v3777
      %v3806 = vpack.c.bf16 %v3779, %v3778
      %v3807 = vpack.c.bf16 %v3780, %v3780
      %v3808 = vpack.c.bf16 %v3782, %v3781
      %v3809 = vpack.c.bf16 %v3783, %v3783
      %v3810 = vpack.c.bf16 %v3785, %v3784
      %v3811 = vpack.c.bf16 %v3786, %v3786
      %v3812 = vpack.c.bf16 %v3788, %v3787
      %v3813 = vpack.c.bf16 %v3789, %v3789
      %v3814 = vpack.c.bf16 %v3791, %v3790
      %v3815 = vpack.c.bf16 %v3792, %v3792
      %v3816 = vpack.c.bf16 %v3794, %v3793
      %v3817 = vpack.c.bf16 %v3795, %v3795
      %v3818 = vpack.c.bf16 %v3797, %v3796
      %v3819 = vpack.c.bf16 %v3798, %v3798
      %v3820 = vpack.c.bf16 %v3800, %v3799
      %v3821 = vpack.c.bf16 %v3801, %v3801
      %v3823 = vshrl.u32 %v3802, 16
      %v3825 = vshll.u32 %v3802, 16
      %v3827 = vrot.slane %v3825, 1
      %v3828 = vor.u32 %v3823, %v3827
      %v3830 = vshll.u32 %v3803, 16
      %v3832 = vrot.slane %v3830, 1
      %v3833 = vsel %vm432, %v3828, %v3832
      %v3835 = vshrl.u32 %v3804, 16
      %v3837 = vshll.u32 %v3804, 16
      %v3839 = vrot.slane %v3837, 1
      %v3840 = vor.u32 %v3835, %v3839
      %v3842 = vshll.u32 %v3805, 16
      %v3844 = vrot.slane %v3842, 1
      %v3845 = vsel %vm432, %v3840, %v3844
      %v3847 = vshrl.u32 %v3806, 16
      %v3849 = vshll.u32 %v3806, 16
      %v3851 = vrot.slane %v3849, 1
      %v3852 = vor.u32 %v3847, %v3851
      %v3854 = vshll.u32 %v3807, 16
      %v3856 = vrot.slane %v3854, 1
      %v3857 = vsel %vm432, %v3852, %v3856
      %v3859 = vshrl.u32 %v3808, 16
      %v3861 = vshll.u32 %v3808, 16
      %v3863 = vrot.slane %v3861, 1
      %v3864 = vor.u32 %v3859, %v3863
      %v3866 = vshll.u32 %v3809, 16
      %v3868 = vrot.slane %v3866, 1
      %v3869 = vsel %vm432, %v3864, %v3868
      %v3871 = vshrl.u32 %v3810, 16
      %v3873 = vshll.u32 %v3810, 16
      %v3875 = vrot.slane %v3873, 1
      %v3876 = vor.u32 %v3871, %v3875
      %v3878 = vshll.u32 %v3811, 16
      %v3880 = vrot.slane %v3878, 1
      %v3881 = vsel %vm432, %v3876, %v3880
      %v3883 = vshrl.u32 %v3812, 16
      %v3885 = vshll.u32 %v3812, 16
      %v3887 = vrot.slane %v3885, 1
      %v3888 = vor.u32 %v3883, %v3887
      %v3890 = vshll.u32 %v3813, 16
      %v3892 = vrot.slane %v3890, 1
      %v3893 = vsel %vm432, %v3888, %v3892
      %v3895 = vshrl.u32 %v3814, 16
      %v3897 = vshll.u32 %v3814, 16
      %v3899 = vrot.slane %v3897, 1
      %v3900 = vor.u32 %v3895, %v3899
      %v3902 = vshll.u32 %v3815, 16
      %v3904 = vrot.slane %v3902, 1
      %v3905 = vsel %vm432, %v3900, %v3904
      %v3907 = vshrl.u32 %v3816, 16
      %v3909 = vshll.u32 %v3816, 16
      %v3911 = vrot.slane %v3909, 1
      %v3912 = vor.u32 %v3907, %v3911
      %v3914 = vshll.u32 %v3817, 16
      %v3916 = vrot.slane %v3914, 1
      %v3917 = vsel %vm432, %v3912, %v3916
      %3918 = vrot.lane.b32.xlu0 %v3833, 8
      %v3919 = vpop.permute.xlu0 %3918
      %3920 = vrot.lane.b32.xlu0 %v3845, 8
      %v3921 = vpop.permute.xlu0 %3920
      %3922 = vrot.lane.b32.xlu0 %v3857, 8
      %v3923 = vpop.permute.xlu0 %3922
      %3924 = vrot.lane.b32.xlu0 %v3869, 8
      %v3925 = vpop.permute.xlu0 %3924
      %3926 = vrot.lane.b32.xlu0 %v3881, 8
      %v3927 = vpop.permute.xlu0 %3926
      %3928 = vrot.lane.b32.xlu0 %v3893, 8
      %v3929 = vpop.permute.xlu0 %3928
      %3930 = vrot.lane.b32.xlu0 %v3905, 8
      %v3931 = vpop.permute.xlu0 %3930
      %3932 = vrot.lane.b32.xlu0 %v3917, 8
      %v3933 = vpop.permute.xlu0 %3932
      %v3950 = vrot.slane %v3802, 1
      %v3951 = vrot.slane %v3803, 1
      %v3952 = vsel %vm623, %v3950, %v3951
      %v3953 = vrot.slane %v3804, 1
      %v3954 = vrot.slane %v3805, 1
      %v3955 = vsel %vm623, %v3953, %v3954
      %v3956 = vrot.slane %v3806, 1
      %v3957 = vrot.slane %v3807, 1
      %v3958 = vsel %vm623, %v3956, %v3957
      %v3959 = vrot.slane %v3808, 1
      %v3960 = vrot.slane %v3809, 1
      %v3961 = vsel %vm623, %v3959, %v3960
      %v3962 = vrot.slane %v3810, 1
      %v3963 = vrot.slane %v3811, 1
      %v3964 = vsel %vm623, %v3962, %v3963
      %v3965 = vrot.slane %v3812, 1
      %v3966 = vrot.slane %v3813, 1
      %v3967 = vsel %vm623, %v3965, %v3966
      %v3968 = vrot.slane %v3814, 1
      %v3969 = vrot.slane %v3815, 1
      %v3970 = vsel %vm623, %v3968, %v3969
      %v3971 = vrot.slane %v3816, 1
      %v3972 = vrot.slane %v3817, 1
      %v3973 = vsel %vm623, %v3971, %v3972
      %3974 = vrot.lane.b32.xlu0 %v3952, 16
      %v3975 = vpop.permute.xlu0 %3974
      %3976 = vrot.lane.b32.xlu0 %v3955, 16
      %v3977 = vpop.permute.xlu0 %3976
      %3978 = vrot.lane.b32.xlu0 %v3958, 16
      %v3979 = vpop.permute.xlu0 %3978
      %3980 = vrot.lane.b32.xlu0 %v3961, 16
      %v3981 = vpop.permute.xlu0 %3980
      %3982 = vrot.lane.b32.xlu0 %v3964, 16
      %v3983 = vpop.permute.xlu0 %3982
      %3984 = vrot.lane.b32.xlu0 %v3967, 16
      %v3985 = vpop.permute.xlu0 %3984
      %3986 = vrot.lane.b32.xlu0 %v3970, 16
      %v3987 = vpop.permute.xlu0 %3986
      %3988 = vrot.lane.b32.xlu0 %v3973, 16
      %v3989 = vpop.permute.xlu0 %3988
      %3991 = vrot.lane.b32.xlu0 %v3804, 24
      %v3992 = vpop.permute.xlu0 %3991
      %3993 = vrot.lane.b32.xlu0 %v3806, 24
      %v3994 = vpop.permute.xlu0 %3993
      %3995 = vrot.lane.b32.xlu0 %v3808, 24
      %v3996 = vpop.permute.xlu0 %3995
      %3997 = vrot.lane.b32.xlu0 %v3810, 24
      %v3998 = vpop.permute.xlu0 %3997
      %3999 = vrot.lane.b32.xlu0 %v3812, 24
      %v4000 = vpop.permute.xlu0 %3999
      %4001 = vrot.lane.b32.xlu0 %v3814, 24
      %v4002 = vpop.permute.xlu0 %4001
      %4003 = vrot.lane.b32.xlu0 %v3816, 24
      %v4004 = vpop.permute.xlu0 %4003
      %4005 = vrot.lane.b32.xlu0 %v3818, 24
      %v4006 = vpop.permute.xlu0 %4005
      %v4008 = vshrl.u32 %v3818, 16
      %v4010 = vshll.u32 %v3818, 16
      %v4012 = vrot.slane %v4010, 1
      %v4013 = vor.u32 %v4008, %v4012
      %v4015 = vshll.u32 %v3819, 16
      %v4017 = vrot.slane %v4015, 1
      %v4018 = vsel %vm432, %v4013, %v4017
      %4019 = vrot.lane.b32.xlu0 %v3845, 32
      %v4020 = vpop.permute.xlu0 %4019
      %4021 = vrot.lane.b32.xlu0 %v3857, 32
      %v4022 = vpop.permute.xlu0 %4021
      %4023 = vrot.lane.b32.xlu0 %v3869, 32
      %v4024 = vpop.permute.xlu0 %4023
      %4025 = vrot.lane.b32.xlu0 %v3881, 32
      %v4026 = vpop.permute.xlu0 %4025
      %4027 = vrot.lane.b32.xlu0 %v3893, 32
      %v4028 = vpop.permute.xlu0 %4027
      %4029 = vrot.lane.b32.xlu0 %v3905, 32
      %v4030 = vpop.permute.xlu0 %4029
      %4031 = vrot.lane.b32.xlu0 %v3917, 32
      %v4032 = vpop.permute.xlu0 %4031
      %4033 = vrot.lane.b32.xlu0 %v4018, 32
      %v4034 = vpop.permute.xlu0 %4033
      %v4036 = vrot.slane %v3818, 1
      %v4037 = vrot.slane %v3819, 1
      %v4038 = vsel %vm623, %v4036, %v4037
      %4039 = vrot.lane.b32.xlu0 %v3955, 40
      %v4040 = vpop.permute.xlu0 %4039
      %4041 = vrot.lane.b32.xlu0 %v3958, 40
      %v4042 = vpop.permute.xlu0 %4041
      %4043 = vrot.lane.b32.xlu0 %v3961, 40
      %v4044 = vpop.permute.xlu0 %4043
      %4045 = vrot.lane.b32.xlu0 %v3964, 40
      %v4046 = vpop.permute.xlu0 %4045
      %4047 = vrot.lane.b32.xlu0 %v3967, 40
      %v4048 = vpop.permute.xlu0 %4047
      %4049 = vrot.lane.b32.xlu0 %v3970, 40
      %v4050 = vpop.permute.xlu0 %4049
      %4051 = vrot.lane.b32.xlu0 %v3973, 40
      %v4052 = vpop.permute.xlu0 %4051
      %4053 = vrot.lane.b32.xlu0 %v4038, 40
      %v4054 = vpop.permute.xlu0 %4053
      %4056 = vrot.lane.b32.xlu0 %v3806, 48
      %v4057 = vpop.permute.xlu0 %4056
      %4058 = vrot.lane.b32.xlu0 %v3808, 48
      %v4059 = vpop.permute.xlu0 %4058
      %4060 = vrot.lane.b32.xlu0 %v3810, 48
      %v4061 = vpop.permute.xlu0 %4060
      %4062 = vrot.lane.b32.xlu0 %v3812, 48
      %v4063 = vpop.permute.xlu0 %4062
      %4064 = vrot.lane.b32.xlu0 %v3814, 48
      %v4065 = vpop.permute.xlu0 %4064
      %4066 = vrot.lane.b32.xlu0 %v3816, 48
      %v4067 = vpop.permute.xlu0 %4066
      %4068 = vrot.lane.b32.xlu0 %v3818, 48
      %v4069 = vpop.permute.xlu0 %4068
      %4070 = vrot.lane.b32.xlu0 %v3820, 48
      %v4071 = vpop.permute.xlu0 %4070
      %v4073 = vshrl.u32 %v3820, 16
      %v4075 = vshll.u32 %v3820, 16
      %v4077 = vrot.slane %v4075, 1
      %v4078 = vor.u32 %v4073, %v4077
      %v4080 = vshll.u32 %v3821, 16
      %v4082 = vrot.slane %v4080, 1
      %v4083 = vsel %vm432, %v4078, %v4082
      %4084 = vrot.lane.b32.xlu0 %v3857, 56
      %v4085 = vpop.permute.xlu0 %4084
      %4086 = vrot.lane.b32.xlu0 %v3869, 56
      %v4087 = vpop.permute.xlu0 %4086
      %4088 = vrot.lane.b32.xlu0 %v3881, 56
      %v4089 = vpop.permute.xlu0 %4088
      %4090 = vrot.lane.b32.xlu0 %v3893, 56
      %v4091 = vpop.permute.xlu0 %4090
      %4092 = vrot.lane.b32.xlu0 %v3905, 56
      %v4093 = vpop.permute.xlu0 %4092
      %4094 = vrot.lane.b32.xlu0 %v3917, 56
      %v4095 = vpop.permute.xlu0 %4094
      %4096 = vrot.lane.b32.xlu0 %v4018, 56
      %v4097 = vpop.permute.xlu0 %4096
      %4098 = vrot.lane.b32.xlu0 %v4083, 56
      %v4099 = vpop.permute.xlu0 %4098
      %v4101 = vrot.slane %v3820, 1
      %v4102 = vrot.slane %v3821, 1
      %v4103 = vsel %vm623, %v4101, %v4102
      %4104 = vrot.lane.b32.xlu0 %v3958, 64
      %v4105 = vpop.permute.xlu0 %4104
      %4106 = vrot.lane.b32.xlu0 %v3961, 64
      %v4107 = vpop.permute.xlu0 %4106
      %4108 = vrot.lane.b32.xlu0 %v3964, 64
      %v4109 = vpop.permute.xlu0 %4108
      %4110 = vrot.lane.b32.xlu0 %v3967, 64
      %v4111 = vpop.permute.xlu0 %4110
      %4112 = vrot.lane.b32.xlu0 %v3970, 64
      %v4113 = vpop.permute.xlu0 %4112
      %4114 = vrot.lane.b32.xlu0 %v3973, 64
      %v4115 = vpop.permute.xlu0 %4114
      %4116 = vrot.lane.b32.xlu0 %v4038, 64
      %v4117 = vpop.permute.xlu0 %4116
      %4118 = vrot.lane.b32.xlu0 %v4103, 64
      %v4119 = vpop.permute.xlu0 %4118
      %v4121 = vsel %vm986, %v3802, %v3919
      %v4123 = vsel %vm986, %v3804, %v3921
      %v4125 = vsel %vm986, %v3806, %v3923
      %v4127 = vsel %vm986, %v3808, %v3925
      %v4129 = vsel %vm986, %v3810, %v3927
      %v4131 = vsel %vm986, %v3812, %v3929
      %v4133 = vsel %vm986, %v3814, %v3931
      %v4135 = vsel %vm986, %v3816, %v3933
      %v4137 = vsel %vm1027, %v4121, %v3975
      %v4139 = vsel %vm1027, %v4123, %v3977
      %v4141 = vsel %vm1027, %v4125, %v3979
      %v4143 = vsel %vm1027, %v4127, %v3981
      %v4145 = vsel %vm1027, %v4129, %v3983
      %v4147 = vsel %vm1027, %v4131, %v3985
      %v4149 = vsel %vm1027, %v4133, %v3987
      %v4151 = vsel %vm1027, %v4135, %v3989
      %v4153 = vsel %vm1068, %v4137, %v3992
      %v4155 = vsel %vm1068, %v4139, %v3994
      %v4157 = vsel %vm1068, %v4141, %v3996
      %v4159 = vsel %vm1068, %v4143, %v3998
      %v4161 = vsel %vm1068, %v4145, %v4000
      %v4163 = vsel %vm1068, %v4147, %v4002
      %v4165 = vsel %vm1068, %v4149, %v4004
      %v4167 = vsel %vm1068, %v4151, %v4006
      %v4169 = vsel %vm1109, %v4153, %v4020
      %v4171 = vsel %vm1109, %v4155, %v4022
      %v4173 = vsel %vm1109, %v4157, %v4024
      %v4175 = vsel %vm1109, %v4159, %v4026
      %v4177 = vsel %vm1109, %v4161, %v4028
      %v4179 = vsel %vm1109, %v4163, %v4030
      %v4181 = vsel %vm1109, %v4165, %v4032
      %v4183 = vsel %vm1109, %v4167, %v4034
      %v4185 = vsel %vm1150, %v4169, %v4040
      %v4187 = vsel %vm1150, %v4171, %v4042
      %v4189 = vsel %vm1150, %v4173, %v4044
      %v4191 = vsel %vm1150, %v4175, %v4046
      %v4193 = vsel %vm1150, %v4177, %v4048
      %v4195 = vsel %vm1150, %v4179, %v4050
      %v4197 = vsel %vm1150, %v4181, %v4052
      %v4199 = vsel %vm1150, %v4183, %v4054
      %v4201 = vsel %vm1191, %v4185, %v4057
      %v4203 = vsel %vm1191, %v4187, %v4059
      %v4205 = vsel %vm1191, %v4189, %v4061
      %v4207 = vsel %vm1191, %v4191, %v4063
      %v4209 = vsel %vm1191, %v4193, %v4065
      %v4211 = vsel %vm1191, %v4195, %v4067
      %v4213 = vsel %vm1191, %v4197, %v4069
      %v4215 = vsel %vm1191, %v4199, %v4071
      %v4217 = vsel %vm1232, %v4201, %v4085
      %v4219 = vsel %vm1232, %v4203, %v4087
      %v4221 = vsel %vm1232, %v4205, %v4089
      %v4223 = vsel %vm1232, %v4207, %v4091
      %v4225 = vsel %vm1232, %v4209, %v4093
      %v4227 = vsel %vm1232, %v4211, %v4095
      %v4229 = vsel %vm1232, %v4213, %v4097
      %v4231 = vsel %vm1232, %v4215, %v4099
      %v4233 = vsel %vm1273, %v4217, %v4105
      %v4235 = vsel %vm1273, %v4219, %v4107
      %v4237 = vsel %vm1273, %v4221, %v4109
      %v4239 = vsel %vm1273, %v4223, %v4111
      %v4241 = vsel %vm1273, %v4225, %v4113
      %v4243 = vsel %vm1273, %v4227, %v4115
      %v4245 = vsel %vm1273, %v4229, %v4117
      %v4247 = vsel %vm1273, %v4231, %v4119
      %v4248 = vld [vmem:[%s4] sm:$0xf]
      %v4249 = vld [vmem:[%s4 + $0x4] sm:$0xf]
      %v4250 = vld [vmem:[%s4 + $0x8] sm:$0xf]
      %v4251 = vld [vmem:[%s4 + $0xc] sm:$0xf]
      %v4252 = vld [vmem:[%s4 + $0x10] sm:$0xf]
      %v4253 = vld [vmem:[%s4 + $0x14] sm:$0xf]
      %v4254 = vld [vmem:[%s4 + $0x18] sm:$0xf]
      %v4255 = vld [vmem:[%s4 + $0x1c] sm:$0xf]
      %v4256 = vld [vmem:[%s4 + $0x20] sm:$0xf]
      %v4257 = vld [vmem:[%s5] sm:$0x1]
      %v4259 = vlaneseq
      %v4260 = vshrl.u32 %v4259, 7
      %v4261 = vsub.s32 0, %v4260
      %v4262 = vrot.slane %v4257, %v4261
      %v4273 = vunpack.c.l.b16 %v4248
      %v4274 = vunpack.c.l.b16 %v4249
      %v4275 = vunpack.c.l.b16 %v4250
      %v4276 = vunpack.c.l.b16 %v4251
      %v4277 = vunpack.c.l.b16 %v4252
      %v4278 = vunpack.c.l.b16 %v4253
      %v4279 = vunpack.c.l.b16 %v4254
      %v4280 = vunpack.c.l.b16 %v4255
      %v4281 = vunpack.c.l.b16 %v4256
      %v4282 = vpack.c.b16 %v4274, %v4273
      %v4283 = vpack.c.b16 %v4276, %v4275
      %v4284 = vpack.c.b16 %v4278, %v4277
      %v4285 = vpack.c.b16 %v4280, %v4279
      %v4286 = vpack.c.b16 %v4281, %v4281
      %v4291 = vsel %vm2561, %v4233, 0
      %v4293 = vsel %vm2561, %v4235, 0
      %v4295 = vsel %vm2561, %v4237, 0
      %v4297 = vsel %vm2561, %v4239, 0
      %v4299 = vsel %vm2561, %v4241, 0
      %v4301 = vsel %vm2561, %v4243, 0
      %v4303 = vsel %vm2561, %v4245, 0
      %v4305 = vsel %vm2561, %v4247, 0
      %v4308 = vsel %vm2598, %v4286, 0
      %4310 = vmatprep.subr.bf16.mxu0 0
      %4311 = vmatpush1.bf16.msra.mxu0 %v4282
      %4312 = vmatprep.subr.bf16.mxu0 0
      %4313 = vmatpush1.bf16.msra.mxu0 %v4283
      %4314 = vmatprep.subr.bf16.mxu0 0
      %4315 = vmatpush1.bf16.msra.mxu0 %v4284
      %4316 = vmatprep.subr.bf16.mxu0 0
      %4317 = vmatpush1.bf16.msra.mxu0 %v4285
      %4318 = vmatprep.subr.bf16.mxu0 0
      %4319 = vmatpush1.bf16.msra.mxu0 %v4308
      %4320 = vmatprep.subr.bf16.mxu0 0
      %4321 = vmatpush1.bf16.msra.mxu0 0
      %4322 = vmatprep.subr.bf16.mxu0 0
      %4323 = vmatpush1.bf16.msra.mxu0 0
      %4324 = vmatprep.subr.bf16.mxu0 0
      %4325 = vmatpush1.bf16.msra.mxu0 0
      %4326 = vmatprep.subr.bf16.mxu0 0
      %4327 = vmatpush1.bf16.msra.mxu0 0
      %4328 = vmatprep.subr.bf16.mxu0 0
      %4329 = vmatpush1.bf16.msra.mxu0 0
      %4330 = vmatprep.subr.bf16.mxu0 0
      %4331 = vmatpush1.bf16.msra.mxu0 0
      %4332 = vmatprep.subr.bf16.mxu0 0
      %4333 = vmatpush1.bf16.msra.mxu0 0
      %4334 = vmatprep.subr.bf16.mxu0 0
      %4335 = vmatpush1.bf16.msra.mxu0 0
      %4336 = vmatprep.subr.bf16.mxu0 0
      %4337 = vmatpush1.bf16.msra.mxu0 0
      %4338 = vmatprep.subr.bf16.mxu0 0
      %4339 = vmatpush1.bf16.msra.mxu0 0
      %4340 = vmatprep.subr.bf16.mxu0 0
      %4341 = vmatpush1.bf16.msra.mxu0 0
      %4342 = vmatprep.mubr.bf16.mxu0 0
      %4343 = vmatmul.mubr.bf16.gmra.mrb[0].mxu0 %v4291
      %v4344 = vpop.f32.mrb[0].mxu0
      %v4345 = vadd.f32 %v4262, %v4344
      %v4346 = vpop.f32.mrb[0].mxu0
      %v4347 = vpop.f32.mrb[0].mxu0
      %v4348 = vadd.f32 %v4262, %v4347
      %v4349 = vpop.f32.mrb[0].mxu0
      %4350 = vmatprep.mubr.bf16.mxu0 0
      %4351 = vmatmul.mubr.bf16.gmra.mrb[0].mxu0 %v4293
      %v4352 = vpop.f32.mrb[0].mxu0
      %v4353 = vadd.f32 %v4262, %v4352
      %v4354 = vpop.f32.mrb[0].mxu0
      %v4355 = vpop.f32.mrb[0].mxu0
      %v4356 = vadd.f32 %v4262, %v4355
      %v4357 = vpop.f32.mrb[0].mxu0
      %4358 = vmatprep.mubr.bf16.mxu0 0
      %4359 = vmatmul.mubr.bf16.gmra.mrb[0].mxu0 %v4295
      %v4360 = vpop.f32.mrb[0].mxu0
      %v4361 = vadd.f32 %v4262, %v4360
      %v4362 = vpop.f32.mrb[0].mxu0
      %v4363 = vpop.f32.mrb[0].mxu0
      %v4364 = vadd.f32 %v4262, %v4363
      %v4365 = vpop.f32.mrb[0].mxu0
      %4366 = vmatprep.mubr.bf16.mxu0 0
      %4367 = vmatmul.mubr.bf16.gmra.mrb[0].mxu0 %v4297
      %v4368 = vpop.f32.mrb[0].mxu0
      %v4369 = vadd.f32 %v4262, %v4368
      %v4370 = vpop.f32.mrb[0].mxu0
      %v4371 = vpop.f32.mrb[0].mxu0
      %v4372 = vadd.f32 %v4262, %v4371
      %v4373 = vpop.f32.mrb[0].mxu0
      %4374 = vmatprep.mubr.bf16.mxu0 0
      %4375 = vmatmul.mubr.bf16.gmra.mrb[0].mxu0 %v4299
      %v4376 = vpop.f32.mrb[0].mxu0
      %v4377 = vadd.f32 %v4262, %v4376
      %v4378 = vpop.f32.mrb[0].mxu0
      %v4379 = vpop.f32.mrb[0].mxu0
      %v4380 = vadd.f32 %v4262, %v4379
      %v4381 = vpop.f32.mrb[0].mxu0
      %4382 = vmatprep.mubr.bf16.mxu0 0
      %4383 = vmatmul.mubr.bf16.gmra.mrb[0].mxu0 %v4301
      %v4384 = vpop.f32.mrb[0].mxu0
      %v4385 = vadd.f32 %v4262, %v4384
      %v4386 = vpop.f32.mrb[0].mxu0
      %v4387 = vpop.f32.mrb[0].mxu0
      %v4388 = vadd.f32 %v4262, %v4387
      %v4389 = vpop.f32.mrb[0].mxu0
      %4390 = vmatprep.mubr.bf16.mxu0 0
      %4391 = vmatmul.mubr.bf16.gmra.mrb[0].mxu0 %v4303
      %v4392 = vpop.f32.mrb[0].mxu0
      %v4393 = vadd.f32 %v4262, %v4392
      %v4394 = vpop.f32.mrb[0].mxu0
      %v4395 = vpop.f32.mrb[0].mxu0
      %v4396 = vadd.f32 %v4262, %v4395
      %v4397 = vpop.f32.mrb[0].mxu0
      %4398 = vmatprep.mubr.bf16.mxu0 0
      %4399 = vmatmul.mubr.bf16.gmra.mrb[0].mxu0 %v4305
      %v4400 = vpop.f32.mrb[0].mxu0
      %v4401 = vadd.f32 %v4262, %v4400
      %v4402 = vpop.f32.mrb[0].mxu0
      %v4403 = vpop.f32.mrb[0].mxu0
      %v4404 = vadd.f32 %v4262, %v4403
      %v4405 = vpop.f32.mrb[0].mxu0
      %4406 = vdwg.mxu0
      %v4407 = vld [vmem:[%s299] sm:$0xff]
      %v4408 = vld [vmem:[%s299 + $0x8] sm:$0xff]
      %v4409 = vld [vmem:[%s299 + $0x10] sm:$0xff]
      %v4410 = vld [vmem:[%s299 + $0x18] sm:$0xff]
      %v4411 = vld [vmem:[%s299 + $0x20] sm:$0xff]
      %v4412 = vld [vmem:[%s299 + $0x28] sm:$0xff]
      %v4413 = vld [vmem:[%s299 + $0x30] sm:$0xff]
      %v4414 = vld [vmem:[%s299 + $0x38] sm:$0xff]
      %v4415 = vld [vmem:[%s299 + $0x40] sm:$0xff]
      %v4416 = vld [vmem:[%s299 + $0x48] sm:$0xff]
      %v4417 = vld [vmem:[%s299 + $0x50] sm:$0xff]
      %v4418 = vld [vmem:[%s299 + $0x58] sm:$0xff]
      %v4419 = vld [vmem:[%s299 + $0x60] sm:$0xff]
      %v4420 = vld [vmem:[%s299 + $0x68] sm:$0xff]
      %v4421 = vld [vmem:[%s299 + $0x70] sm:$0xff]
      %v4422 = vld [vmem:[%s299 + $0x78] sm:$0xff]
      %v4423 = vadd.f32 %v4345, %v4407
      %v4424 = vadd.f32 %v4348, %v4408
      %v4425 = vadd.f32 %v4353, %v4409
      %v4426 = vadd.f32 %v4356, %v4410
      %v4427 = vadd.f32 %v4361, %v4411
      %v4428 = vadd.f32 %v4364, %v4412
      %v4429 = vadd.f32 %v4369, %v4413
      %v4430 = vadd.f32 %v4372, %v4414
      %v4431 = vadd.f32 %v4377, %v4415
      %v4432 = vadd.f32 %v4380, %v4416
      %v4433 = vadd.f32 %v4385, %v4417
      %v4434 = vadd.f32 %v4388, %v4418
      %v4435 = vadd.f32 %v4393, %v4419
      %v4436 = vadd.f32 %v4396, %v4420
      %v4437 = vadd.f32 %v4401, %v4421
      %v4438 = vadd.f32 %v4404, %v4422
      %v4439 = vmax.f32 %v4423, 0.0
      %v4440 = vmax.f32 %v4424, 0.0
      %v4441 = vmax.f32 %v4425, 0.0
      %v4442 = vmax.f32 %v4426, 0.0
      %v4443 = vmax.f32 %v4427, 0.0
      %v4444 = vmax.f32 %v4428, 0.0
      %v4445 = vmax.f32 %v4429, 0.0
      %v4446 = vmax.f32 %v4430, 0.0
      %v4447 = vmax.f32 %v4431, 0.0
      %v4448 = vmax.f32 %v4432, 0.0
      %v4449 = vmax.f32 %v4433, 0.0
      %v4450 = vmax.f32 %v4434, 0.0
      %v4451 = vmax.f32 %v4435, 0.0
      %v4452 = vmax.f32 %v4436, 0.0
      %v4453 = vmax.f32 %v4437, 0.0
      %v4454 = vmax.f32 %v4438, 0.0
      %4455 = vst.msk [vmem:[%s309] sm:$0xff] %vm986, %v4439
      %4456 = vst.msk [vmem:[%s309 + $0x8] sm:$0xff] %vm986, %v4440
      %4457 = vst.msk [vmem:[%s309 + $0x10] sm:$0xff] %vm986, %v4441
      %4458 = vst.msk [vmem:[%s309 + $0x18] sm:$0xff] %vm986, %v4442
      %4459 = vst.msk [vmem:[%s309 + $0x20] sm:$0xff] %vm986, %v4443
      %4460 = vst.msk [vmem:[%s309 + $0x28] sm:$0xff] %vm986, %v4444
      %4461 = vst.msk [vmem:[%s309 + $0x30] sm:$0xff] %vm986, %v4445
      %4462 = vst.msk [vmem:[%s309 + $0x38] sm:$0xff] %vm986, %v4446
      %4463 = vst.msk [vmem:[%s309 + $0x40] sm:$0xff] %vm986, %v4447
      %4464 = vst.msk [vmem:[%s309 + $0x48] sm:$0xff] %vm986, %v4448
      %4465 = vst.msk [vmem:[%s309 + $0x50] sm:$0xff] %vm986, %v4449
      %4466 = vst.msk [vmem:[%s309 + $0x58] sm:$0xff] %vm986, %v4450
      %4467 = vst.msk [vmem:[%s309 + $0x60] sm:$0xff] %vm986, %v4451
      %4468 = vst.msk [vmem:[%s309 + $0x68] sm:$0xff] %vm986, %v4452
      %4469 = vst.msk [vmem:[%s309 + $0x70] sm:$0xff] %vm986, %v4453
      %4470 = vst.msk [vmem:[%s309 + $0x78] sm:$0xff] %vm986, %v4454
      %s4471 = smul.u32 16, %s22
      %p4472 = scmp.lt.s32.totalorder %s21, 1
      %s4473 = scalar_select %p4472, %s21, 1
      %p4474 = scmp.lt.s32.totalorder %s4471, 31
      %s4475 = scalar_select %p4474, %s4471, 31
      %s4476 = smul.addr %s4473, 32
      %s4477 = sadd.s32 %s4475, %s4476
      %s4478 = smul.addr %s4477, 8
      %s4479 = scalar_lea.vmem %s6, %s4478
      // Predicated region
      $region45: #{tpu_custom_call.1} parent=43 // pred_check
        %p4480 = pneg %p187
      $region46: #{tpu_custom_call.1} parent=43 // pred_check_branch
        %4482 = sbr.rel (%p4480) target = $region48
      $region47: #{tpu_custom_call.1} parent=43 // pred_region
        %s4483 = smul.u32 16, %s22
      $region48: #{tpu_custom_call.1} parent=43 // pred_fallthru
        _
    $region44: #{tpu_custom_call.1} parent=5 // pred_fallthru
      _
    %p4484 = scmp.le.s32.totalorder 2, %s12
    // Predicated region
    $region49: #{tpu_custom_call.1} parent=5 // pred_check
      %p4485 = pneg %p4484
    $region50: #{tpu_custom_call.1} parent=5 // pred_check_branch
      %4487 = sbr.rel (%p4485) target = $region52
    $region51: #{tpu_custom_call.1} parent=5 // pred_region
      %s4488 = ssub.s32 %s12, 2
      // Predicated region
      $region53: #{tpu_custom_call.1} parent=51 // pred_check
        %p4489 = pneg %p193
      $region54: #{tpu_custom_call.1} parent=51 // pred_check_branch
        %4491 = sbr.rel (%p4489) target = $region56
      $region55: #{tpu_custom_call.1} parent=51 // pred_region
        %s4492 = smul.u32 16, %s24
        %p4493 = scmp.lt.s32.totalorder %s23, 1
        %s4494 = scalar_select %p4493, %s23, 1
        %p4495 = scmp.lt.s32.totalorder %s4492, 31
        %s4496 = scalar_select %p4495, %s4492, 31
        %s4497 = smul.addr %s4494, 32
        %s4498 = sadd.s32 %s4496, %s4497
        %s4499 = smul.addr %s4498, 8
        %s4500 = scalar_lea.vmem %s6, %s4499
      $region56: #{tpu_custom_call.1} parent=51 // pred_fallthru
        _
    $region52: #{tpu_custom_call.1} parent=5 // pred_fallthru
      _
  $region6: #{tpu_custom_call.1} parent=0 // loop_footer
    %s16 = sadd.s32 1, %s12
  $region7: #{tpu_custom_call.1} parent=0 // loop_footer_branch
    %11 = sbr.rel target = $region3
  $region8: #{tpu_custom_call.1} parent=0 // loop_exit
    _

</llo_original>
